<compile_context>
chip_gen: v7x
topology: tpu7x:2x2x1
jax: 0.10.0
libtpu: 0.0.40
codegen_flags: <defaults>
</compile_context>

<pallas_src>
import functools

import jax
import jax.numpy as jnp
import numpy as np
from jax.experimental import pallas as pl
from jax.experimental.pallas import tpu as pltpu

EPS = 1e-5  # nn.LayerNorm default eps

LAYER_PARAM_ORDER = ("wqkv_t", "bqkv", "wf_t", "bf", "ln1_g", "ln1_b",
                     "w1_t", "b1", "w2_t", "b2", "ln2_g", "ln2_b")


def _layernorm(z, g, b):
    mu = jnp.mean(z, axis=-1, keepdims=True)
    var = jnp.mean((z - mu) ** 2, axis=-1, keepdims=True)
    return (z - mu) * jax.lax.rsqrt(var + EPS) * g + b


# ------------------------------ fused kernel ------------------------------

def _encoder_kernel(*refs, num_layers, num_heads, dim_per_head, scale, collect_attn):
    # ref layout: [x, emb_wt, emb_b, (12 per-layer refs)*L] + [out, (attn per layer)?]
    n_in = 3 + 12 * num_layers
    x_ref, emb_wt_ref, emb_b_ref = refs[0], refs[1], refs[2]
    layer_refs = refs[3:n_in]
    out_ref = refs[n_in]
    attn_refs = refs[n_in + 1:]

    H, d = num_heads, dim_per_head
    model_dim = H * d
    seq = x_ref.shape[0]

    def mm(a, w_ref, b_ref):
        # Cast activations to the stored weight dtype right at the MXU input
        # (bf16 weights on v6e/v7x); accumulation stays f32, bias add in f32.
        return (jnp.dot(a.astype(w_ref.dtype), w_ref[...],
                        preferred_element_type=jnp.float32)
                + b_ref[...])

    # seq_embedding: (seq, num_size) @ (num_size, model_dim) + b
    out = mm(x_ref[...], emb_wt_ref, emb_b_ref)          # (seq, model_dim) f32

    for l in range(num_layers):
        (wqkv_r, bqkv_r, wf_r, bf_r, g1_r, be1_r,
         w1_r, b1_r, w2_r, b2_r, g2_r, be2_r) = layer_refs[l * 12:(l + 1) * 12]

        residual = out

        # ---- fused K|V|Q projection: one lane-dense (seq, 3*model_dim) matmul ----
        qkv = mm(out, wqkv_r, bqkv_r)                     # (seq, 3*model_dim) f32

        # ---- torch raw `.view(num_heads, -1, dim_per_head)` head split ----
        # With seq_len == num_heads the raw view is a pure last-dim reshape:
        # head <- row, per-head position <- channel block.  Value-level reshape,
        # everything stays in vregs (no scratch round-trips).
        qkv3 = qkv.reshape(seq, 3 * H, d)
        k3 = qkv3[:, 0 * H:1 * H, :]
        v3 = qkv3[:, 1 * H:2 * H, :]
        q3 = qkv3[:, 2 * H:3 * H, :]

        # ---- scaled dot-product attention ----
        s = jnp.einsum("hqd,hkd->hqk", q3, k3, preferred_element_type=jnp.float32)
        if scale and scale != 1.0:   # mirrors `if scale:` in the module (scale == 1.0 here)
            s = s * scale
        m = jnp.max(s, axis=-1, keepdims=True)
        e = jnp.exp(s - m)
        # NOTE: pl.reciprocal(denom, approx=True) would move this divide to the EUP,
        # but its ~2e-4 relative error breaks the 1e-5 atol check; keep exact.
        p = e / jnp.sum(e, axis=-1, keepdims=True)        # softmax over dim=2 (eval: no dropout)
        if collect_attn:
            # Lane-dense writeback: 8 rows of 64 lanes instead of 64 masked 8-lane stores.
            attn_refs[l][...] = p.reshape(H, seq * seq)
        ctx3 = jnp.einsum("hqk,hkd->hqd", p, v3, preferred_element_type=jnp.float32)
        ctx = ctx3.reshape(seq, model_dim)                # inverse raw view (merge heads)

        # ---- linear_final + residual + LayerNorm (dropout = identity) ----
        out = _layernorm(residual + mm(ctx, wf_r, bf_r), g1_r[...], be1_r[...])

        # ---- position-wise FFN + residual + LayerNorm (dropout = identity) ----
        # TODO(synk): tile the FFN hidden dim (grid-reduce with a VMEM accumulator)
        #             when ffn_dim is scaled far beyond 512.
        h1 = jnp.maximum(mm(out, w1_r, b1_r), 0.0)
        out = _layernorm(out + mm(h1, w2_r, b2_r), g2_r[...], be2_r[...])

    out_ref[...] = out.astype(out_ref.dtype)


# ------------------------------ wrapper ------------------------------

def prepare_params(params, param_dtype=jnp.float32):
    """One-time glue: transpose weights to [in, out], fuse K|V|Q, reshape biases.

    param_dtype=jnp.bfloat16 stores the matmul weights in bf16 (MXU feed on
    v6e/v7x, half the VMEM/DMA bytes); biases and LayerNorm params stay f32 and
    all accumulation stays f32 inside the kernel.
    """
    cast = lambda w: w.astype(param_dtype)
    prep = dict(
        emb_wt=cast(params["emb_w"].T),
        emb_b=params["emb_b"].reshape(1, -1),
        layers=[],
    )
    for lp in params["layers"]:
        prep["layers"].append(dict(
            wqkv_t=cast(jnp.concatenate([lp["wk"].T, lp["wv"].T, lp["wq"].T], axis=1)),
            bqkv=jnp.concatenate([lp["bk"], lp["bv"], lp["bq"]]).reshape(1, -1),
            wf_t=cast(lp["wf"].T), bf=lp["bf"].reshape(1, -1),
            ln1_g=lp["ln1_g"].reshape(1, -1), ln1_b=lp["ln1_b"].reshape(1, -1),
            w1_t=cast(lp["w1"].T), b1=lp["b1"].reshape(1, -1),
            w2_t=cast(lp["w2"].T), b2=lp["b2"].reshape(1, -1),
            ln2_g=lp["ln2_g"].reshape(1, -1), ln2_b=lp["ln2_b"].reshape(1, -1),
        ))
    return prep


def _resident_spec(arr):
    # Whole array in VMEM; constant block index -> no re-DMA across grid steps.
    return pl.BlockSpec(arr.shape, lambda b: (0,) * arr.ndim)


def _cost_estimate(xb, prep, num_heads, out_shapes):
    B, seq, num_size = xb.shape
    model_dim = prep["emb_wt"].shape[1]
    flops = 2 * seq * num_size * model_dim
    transcendentals = 0
    for lp in prep["layers"]:
        ffn_dim = lp["w1_t"].shape[1]
        flops += 2 * seq * model_dim * 3 * model_dim      # fused K|V|Q projection
        flops += 4 * seq * seq * model_dim                # scores + context
        flops += 2 * seq * model_dim * model_dim          # linear_final
        flops += 4 * seq * model_dim * ffn_dim            # FFN (w1 + w2)
        transcendentals += num_heads * seq * seq + 2 * seq  # softmax exp + LN rsqrt
    all_inputs = ([xb, prep["emb_wt"], prep["emb_b"]]
                  + [lp[name] for lp in prep["layers"] for name in LAYER_PARAM_ORDER])
    in_bytes = sum(int(np.prod(a.shape)) * a.dtype.itemsize for a in all_inputs)
    out_bytes = sum(int(np.prod(s.shape)) * np.dtype(s.dtype).itemsize for s in out_shapes)
    return pl.CostEstimate(flops=int(B * flops),
                           transcendentals=int(B * transcendentals),
                           bytes_accessed=int(in_bytes + out_bytes))


def encoder_forward_batched(xb, prep, *, num_heads, collect_attention=True):
    """Run the fused encoder over a batch of independent sequences.

    xb: (B, seq_len, num_size).  Each batch element is one forward pass of the
    PyTorch module.  The batch is a grid axis marked "parallel".
    """
    B, seq, num_size = xb.shape
    model_dim = prep["emb_wt"].shape[1]
    num_layers = len(prep["layers"])
    d = model_dim // num_heads
    assert model_dim == num_heads * d
    # The torch raw `.view(num_heads, -1, dim_per_head)` on a 2-D (seq, model_dim)
    # tensor maps head -> row only when seq == num_heads; the kernel relies on that.
    assert seq == num_heads, "kernel assumes seq_len == num_heads (raw torch .view layout)"
    # TODO(synk): support seq_len != num_heads with the fully general raw-view head split.

    # Faithful to the module: INTEGER floor division (== 1.0 here, so effectively
    # no 1/sqrt(d) scaling; flagged upstream as a likely bug in the original model).
    scale = (d // num_heads) ** (-0.5)

    flat_in = [xb, prep["emb_wt"], prep["emb_b"]]
    in_specs = [pl.BlockSpec((None, seq, num_size), lambda b: (b, 0, 0)),
                _resident_spec(prep["emb_wt"]),
                _resident_spec(prep["emb_b"])]
    for lp in prep["layers"]:
        for name in LAYER_PARAM_ORDER:
            flat_in.append(lp[name])
            in_specs.append(_resident_spec(lp[name]))

    out_shapes = [jax.ShapeDtypeStruct((B, seq, model_dim), jnp.float32)]
    out_specs = [pl.BlockSpec((None, seq, model_dim), lambda b: (b, 0, 0))]
    if collect_attention:
        for _ in range(num_layers):
            # Lane-dense (seq*seq)-wide rows; reshaped to (H, seq, seq) below.
            out_shapes.append(jax.ShapeDtypeStruct((B, num_heads, seq * seq), jnp.float32))
            out_specs.append(pl.BlockSpec((None, num_heads, seq * seq), lambda b: (b, 0, 0)))

    kernel = functools.partial(
        _encoder_kernel, num_layers=num_layers, num_heads=num_heads,
        dim_per_head=d, scale=scale, collect_attn=collect_attention)

    results = pl.pallas_call(
        kernel,
        grid=(B,),
        out_shape=tuple(out_shapes),
        in_specs=in_specs,
        out_specs=tuple(out_specs),
        compiler_params=pltpu.CompilerParams(
            dimension_semantics=("parallel",),       # shards batch across v7x's 2 TCs
            vmem_limit_bytes=32 * 1024 * 1024),
        cost_estimate=_cost_estimate(xb, prep, num_heads, out_shapes),
    )(*flat_in)

    out = results[0]
    attns = ([a.reshape(B, num_heads, seq, seq) for a in results[1:]]
             if collect_attention else [])
    return out, attns


def encoder_forward(x, prep, *, num_heads, collect_attention=True):
    """Single-sequence forward matching the PyTorch module: x is (seq_len, num_size)."""
    out, attns = encoder_forward_batched(x[None], prep, num_heads=num_heads,
                                         collect_attention=collect_attention)
    return out[0], [a[0] for a in attns]


# ------------------------------ params & reference ------------------------------

def init_params(key, num_size, num_layers, model_dim, num_heads, ffn_dim):
    keys = jax.random.split(key, 1 + num_layers)
    bound = 1.0 / np.sqrt(num_size)
    emb_w = jax.random.uniform(keys[0], (model_dim, num_size), jnp.float32,
                               -bound, bound)               # seq_embedding
    emb_b = jnp.zeros((model_dim,), jnp.float32)

    def nrm(k, shape):
        return 0.01 * jax.random.normal(k, shape, jnp.float32)  # nn.init.normal_(w, 0, 0.01)

    layers = []
    for i in range(num_layers):
        lk = jax.random.split(keys[1 + i], 6)
        layers.append(dict(
            wk=nrm(lk[0], (model_dim, model_dim)), bk=jnp.zeros((model_dim,), jnp.float32),
            wv=nrm(lk[1], (model_dim, model_dim)), bv=jnp.zeros((model_dim,), jnp.float32),
            wq=nrm(lk[2], (model_dim, model_dim)), bq=jnp.zeros((model_dim,), jnp.float32),
            wf=nrm(lk[3], (model_dim, model_dim)), bf=jnp.zeros((model_dim,), jnp.float32),
            ln1_g=jnp.ones((model_dim,), jnp.float32), ln1_b=jnp.zeros((model_dim,), jnp.float32),
            w1=nrm(lk[4], (ffn_dim, model_dim)), b1=jnp.zeros((ffn_dim,), jnp.float32),
            w2=nrm(lk[5], (model_dim, ffn_dim)), b2=jnp.zeros((model_dim,), jnp.float32),
            ln2_g=jnp.ones((model_dim,), jnp.float32), ln2_b=jnp.zeros((model_dim,), jnp.float32),
        ))
    return dict(emb_w=emb_w, emb_b=emb_b, layers=layers)


def reference_forward(x, params, *, num_heads):
    """Pure-JAX reference mirroring the PyTorch forward (eval mode)."""
    def ln(z, g, b):
        mu = z.mean(-1, keepdims=True)
        var = ((z - mu) ** 2).mean(-1, keepdims=True)
        return (z - mu) / jnp.sqrt(var + EPS) * g + b

    model_dim = params["emb_w"].shape[0]
    d = model_dim // num_heads
    out = x @ params["emb_w"].T + params["emb_b"]
    attns = []
    for lp in params["layers"]:
        residual = out
        k = (out @ lp["wk"].T + lp["bk"]).reshape(num_heads, -1, d)
        v = (out @ lp["wv"].T + lp["bv"]).reshape(num_heads, -1, d)
        q = (out @ lp["wq"].T + lp["bq"]).reshape(num_heads, -1, d)
        scale = (d // num_heads) ** (-0.5)
        s = jnp.einsum("hqd,hkd->hqk", q, k)
        if scale:
            s = s * scale
        p = jax.nn.softmax(s, axis=-1)
        ctx = jnp.einsum("hqk,hkd->hqd", p, v).reshape(-1, model_dim)
        out = ln(residual + ctx @ lp["wf"].T + lp["bf"], lp["ln1_g"], lp["ln1_b"])
        h = jnp.maximum(out @ lp["w1"].T + lp["b1"], 0.0)
        out = ln(out + h @ lp["w2"].T + lp["b2"], lp["ln2_g"], lp["ln2_b"])
        attns.append(p)
    return out, attns


if __name__ == "__main__":
    num_size, seq_len = 16, 8
    num_layers, model_dim, num_heads, ffn_dim = 1, 64, 8, 512
    batch = 4

    key = jax.random.PRNGKey(0)
    kx, kp = jax.random.split(key)
    xb = jax.random.normal(kx, (batch, seq_len, num_size), jnp.float32)
    params = init_params(kp, num_size, num_layers, model_dim, num_heads, ffn_dim)

    refs = [reference_forward(xb[b], params, num_heads=num_heads) for b in range(batch)]

    # --- f32 path, batched grid (strict check vs. the pure-JAX reference) -----
    prep = prepare_params(params)
    out_b, attns_b = encoder_forward_batched(xb, prep, num_heads=num_heads,
                                             collect_attention=True)
    out_b = jax.block_until_ready(out_b)
    attns_b = [jax.block_until_ready(a) for a in attns_b]
    for b in range(batch):
        ref_out, ref_attns = refs[b]
        np.testing.assert_allclose(np.asarray(out_b[b]), np.asarray(ref_out),
                                   rtol=1e-4, atol=1e-5)
        for a, ra in zip(attns_b, ref_attns):
            np.testing.assert_allclose(np.asarray(a[b]), np.asarray(ra),
                                       rtol=1e-4, atol=1e-5)

    # --- single-sequence wrapper (the module's actual call signature) ---------
    out1, attns1 = encoder_forward(xb[0], prep, num_heads=num_heads)
    out1 = jax.block_until_ready(out1)
    np.testing.assert_allclose(np.asarray(out1), np.asarray(refs[0][0]),
                               rtol=1e-4, atol=1e-5)

    # --- bf16-weight path (v6e/v7x MXU feed; accumulation stays f32) ----------
    prep_bf16 = prepare_params(params, param_dtype=jnp.bfloat16)
    out_bf16, _ = encoder_forward_batched(xb, prep_bf16, num_heads=num_heads,
                                          collect_attention=False)
    out_bf16 = jax.block_until_ready(out_bf16)
    ref_stack = np.stack([np.asarray(r[0]) for r in refs])
    np.testing.assert_allclose(np.asarray(out_bf16), ref_stack, rtol=5e-2, atol=5e-2)

    print("KERNEL_OK")
</pallas_src>

<mosaic_0001>
module attributes {stable_mosaic.version = 11 : i64} {
  func.func @_encoder_kernel(%arg0: i32, %arg1: memref<1x8x16xf32, #tpu.memory_space<vmem>>, %arg2: memref<16x64xf32, #tpu.memory_space<vmem>>, %arg3: memref<1x64xf32, #tpu.memory_space<vmem>>, %arg4: memref<64x192xf32, #tpu.memory_space<vmem>>, %arg5: memref<1x192xf32, #tpu.memory_space<vmem>>, %arg6: memref<64x64xf32, #tpu.memory_space<vmem>>, %arg7: memref<1x64xf32, #tpu.memory_space<vmem>>, %arg8: memref<1x64xf32, #tpu.memory_space<vmem>>, %arg9: memref<1x64xf32, #tpu.memory_space<vmem>>, %arg10: memref<64x512xf32, #tpu.memory_space<vmem>>, %arg11: memref<1x512xf32, #tpu.memory_space<vmem>>, %arg12: memref<512x64xf32, #tpu.memory_space<vmem>>, %arg13: memref<1x64xf32, #tpu.memory_space<vmem>>, %arg14: memref<1x64xf32, #tpu.memory_space<vmem>>, %arg15: memref<1x64xf32, #tpu.memory_space<vmem>>, %arg16: memref<1x8x64xf32, #tpu.memory_space<vmem>>, %arg17: memref<1x8x64xf32, #tpu.memory_space<vmem>>) attributes {dimension_semantics = [#tpu.dimension_semantics<parallel>], iteration_bounds = array<i64: 4>, scalar_prefetch = 0 : i64, scratch_operands = 0 : i64, tpu.core_type = #tpu.core_type<tc>, window_params = [{transform_indices = @transform_0, window_bounds = array<i64: 1, 8, 16>}, {pipeline_mode = #tpu.pipeline_mode<synchronous>, transform_indices = @transform_1, window_bounds = array<i64: 16, 64>}, {pipeline_mode = #tpu.pipeline_mode<synchronous>, transform_indices = @transform_2, window_bounds = array<i64: 1, 64>}, {pipeline_mode = #tpu.pipeline_mode<synchronous>, transform_indices = @transform_3, window_bounds = array<i64: 64, 192>}, {pipeline_mode = #tpu.pipeline_mode<synchronous>, transform_indices = @transform_4, window_bounds = array<i64: 1, 192>}, {pipeline_mode = #tpu.pipeline_mode<synchronous>, transform_indices = @transform_5, window_bounds = array<i64: 64, 64>}, {pipeline_mode = #tpu.pipeline_mode<synchronous>, transform_indices = @transform_6, window_bounds = array<i64: 1, 64>}, {pipeline_mode = #tpu.pipeline_mode<synchronous>, transform_indices = @transform_7, window_bounds = array<i64: 1, 64>}, {pipeline_mode = #tpu.pipeline_mode<synchronous>, transform_indices = @transform_8, window_bounds = array<i64: 1, 64>}, {pipeline_mode = #tpu.pipeline_mode<synchronous>, transform_indices = @transform_9, window_bounds = array<i64: 64, 512>}, {pipeline_mode = #tpu.pipeline_mode<synchronous>, transform_indices = @transform_10, window_bounds = array<i64: 1, 512>}, {pipeline_mode = #tpu.pipeline_mode<synchronous>, transform_indices = @transform_11, window_bounds = array<i64: 512, 64>}, {pipeline_mode = #tpu.pipeline_mode<synchronous>, transform_indices = @transform_12, window_bounds = array<i64: 1, 64>}, {pipeline_mode = #tpu.pipeline_mode<synchronous>, transform_indices = @transform_13, window_bounds = array<i64: 1, 64>}, {pipeline_mode = #tpu.pipeline_mode<synchronous>, transform_indices = @transform_14, window_bounds = array<i64: 1, 64>}, {transform_indices = @transform_15, window_bounds = array<i64: 1, 8, 64>}, {transform_indices = @transform_16, window_bounds = array<i64: 1, 8, 64>}]} {
    %c0 = arith.constant 0 : index
    %c0_0 = arith.constant 0 : index
    %c0_1 = arith.constant 0 : index
    %0 = vector.load %arg1[%c0, %c0_0, %c0_1] : memref<1x8x16xf32, #tpu.memory_space<vmem>>, vector<1x8x16xf32>
    %1 = vector.shape_cast %0 : vector<1x8x16xf32> to vector<8x16xf32>
    %c0_2 = arith.constant 0 : index
    %c0_3 = arith.constant 0 : index
    %2 = vector.load %arg2[%c0_2, %c0_3] : memref<16x64xf32, #tpu.memory_space<vmem>>, vector<16x64xf32>
    %cst = arith.constant dense<0.000000e+00> : vector<8x64xf32>
    %3 = tpu.matmul %1, %2, %cst {dimension_numbers = #tpu.dot_dimension_numbers<[1], [0], [0], [1], [0, 0, 1, 1], [], []>} : vector<8x16xf32>, vector<16x64xf32>, vector<8x64xf32> -> vector<8x64xf32>
    %c0_4 = arith.constant 0 : index
    %c0_5 = arith.constant 0 : index
    %4 = vector.load %arg3[%c0_4, %c0_5] : memref<1x64xf32, #tpu.memory_space<vmem>>, vector<1x64xf32>
    %5 = vector.broadcast %4 : vector<1x64xf32> to vector<8x64xf32>
    %6 = arith.addf %3, %5 : vector<8x64xf32>
    %c0_6 = arith.constant 0 : index
    %c0_7 = arith.constant 0 : index
    %7 = vector.load %arg4[%c0_6, %c0_7] : memref<64x192xf32, #tpu.memory_space<vmem>>, vector<64x192xf32>
    %cst_8 = arith.constant dense<0.000000e+00> : vector<8x192xf32>
    %8 = tpu.matmul %6, %7, %cst_8 {dimension_numbers = #tpu.dot_dimension_numbers<[1], [0], [0], [1], [0, 0, 1, 1], [], []>} : vector<8x64xf32>, vector<64x192xf32>, vector<8x192xf32> -> vector<8x192xf32>
    %c0_9 = arith.constant 0 : index
    %c0_10 = arith.constant 0 : index
    %9 = vector.load %arg5[%c0_9, %c0_10] : memref<1x192xf32, #tpu.memory_space<vmem>>, vector<1x192xf32>
    %10 = vector.broadcast %9 : vector<1x192xf32> to vector<8x192xf32>
    %11 = arith.addf %8, %10 : vector<8x192xf32>
    %12 = vector.shape_cast %11 : vector<8x192xf32> to vector<8x24x8xf32>
    %13 = vector.extract_strided_slice %12 {offsets = [0, 0, 0], sizes = [8, 8, 8], strides = [1, 1, 1]} : vector<8x24x8xf32> to vector<8x8x8xf32>
    %14 = vector.extract_strided_slice %12 {offsets = [0, 8, 0], sizes = [8, 8, 8], strides = [1, 1, 1]} : vector<8x24x8xf32> to vector<8x8x8xf32>
    %15 = vector.extract_strided_slice %12 {offsets = [0, 16, 0], sizes = [8, 8, 8], strides = [1, 1, 1]} : vector<8x24x8xf32> to vector<8x8x8xf32>
    "tpu.trace_start"() <{level = 10 : i32, message = "hqd,hkd->hqk"}> : () -> ()
    %cst_11 = arith.constant dense<0.000000e+00> : vector<8x8x8xf32>
    %16 = tpu.matmul %15, %13, %cst_11 {dimension_numbers = #tpu.dot_dimension_numbers<[2], [2], [1], [1], [0, 0, 0, 1, 1, 1], [0], [0]>} : vector<8x8x8xf32>, vector<8x8x8xf32>, vector<8x8x8xf32> -> vector<8x8x8xf32>
    "tpu.trace_stop"() : () -> ()
    %cst_12 = arith.constant dense<0xFF800000> : vector<8x8xf32>
    %17 = vector.multi_reduction <maximumf>, %16, %cst_12 [2] : vector<8x8x8xf32> to vector<8x8xf32>
    %18 = vector.shape_cast %17 : vector<8x8xf32> to vector<8x8x1xf32>
    %19 = vector.broadcast %18 : vector<8x8x1xf32> to vector<8x8x8xf32>
    %20 = arith.subf %16, %19 : vector<8x8x8xf32>
    %21 = math.exp %20 : vector<8x8x8xf32>
    %cst_13 = arith.constant dense<0.000000e+00> : vector<8x8xf32>
    %22 = vector.multi_reduction <add>, %21, %cst_13 [2] : vector<8x8x8xf32> to vector<8x8xf32>
    %23 = vector.shape_cast %22 : vector<8x8xf32> to vector<8x8x1xf32>
    %24 = vector.broadcast %23 : vector<8x8x1xf32> to vector<8x8x8xf32>
    %25 = arith.divf %21, %24 : vector<8x8x8xf32>
    %26 = vector.shape_cast %25 : vector<8x8x8xf32> to vector<8x64xf32>
    %c0_14 = arith.constant 0 : index
    %c0_15 = arith.constant 0 : index
    %c0_16 = arith.constant 0 : index
    %27 = vector.load %arg17[%c0_14, %c0_15, %c0_16] : memref<1x8x64xf32, #tpu.memory_space<vmem>>, vector<1x8x64xf32>
    %28 = vector.shape_cast %27 : vector<1x8x64xf32> to vector<8x64xf32>
    %29 = vector.shape_cast %26 : vector<8x64xf32> to vector<1x8x64xf32>
    tpu.vector_store %arg17[%c0_14, %c0_15, %c0_16], %29 {strides = array<i32>} : memref<1x8x64xf32, #tpu.memory_space<vmem>>, vector<1x8x64xf32>,
    "tpu.trace_start"() <{level = 10 : i32, message = "hqk,hkd->hqd"}> : () -> ()
    %cst_17 = arith.constant dense<0.000000e+00> : vector<8x8x8xf32>
    %30 = tpu.matmul %25, %14, %cst_17 {dimension_numbers = #tpu.dot_dimension_numbers<[2], [1], [1], [2], [0, 0, 0, 1, 1, 2], [0], [0]>} : vector<8x8x8xf32>, vector<8x8x8xf32>, vector<8x8x8xf32> -> vector<8x8x8xf32>
    "tpu.trace_stop"() : () -> ()
    %31 = vector.shape_cast %30 : vector<8x8x8xf32> to vector<8x64xf32>
    %c0_18 = arith.constant 0 : index
    %c0_19 = arith.constant 0 : index
    %32 = vector.load %arg6[%c0_18, %c0_19] : memref<64x64xf32, #tpu.memory_space<vmem>>, vector<64x64xf32>
    %cst_20 = arith.constant dense<0.000000e+00> : vector<8x64xf32>
    %33 = tpu.matmul %31, %32, %cst_20 {dimension_numbers = #tpu.dot_dimension_numbers<[1], [0], [0], [1], [0, 0, 1, 1], [], []>} : vector<8x64xf32>, vector<64x64xf32>, vector<8x64xf32> -> vector<8x64xf32>
    %c0_21 = arith.constant 0 : index
    %c0_22 = arith.constant 0 : index
    %34 = vector.load %arg7[%c0_21, %c0_22] : memref<1x64xf32, #tpu.memory_space<vmem>>, vector<1x64xf32>
    %35 = vector.broadcast %34 : vector<1x64xf32> to vector<8x64xf32>
    %36 = arith.addf %33, %35 : vector<8x64xf32>
    %37 = arith.addf %6, %36 : vector<8x64xf32>
    %c0_23 = arith.constant 0 : index
    %c0_24 = arith.constant 0 : index
    %38 = vector.load %arg8[%c0_23, %c0_24] : memref<1x64xf32, #tpu.memory_space<vmem>>, vector<1x64xf32>
    %c0_25 = arith.constant 0 : index
    %c0_26 = arith.constant 0 : index
    %39 = vector.load %arg9[%c0_25, %c0_26] : memref<1x64xf32, #tpu.memory_space<vmem>>, vector<1x64xf32>
    %cst_27 = arith.constant dense<0.000000e+00> : vector<8xf32>
    %40 = vector.multi_reduction <add>, %37, %cst_27 [1] : vector<8x64xf32> to vector<8xf32>
    %41 = vector.shape_cast %40 : vector<8xf32> to vector<8x1xf32>
    %cst_28 = arith.constant 6.400000e+01 : f32
    %42 = vector.broadcast %cst_28 : f32 to vector<8x1xf32>
    %43 = arith.divf %41, %42 : vector<8x1xf32>
    %44 = vector.broadcast %43 : vector<8x1xf32> to vector<8x64xf32>
    %45 = arith.subf %37, %44 : vector<8x64xf32>
    %46 = arith.mulf %45, %45 : vector<8x64xf32>
    %cst_29 = arith.constant dense<0.000000e+00> : vector<8xf32>
    %47 = vector.multi_reduction <add>, %46, %cst_29 [1] : vector<8x64xf32> to vector<8xf32>
    %48 = vector.shape_cast %47 : vector<8xf32> to vector<8x1xf32>
    %cst_30 = arith.constant 6.400000e+01 : f32
    %49 = vector.broadcast %cst_30 : f32 to vector<8x1xf32>
    %50 = arith.divf %48, %49 : vector<8x1xf32>
    %51 = vector.broadcast %43 : vector<8x1xf32> to vector<8x64xf32>
    %52 = arith.subf %37, %51 : vector<8x64xf32>
    %cst_31 = arith.constant 9.99999974E-6 : f32
    %53 = vector.broadcast %cst_31 : f32 to vector<8x1xf32>
    %54 = arith.addf %50, %53 : vector<8x1xf32>
    %55 = math.rsqrt %54 : vector<8x1xf32>
    %56 = vector.broadcast %55 : vector<8x1xf32> to vector<8x64xf32>
    %57 = arith.mulf %52, %56 : vector<8x64xf32>
    %58 = vector.broadcast %38 : vector<1x64xf32> to vector<8x64xf32>
    %59 = arith.mulf %57, %58 : vector<8x64xf32>
    %60 = vector.broadcast %39 : vector<1x64xf32> to vector<8x64xf32>
    %61 = arith.addf %59, %60 : vector<8x64xf32>
    %c0_32 = arith.constant 0 : index
    %c0_33 = arith.constant 0 : index
    %62 = vector.load %arg10[%c0_32, %c0_33] : memref<64x512xf32, #tpu.memory_space<vmem>>, vector<64x512xf32>
    %cst_34 = arith.constant dense<0.000000e+00> : vector<8x512xf32>
    %63 = tpu.matmul %61, %62, %cst_34 {dimension_numbers = #tpu.dot_dimension_numbers<[1], [0], [0], [1], [0, 0, 1, 1], [], []>} : vector<8x64xf32>, vector<64x512xf32>, vector<8x512xf32> -> vector<8x512xf32>
    %c0_35 = arith.constant 0 : index
    %c0_36 = arith.constant 0 : index
    %64 = vector.load %arg11[%c0_35, %c0_36] : memref<1x512xf32, #tpu.memory_space<vmem>>, vector<1x512xf32>
    %65 = vector.broadcast %64 : vector<1x512xf32> to vector<8x512xf32>
    %66 = arith.addf %63, %65 : vector<8x512xf32>
    %cst_37 = arith.constant 0.000000e+00 : f32
    %67 = vector.broadcast %cst_37 : f32 to vector<8x512xf32>
    %68 = arith.maximumf %66, %67 : vector<8x512xf32>
    %c0_38 = arith.constant 0 : index
    %c0_39 = arith.constant 0 : index
    %69 = vector.load %arg12[%c0_38, %c0_39] : memref<512x64xf32, #tpu.memory_space<vmem>>, vector<512x64xf32>
    %cst_40 = arith.constant dense<0.000000e+00> : vector<8x64xf32>
    %70 = tpu.matmul %68, %69, %cst_40 {dimension_numbers = #tpu.dot_dimension_numbers<[1], [0], [0], [1], [0, 0, 1, 1], [], []>} : vector<8x512xf32>, vector<512x64xf32>, vector<8x64xf32> -> vector<8x64xf32>
    %c0_41 = arith.constant 0 : index
    %c0_42 = arith.constant 0 : index
    %71 = vector.load %arg13[%c0_41, %c0_42] : memref<1x64xf32, #tpu.memory_space<vmem>>, vector<1x64xf32>
    %72 = vector.broadcast %71 : vector<1x64xf32> to vector<8x64xf32>
    %73 = arith.addf %70, %72 : vector<8x64xf32>
    %74 = arith.addf %61, %73 : vector<8x64xf32>
    %c0_43 = arith.constant 0 : index
    %c0_44 = arith.constant 0 : index
    %75 = vector.load %arg14[%c0_43, %c0_44] : memref<1x64xf32, #tpu.memory_space<vmem>>, vector<1x64xf32>
    %c0_45 = arith.constant 0 : index
    %c0_46 = arith.constant 0 : index
    %76 = vector.load %arg15[%c0_45, %c0_46] : memref<1x64xf32, #tpu.memory_space<vmem>>, vector<1x64xf32>
    %cst_47 = arith.constant dense<0.000000e+00> : vector<8xf32>
    %77 = vector.multi_reduction <add>, %74, %cst_47 [1] : vector<8x64xf32> to vector<8xf32>
    %78 = vector.shape_cast %77 : vector<8xf32> to vector<8x1xf32>
    %cst_48 = arith.constant 6.400000e+01 : f32
    %79 = vector.broadcast %cst_48 : f32 to vector<8x1xf32>
    %80 = arith.divf %78, %79 : vector<8x1xf32>
    %81 = vector.broadcast %80 : vector<8x1xf32> to vector<8x64xf32>
    %82 = arith.subf %74, %81 : vector<8x64xf32>
    %83 = arith.mulf %82, %82 : vector<8x64xf32>
    %cst_49 = arith.constant dense<0.000000e+00> : vector<8xf32>
    %84 = vector.multi_reduction <add>, %83, %cst_49 [1] : vector<8x64xf32> to vector<8xf32>
    %85 = vector.shape_cast %84 : vector<8xf32> to vector<8x1xf32>
    %cst_50 = arith.constant 6.400000e+01 : f32
    %86 = vector.broadcast %cst_50 : f32 to vector<8x1xf32>
    %87 = arith.divf %85, %86 : vector<8x1xf32>
    %88 = vector.broadcast %80 : vector<8x1xf32> to vector<8x64xf32>
    %89 = arith.subf %74, %88 : vector<8x64xf32>
    %cst_51 = arith.constant 9.99999974E-6 : f32
    %90 = vector.broadcast %cst_51 : f32 to vector<8x1xf32>
    %91 = arith.addf %87, %90 : vector<8x1xf32>
    %92 = math.rsqrt %91 : vector<8x1xf32>
    %93 = vector.broadcast %92 : vector<8x1xf32> to vector<8x64xf32>
    %94 = arith.mulf %89, %93 : vector<8x64xf32>
    %95 = vector.broadcast %75 : vector<1x64xf32> to vector<8x64xf32>
    %96 = arith.mulf %94, %95 : vector<8x64xf32>
    %97 = vector.broadcast %76 : vector<1x64xf32> to vector<8x64xf32>
    %98 = arith.addf %96, %97 : vector<8x64xf32>
    %c0_52 = arith.constant 0 : index
    %c0_53 = arith.constant 0 : index
    %c0_54 = arith.constant 0 : index
    %99 = vector.load %arg16[%c0_52, %c0_53, %c0_54] : memref<1x8x64xf32, #tpu.memory_space<vmem>>, vector<1x8x64xf32>
    %100 = vector.shape_cast %99 : vector<1x8x64xf32> to vector<8x64xf32>
    %101 = vector.shape_cast %98 : vector<8x64xf32> to vector<1x8x64xf32>
    tpu.vector_store %arg16[%c0_52, %c0_53, %c0_54], %101 {strides = array<i32>} : memref<1x8x64xf32, #tpu.memory_space<vmem>>, vector<1x8x64xf32>,
    return
  }
  func.func @transform_0(%arg0: i32) -> (i32, i32, i32) {
    %c0_i32 = arith.constant 0 : i32
    %c0_i32_0 = arith.constant 0 : i32
    %c0_i32_1 = arith.constant 0 : i32
    return %arg0, %c0_i32, %c0_i32_0 : i32, i32, i32
  }
  func.func @transform_1(%arg0: i32) -> (i32, i32) {
    %c0_i32 = arith.constant 0 : i32
    %c0_i32_0 = arith.constant 0 : i32
    %c0_i32_1 = arith.constant 0 : i32
    return %c0_i32, %c0_i32_0 : i32, i32
  }
  func.func @transform_2(%arg0: i32) -> (i32, i32) {
    %c0_i32 = arith.constant 0 : i32
    %c0_i32_0 = arith.constant 0 : i32
    %c0_i32_1 = arith.constant 0 : i32
    return %c0_i32, %c0_i32_0 : i32, i32
  }
  func.func @transform_3(%arg0: i32) -> (i32, i32) {
    %c0_i32 = arith.constant 0 : i32
    %c0_i32_0 = arith.constant 0 : i32
    %c0_i32_1 = arith.constant 0 : i32
    return %c0_i32, %c0_i32_0 : i32, i32
  }
  func.func @transform_4(%arg0: i32) -> (i32, i32) {
    %c0_i32 = arith.constant 0 : i32
    %c0_i32_0 = arith.constant 0 : i32
    %c0_i32_1 = arith.constant 0 : i32
    return %c0_i32, %c0_i32_0 : i32, i32
  }
  func.func @transform_5(%arg0: i32) -> (i32, i32) {
    %c0_i32 = arith.constant 0 : i32
    %c0_i32_0 = arith.constant 0 : i32
    %c0_i32_1 = arith.constant 0 : i32
    return %c0_i32, %c0_i32_0 : i32, i32
  }
  func.func @transform_6(%arg0: i32) -> (i32, i32) {
    %c0_i32 = arith.constant 0 : i32
    %c0_i32_0 = arith.constant 0 : i32
    %c0_i32_1 = arith.constant 0 : i32
    return %c0_i32, %c0_i32_0 : i32, i32
  }
  func.func @transform_7(%arg0: i32) -> (i32, i32) {
    %c0_i32 = arith.constant 0 : i32
    %c0_i32_0 = arith.constant 0 : i32
    %c0_i32_1 = arith.constant 0 : i32
    return %c0_i32, %c0_i32_0 : i32, i32
  }
  func.func @transform_8(%arg0: i32) -> (i32, i32) {
    %c0_i32 = arith.constant 0 : i32
    %c0_i32_0 = arith.constant 0 : i32
    %c0_i32_1 = arith.constant 0 : i32
    return %c0_i32, %c0_i32_0 : i32, i32
  }
  func.func @transform_9(%arg0: i32) -> (i32, i32) {
    %c0_i32 = arith.constant 0 : i32
    %c0_i32_0 = arith.constant 0 : i32
    %c0_i32_1 = arith.constant 0 : i32
    return %c0_i32, %c0_i32_0 : i32, i32
  }
  func.func @transform_10(%arg0: i32) -> (i32, i32) {
    %c0_i32 = arith.constant 0 : i32
    %c0_i32_0 = arith.constant 0 : i32
    %c0_i32_1 = arith.constant 0 : i32
    return %c0_i32, %c0_i32_0 : i32, i32
  }
  func.func @transform_11(%arg0: i32) -> (i32, i32) {
    %c0_i32 = arith.constant 0 : i32
    %c0_i32_0 = arith.constant 0 : i32
    %c0_i32_1 = arith.constant 0 : i32
    return %c0_i32, %c0_i32_0 : i32, i32
  }
  func.func @transform_12(%arg0: i32) -> (i32, i32) {
    %c0_i32 = arith.constant 0 : i32
    %c0_i32_0 = arith.constant 0 : i32
    %c0_i32_1 = arith.constant 0 : i32
    return %c0_i32, %c0_i32_0 : i32, i32
  }
  func.func @transform_13(%arg0: i32) -> (i32, i32) {
    %c0_i32 = arith.constant 0 : i32
    %c0_i32_0 = arith.constant 0 : i32
    %c0_i32_1 = arith.constant 0 : i32
    return %c0_i32, %c0_i32_0 : i32, i32
  }
  func.func @transform_14(%arg0: i32) -> (i32, i32) {
    %c0_i32 = arith.constant 0 : i32
    %c0_i32_0 = arith.constant 0 : i32
    %c0_i32_1 = arith.constant 0 : i32
    return %c0_i32, %c0_i32_0 : i32, i32
  }
  func.func @transform_15(%arg0: i32) -> (i32, i32, i32) {
    %c0_i32 = arith.constant 0 : i32
    %c0_i32_0 = arith.constant 0 : i32
    %c0_i32_1 = arith.constant 0 : i32
    return %arg0, %c0_i32, %c0_i32_0 : i32, i32, i32
  }
  func.func @transform_16(%arg0: i32) -> (i32, i32, i32) {
    %c0_i32 = arith.constant 0 : i32
    %c0_i32_0 = arith.constant 0 : i32
    %c0_i32_1 = arith.constant 0 : i32
    return %arg0, %c0_i32, %c0_i32_0 : i32, i32, i32
  }
}

</mosaic_0001>

<llo_original>
// kernel: tpu_custom_call.1
$region0: #{tpu_custom_call.1}
  #allocation0 [shape = 'u32[]', space=smem, size = 0x4, offset = 0x4, fixed_abs, tag = 'smem constant byte address 0x4 - core index']
  #allocation1 [shape = 'u32[144,128]{1,0:T(1,128)}', space=vmem, size = 0x12000, scoped, tag = 'internal scratch']
  %s0 = inlined_call_operand.vmem [shape: f32[4,8,16], index: 0, kind: input, shape index: {}]
  %s1 = inlined_call_operand.vmem [shape: f32[16,64], index: 1, kind: input, shape index: {}]
  %s2 = inlined_call_operand.vmem [shape: f32[1,64], index: 2, kind: input, shape index: {}]
  %s3 = inlined_call_operand.vmem [shape: f32[64,192], index: 3, kind: input, shape index: {}]
  %s4 = inlined_call_operand.vmem [shape: f32[1,192], index: 4, kind: input, shape index: {}]
  %s5 = inlined_call_operand.vmem [shape: f32[64,64], index: 5, kind: input, shape index: {}]
  %s6 = inlined_call_operand.vmem [shape: f32[1,64], index: 6, kind: input, shape index: {}]
  %s7 = inlined_call_operand.vmem [shape: f32[1,64], index: 7, kind: input, shape index: {}]
  %s8 = inlined_call_operand.vmem [shape: f32[1,64], index: 8, kind: input, shape index: {}]
  %s9 = inlined_call_operand.vmem [shape: f32[64,512], index: 9, kind: input, shape index: {}]
  %s10 = inlined_call_operand.vmem [shape: f32[1,512], index: 10, kind: input, shape index: {}]
  %s11 = inlined_call_operand.vmem [shape: f32[512,64], index: 11, kind: input, shape index: {}]
  %s12 = inlined_call_operand.vmem [shape: f32[1,64], index: 12, kind: input, shape index: {}]
  %s13 = inlined_call_operand.vmem [shape: f32[1,64], index: 13, kind: input, shape index: {}]
  %s14 = inlined_call_operand.vmem [shape: f32[1,64], index: 14, kind: input, shape index: {}]
  %s15 = inlined_call_operand.hbm [shape: f32[4,8,64], index: 15, kind: output, shape index: {0}]
  %s16 = inlined_call_operand.hbm [shape: f32[4,8,64], index: 16, kind: output, shape index: {1}]
  %17 = xla_tuple %s15, %s16
  %s18 = sld [smem:[#allocation0]]
  $region101: #{tpu_custom_call.1} parent=0
    _
  %s20 = ssub.s32 1, %s18
  %s21 = scalar_select 0, %s20, %s18
  $region1: #{tpu_custom_call.1} parent=0
    #allocation2 [shape = 'u8[8192]{0}', space=vmem, size = 0x2000, scoped, tag = 'output window, operand 0']
    #allocation3 [shape = 's32[2]{0}', space=sflag, size = 0x8, scoped, tag = 'scoped memory for tpu_custom_call.1']
    #allocation4 [shape = 'u8[8192]{0}', space=vmem, size = 0x2000, scoped, tag = 'output window, operand 1']
    #allocation5 [shape = 's32[2]{0}', space=sflag, size = 0x8, scoped, tag = 'scoped memory for tpu_custom_call.1']
    %22 = vsyncpa [#allocation3], 0
    %s23 = scalar_lea.sflag [#allocation3], 1
    %24 = vsyncpa %s23, 0
    %25 = vsyncpa [#allocation5], 0
    %s26 = scalar_lea.sflag [#allocation5], 1
    %27 = vsyncpa %s26, 0
    loop: start=0, step=1, limit=6
    $region2: #{tpu_custom_call.1} parent=1 // loop_pre_header
      _
    $region3: #{tpu_custom_call.1} parent=1 // loop_header
      %s29 = sphi 0, %s33
      %p30 = scmp.ge.s32.totalorder %s29, 6
      %s39 = sphi 0, %s41
      %s42 = sphi 0, %s39
      %s43 = sphi 0, %s42
      %s59 = sphi 0, %s43
      %s63 = sphi 0, %s63
      %s65 = sphi 0, %s63
      %s66 = sphi 0, %s65
      %s80 = sphi 0, %s66
      %s84 = sphi 0, %s84
      %s86 = sphi 0, %s84
      %s87 = sphi 0, %s86
      %s101 = sphi 0, %s87
      %s105 = sphi 0, %s105
      %s107 = sphi 0, %s105
      %s108 = sphi 0, %s107
      %s122 = sphi 0, %s108
      %s126 = sphi 0, %s126
      %s128 = sphi 0, %s126
      %s129 = sphi 0, %s128
      %s143 = sphi 0, %s129
      %s147 = sphi 0, %s147
      %s149 = sphi 0, %s147
      %s150 = sphi 0, %s149
      %s164 = sphi 0, %s150
      %s168 = sphi 0, %s168
      %s170 = sphi 0, %s168
      %s171 = sphi 0, %s170
      %s185 = sphi 0, %s171
      %s189 = sphi 0, %s189
      %s191 = sphi 0, %s189
      %s192 = sphi 0, %s191
      %s206 = sphi 0, %s192
      %s210 = sphi 0, %s210
      %s212 = sphi 0, %s210
      %s213 = sphi 0, %s212
      %s227 = sphi 0, %s213
      %s231 = sphi 0, %s231
      %s233 = sphi 0, %s231
      %s234 = sphi 0, %s233
      %s248 = sphi 0, %s234
      %s252 = sphi 0, %s252
      %s254 = sphi 0, %s252
      %s255 = sphi 0, %s254
      %s269 = sphi 0, %s255
      %s273 = sphi 0, %s273
      %s275 = sphi 0, %s273
      %s276 = sphi 0, %s275
      %s290 = sphi 0, %s276
      %s294 = sphi 0, %s294
      %s296 = sphi 0, %s294
      %s297 = sphi 0, %s296
      %s311 = sphi 0, %s297
      %s315 = sphi 0, %s315
      %s317 = sphi 0, %s315
      %s318 = sphi 0, %s317
      %s332 = sphi 0, %s318
      %s336 = sphi 0, %s336
      %s338 = sphi 0, %s336
      %s339 = sphi 0, %s338
      %s353 = sphi 0, %s339
      %s359 = sphi 0, %s361
      %s362 = sphi 0, %s359
      %s363 = sphi 0, %s362
      %s379 = sphi 0, %s363
      %s385 = sphi 0, %s387
      %s388 = sphi 0, %s385
      %s389 = sphi 0, %s388
      %s405 = sphi 0, %s389
    $region4: #{tpu_custom_call.1} parent=1 // loop_header_branch
      %32 = sbr.rel (%p30) target = $region8
    $region5: #{tpu_custom_call.1} parent=1 // loop_body
      %s34 = ssub.s32 %s29, 1
      %s35 = ssub.s32 %s29, 2
      %s36 = sadd.s32 %s29, 1
      %s37 = ssub.s32 %s29, %s36
      %p38 = scmp.eq.s32.totalorder %s37, 0
      %s40 = sadd.s32 %s39, 1
      %s41 = scalar_select %p38, %s39, %s40
      %p44 = pneg %p38
      %p45 = scmp.eq.s32.totalorder %s29, 3
      %p46 = por %p44, %p45
      %p47 = scmp.ne.s32.totalorder %s39, %s42
      %p48 = scmp.eq.s32.totalorder %s29, 0
      %p49 = por %p47, %p48
      %p50 = scmp.ne.s32.totalorder %s39, %s42
      %p51 = scmp.eq.s32.totalorder %s34, 3
      %p52 = por %p50, %p51
      %p53 = scmp.ne.s32.totalorder %s42, %s43
      %p54 = scmp.eq.s32.totalorder %s34, 0
      %p55 = por %p53, %p54
      %p56 = scmp.ne.s32.totalorder %s42, %s43
      %p57 = scmp.eq.s32.totalorder %s35, 3
      %p58 = por %p56, %p57
      %p60 = scmp.ne.s32.totalorder %s43, %s59
      %p61 = scmp.eq.s32.totalorder %s35, 0
      %p62 = por %p60, %p61
      %s64 = sadd.s32 %s63, 1
      %p67 = scmp.eq.s32.totalorder %s29, 3
      %p68 = scmp.ne.s32.totalorder %s63, %s65
      %p69 = scmp.eq.s32.totalorder %s29, 0
      %p70 = por %p68, %p69
      %p71 = scmp.ne.s32.totalorder %s63, %s65
      %p72 = scmp.eq.s32.totalorder %s34, 3
      %p73 = por %p71, %p72
      %p74 = scmp.ne.s32.totalorder %s65, %s66
      %p75 = scmp.eq.s32.totalorder %s34, 0
      %p76 = por %p74, %p75
      %p77 = scmp.ne.s32.totalorder %s65, %s66
      %p78 = scmp.eq.s32.totalorder %s35, 3
      %p79 = por %p77, %p78
      %p81 = scmp.ne.s32.totalorder %s66, %s80
      %p82 = scmp.eq.s32.totalorder %s35, 0
      %p83 = por %p81, %p82
      %s85 = sadd.s32 %s84, 1
      %p88 = scmp.eq.s32.totalorder %s29, 3
      %p89 = scmp.ne.s32.totalorder %s84, %s86
      %p90 = scmp.eq.s32.totalorder %s29, 0
      %p91 = por %p89, %p90
      %p92 = scmp.ne.s32.totalorder %s84, %s86
      %p93 = scmp.eq.s32.totalorder %s34, 3
      %p94 = por %p92, %p93
      %p95 = scmp.ne.s32.totalorder %s86, %s87
      %p96 = scmp.eq.s32.totalorder %s34, 0
      %p97 = por %p95, %p96
      %p98 = scmp.ne.s32.totalorder %s86, %s87
      %p99 = scmp.eq.s32.totalorder %s35, 3
      %p100 = por %p98, %p99
      %p102 = scmp.ne.s32.totalorder %s87, %s101
      %p103 = scmp.eq.s32.totalorder %s35, 0
      %p104 = por %p102, %p103
      %s106 = sadd.s32 %s105, 1
      %p109 = scmp.eq.s32.totalorder %s29, 3
      %p110 = scmp.ne.s32.totalorder %s105, %s107
      %p111 = scmp.eq.s32.totalorder %s29, 0
      %p112 = por %p110, %p111
      %p113 = scmp.ne.s32.totalorder %s105, %s107
      %p114 = scmp.eq.s32.totalorder %s34, 3
      %p115 = por %p113, %p114
      %p116 = scmp.ne.s32.totalorder %s107, %s108
      %p117 = scmp.eq.s32.totalorder %s34, 0
      %p118 = por %p116, %p117
      %p119 = scmp.ne.s32.totalorder %s107, %s108
      %p120 = scmp.eq.s32.totalorder %s35, 3
      %p121 = por %p119, %p120
      %p123 = scmp.ne.s32.totalorder %s108, %s122
      %p124 = scmp.eq.s32.totalorder %s35, 0
      %p125 = por %p123, %p124
      %s127 = sadd.s32 %s126, 1
      %p130 = scmp.eq.s32.totalorder %s29, 3
      %p131 = scmp.ne.s32.totalorder %s126, %s128
      %p132 = scmp.eq.s32.totalorder %s29, 0
      %p133 = por %p131, %p132
      %p134 = scmp.ne.s32.totalorder %s126, %s128
      %p135 = scmp.eq.s32.totalorder %s34, 3
      %p136 = por %p134, %p135
      %p137 = scmp.ne.s32.totalorder %s128, %s129
      %p138 = scmp.eq.s32.totalorder %s34, 0
      %p139 = por %p137, %p138
      %p140 = scmp.ne.s32.totalorder %s128, %s129
      %p141 = scmp.eq.s32.totalorder %s35, 3
      %p142 = por %p140, %p141
      %p144 = scmp.ne.s32.totalorder %s129, %s143
      %p145 = scmp.eq.s32.totalorder %s35, 0
      %p146 = por %p144, %p145
      %s148 = sadd.s32 %s147, 1
      %p151 = scmp.eq.s32.totalorder %s29, 3
      %p152 = scmp.ne.s32.totalorder %s147, %s149
      %p153 = scmp.eq.s32.totalorder %s29, 0
      %p154 = por %p152, %p153
      %p155 = scmp.ne.s32.totalorder %s147, %s149
      %p156 = scmp.eq.s32.totalorder %s34, 3
      %p157 = por %p155, %p156
      %p158 = scmp.ne.s32.totalorder %s149, %s150
      %p159 = scmp.eq.s32.totalorder %s34, 0
      %p160 = por %p158, %p159
      %p161 = scmp.ne.s32.totalorder %s149, %s150
      %p162 = scmp.eq.s32.totalorder %s35, 3
      %p163 = por %p161, %p162
      %p165 = scmp.ne.s32.totalorder %s150, %s164
      %p166 = scmp.eq.s32.totalorder %s35, 0
      %p167 = por %p165, %p166
      %s169 = sadd.s32 %s168, 1
      %p172 = scmp.eq.s32.totalorder %s29, 3
      %p173 = scmp.ne.s32.totalorder %s168, %s170
      %p174 = scmp.eq.s32.totalorder %s29, 0
      %p175 = por %p173, %p174
      %p176 = scmp.ne.s32.totalorder %s168, %s170
      %p177 = scmp.eq.s32.totalorder %s34, 3
      %p178 = por %p176, %p177
      %p179 = scmp.ne.s32.totalorder %s170, %s171
      %p180 = scmp.eq.s32.totalorder %s34, 0
      %p181 = por %p179, %p180
      %p182 = scmp.ne.s32.totalorder %s170, %s171
      %p183 = scmp.eq.s32.totalorder %s35, 3
      %p184 = por %p182, %p183
      %p186 = scmp.ne.s32.totalorder %s171, %s185
      %p187 = scmp.eq.s32.totalorder %s35, 0
      %p188 = por %p186, %p187
      %s190 = sadd.s32 %s189, 1
      %p193 = scmp.eq.s32.totalorder %s29, 3
      %p194 = scmp.ne.s32.totalorder %s189, %s191
      %p195 = scmp.eq.s32.totalorder %s29, 0
      %p196 = por %p194, %p195
      %p197 = scmp.ne.s32.totalorder %s189, %s191
      %p198 = scmp.eq.s32.totalorder %s34, 3
      %p199 = por %p197, %p198
      %p200 = scmp.ne.s32.totalorder %s191, %s192
      %p201 = scmp.eq.s32.totalorder %s34, 0
      %p202 = por %p200, %p201
      %p203 = scmp.ne.s32.totalorder %s191, %s192
      %p204 = scmp.eq.s32.totalorder %s35, 3
      %p205 = por %p203, %p204
      %p207 = scmp.ne.s32.totalorder %s192, %s206
      %p208 = scmp.eq.s32.totalorder %s35, 0
      %p209 = por %p207, %p208
      %s211 = sadd.s32 %s210, 1
      %p214 = scmp.eq.s32.totalorder %s29, 3
      %p215 = scmp.ne.s32.totalorder %s210, %s212
      %p216 = scmp.eq.s32.totalorder %s29, 0
      %p217 = por %p215, %p216
      %p218 = scmp.ne.s32.totalorder %s210, %s212
      %p219 = scmp.eq.s32.totalorder %s34, 3
      %p220 = por %p218, %p219
      %p221 = scmp.ne.s32.totalorder %s212, %s213
      %p222 = scmp.eq.s32.totalorder %s34, 0
      %p223 = por %p221, %p222
      %p224 = scmp.ne.s32.totalorder %s212, %s213
      %p225 = scmp.eq.s32.totalorder %s35, 3
      %p226 = por %p224, %p225
      %p228 = scmp.ne.s32.totalorder %s213, %s227
      %p229 = scmp.eq.s32.totalorder %s35, 0
      %p230 = por %p228, %p229
      %s232 = sadd.s32 %s231, 1
      %p235 = scmp.eq.s32.totalorder %s29, 3
      %p236 = scmp.ne.s32.totalorder %s231, %s233
      %p237 = scmp.eq.s32.totalorder %s29, 0
      %p238 = por %p236, %p237
      %p239 = scmp.ne.s32.totalorder %s231, %s233
      %p240 = scmp.eq.s32.totalorder %s34, 3
      %p241 = por %p239, %p240
      %p242 = scmp.ne.s32.totalorder %s233, %s234
      %p243 = scmp.eq.s32.totalorder %s34, 0
      %p244 = por %p242, %p243
      %p245 = scmp.ne.s32.totalorder %s233, %s234
      %p246 = scmp.eq.s32.totalorder %s35, 3
      %p247 = por %p245, %p246
      %p249 = scmp.ne.s32.totalorder %s234, %s248
      %p250 = scmp.eq.s32.totalorder %s35, 0
      %p251 = por %p249, %p250
      %s253 = sadd.s32 %s252, 1
      %p256 = scmp.eq.s32.totalorder %s29, 3
      %p257 = scmp.ne.s32.totalorder %s252, %s254
      %p258 = scmp.eq.s32.totalorder %s29, 0
      %p259 = por %p257, %p258
      %p260 = scmp.ne.s32.totalorder %s252, %s254
      %p261 = scmp.eq.s32.totalorder %s34, 3
      %p262 = por %p260, %p261
      %p263 = scmp.ne.s32.totalorder %s254, %s255
      %p264 = scmp.eq.s32.totalorder %s34, 0
      %p265 = por %p263, %p264
      %p266 = scmp.ne.s32.totalorder %s254, %s255
      %p267 = scmp.eq.s32.totalorder %s35, 3
      %p268 = por %p266, %p267
      %p270 = scmp.ne.s32.totalorder %s255, %s269
      %p271 = scmp.eq.s32.totalorder %s35, 0
      %p272 = por %p270, %p271
      %s274 = sadd.s32 %s273, 1
      %p277 = scmp.eq.s32.totalorder %s29, 3
      %p278 = scmp.ne.s32.totalorder %s273, %s275
      %p279 = scmp.eq.s32.totalorder %s29, 0
      %p280 = por %p278, %p279
      %p281 = scmp.ne.s32.totalorder %s273, %s275
      %p282 = scmp.eq.s32.totalorder %s34, 3
      %p283 = por %p281, %p282
      %p284 = scmp.ne.s32.totalorder %s275, %s276
      %p285 = scmp.eq.s32.totalorder %s34, 0
      %p286 = por %p284, %p285
      %p287 = scmp.ne.s32.totalorder %s275, %s276
      %p288 = scmp.eq.s32.totalorder %s35, 3
      %p289 = por %p287, %p288
      %p291 = scmp.ne.s32.totalorder %s276, %s290
      %p292 = scmp.eq.s32.totalorder %s35, 0
      %p293 = por %p291, %p292
      %s295 = sadd.s32 %s294, 1
      %p298 = scmp.eq.s32.totalorder %s29, 3
      %p299 = scmp.ne.s32.totalorder %s294, %s296
      %p300 = scmp.eq.s32.totalorder %s29, 0
      %p301 = por %p299, %p300
      %p302 = scmp.ne.s32.totalorder %s294, %s296
      %p303 = scmp.eq.s32.totalorder %s34, 3
      %p304 = por %p302, %p303
      %p305 = scmp.ne.s32.totalorder %s296, %s297
      %p306 = scmp.eq.s32.totalorder %s34, 0
      %p307 = por %p305, %p306
      %p308 = scmp.ne.s32.totalorder %s296, %s297
      %p309 = scmp.eq.s32.totalorder %s35, 3
      %p310 = por %p308, %p309
      %p312 = scmp.ne.s32.totalorder %s297, %s311
      %p313 = scmp.eq.s32.totalorder %s35, 0
      %p314 = por %p312, %p313
      %s316 = sadd.s32 %s315, 1
      %p319 = scmp.eq.s32.totalorder %s29, 3
      %p320 = scmp.ne.s32.totalorder %s315, %s317
      %p321 = scmp.eq.s32.totalorder %s29, 0
      %p322 = por %p320, %p321
      %p323 = scmp.ne.s32.totalorder %s315, %s317
      %p324 = scmp.eq.s32.totalorder %s34, 3
      %p325 = por %p323, %p324
      %p326 = scmp.ne.s32.totalorder %s317, %s318
      %p327 = scmp.eq.s32.totalorder %s34, 0
      %p328 = por %p326, %p327
      %p329 = scmp.ne.s32.totalorder %s317, %s318
      %p330 = scmp.eq.s32.totalorder %s35, 3
      %p331 = por %p329, %p330
      %p333 = scmp.ne.s32.totalorder %s318, %s332
      %p334 = scmp.eq.s32.totalorder %s35, 0
      %p335 = por %p333, %p334
      %s337 = sadd.s32 %s336, 1
      %p340 = scmp.eq.s32.totalorder %s29, 3
      %p341 = scmp.ne.s32.totalorder %s336, %s338
      %p342 = scmp.eq.s32.totalorder %s29, 0
      %p343 = por %p341, %p342
      %p344 = scmp.ne.s32.totalorder %s336, %s338
      %p345 = scmp.eq.s32.totalorder %s34, 3
      %p346 = por %p344, %p345
      %p347 = scmp.ne.s32.totalorder %s338, %s339
      %p348 = scmp.eq.s32.totalorder %s34, 0
      %p349 = por %p347, %p348
      %p350 = scmp.ne.s32.totalorder %s338, %s339
      %p351 = scmp.eq.s32.totalorder %s35, 3
      %p352 = por %p350, %p351
      %p354 = scmp.ne.s32.totalorder %s339, %s353
      %p355 = scmp.eq.s32.totalorder %s35, 0
      %p356 = por %p354, %p355
      %s357 = ssub.s32 %s29, %s36
      %p358 = scmp.eq.s32.totalorder %s357, 0
      %s360 = sadd.s32 %s359, 1
      %s361 = scalar_select %p358, %s359, %s360
      %p364 = pneg %p358
      %p365 = scmp.eq.s32.totalorder %s29, 3
      %p366 = por %p364, %p365
      %p367 = scmp.ne.s32.totalorder %s359, %s362
      %p368 = scmp.eq.s32.totalorder %s29, 0
      %p369 = por %p367, %p368
      %p370 = scmp.ne.s32.totalorder %s359, %s362
      %p371 = scmp.eq.s32.totalorder %s34, 3
      %p372 = por %p370, %p371
      %p373 = scmp.ne.s32.totalorder %s362, %s363
      %p374 = scmp.eq.s32.totalorder %s34, 0
      %p375 = por %p373, %p374
      %p376 = scmp.ne.s32.totalorder %s362, %s363
      %p377 = scmp.eq.s32.totalorder %s35, 3
      %p378 = por %p376, %p377
      %p380 = scmp.ne.s32.totalorder %s363, %s379
      %p381 = scmp.eq.s32.totalorder %s35, 0
      %p382 = por %p380, %p381
      %s383 = ssub.s32 %s29, %s36
      %p384 = scmp.eq.s32.totalorder %s383, 0
      %s386 = sadd.s32 %s385, 1
      %s387 = scalar_select %p384, %s385, %s386
      %p390 = pneg %p384
      %p391 = scmp.eq.s32.totalorder %s29, 3
      %p392 = por %p390, %p391
      %p393 = scmp.ne.s32.totalorder %s385, %s388
      %p394 = scmp.eq.s32.totalorder %s29, 0
      %p395 = por %p393, %p394
      %p396 = scmp.ne.s32.totalorder %s385, %s388
      %p397 = scmp.eq.s32.totalorder %s34, 3
      %p398 = por %p396, %p397
      %p399 = scmp.ne.s32.totalorder %s388, %s389
      %p400 = scmp.eq.s32.totalorder %s34, 0
      %p401 = por %p399, %p400
      %p402 = scmp.ne.s32.totalorder %s388, %s389
      %p403 = scmp.eq.s32.totalorder %s35, 3
      %p404 = por %p402, %p403
      %p406 = scmp.ne.s32.totalorder %s389, %s405
      %p407 = scmp.eq.s32.totalorder %s35, 0
      %p408 = por %p406, %p407
      %p409 = scmp.le.s32.totalorder 1, %s29
      %p410 = scmp.lt.s32.totalorder %s29, 5
      %p411 = pnand %p409, %p410
      %p412 = pneg %p411
      // Predicated region
      $region9: #{tpu_custom_call.1} parent=5 // pred_check
        _
      $region10: #{tpu_custom_call.1} parent=5 // pred_check_branch
        %414 = sbr.rel (%p411) target = $region12
      $region11: #{tpu_custom_call.1} parent=5 // pred_region
        %s415 = ssub.s32 %s29, 1
        // Predicated region
        $region13: #{tpu_custom_call.1} parent=11 // pred_check
          %p416 = pneg %p76
        $region14: #{tpu_custom_call.1} parent=11 // pred_check_branch
          %418 = sbr.rel (%p416) target = $region16
        $region15: #{tpu_custom_call.1} parent=11 // pred_region
          _
        $region16: #{tpu_custom_call.1} parent=11 // pred_fallthru
          _
        // Predicated region
        $region17: #{tpu_custom_call.1} parent=11 // pred_check
          %p419 = pneg %p97
        $region18: #{tpu_custom_call.1} parent=11 // pred_check_branch
          %421 = sbr.rel (%p419) target = $region20
        $region19: #{tpu_custom_call.1} parent=11 // pred_region
          _
        $region20: #{tpu_custom_call.1} parent=11 // pred_fallthru
          _
        // Predicated region
        $region21: #{tpu_custom_call.1} parent=11 // pred_check
          %p422 = pneg %p118
        $region22: #{tpu_custom_call.1} parent=11 // pred_check_branch
          %424 = sbr.rel (%p422) target = $region24
        $region23: #{tpu_custom_call.1} parent=11 // pred_region
          _
        $region24: #{tpu_custom_call.1} parent=11 // pred_fallthru
          _
        // Predicated region
        $region25: #{tpu_custom_call.1} parent=11 // pred_check
          %p425 = pneg %p139
        $region26: #{tpu_custom_call.1} parent=11 // pred_check_branch
          %427 = sbr.rel (%p425) target = $region28
        $region27: #{tpu_custom_call.1} parent=11 // pred_region
          _
        $region28: #{tpu_custom_call.1} parent=11 // pred_fallthru
          _
        // Predicated region
        $region29: #{tpu_custom_call.1} parent=11 // pred_check
          %p428 = pneg %p160
        $region30: #{tpu_custom_call.1} parent=11 // pred_check_branch
          %430 = sbr.rel (%p428) target = $region32
        $region31: #{tpu_custom_call.1} parent=11 // pred_region
          _
        $region32: #{tpu_custom_call.1} parent=11 // pred_fallthru
          _
        // Predicated region
        $region33: #{tpu_custom_call.1} parent=11 // pred_check
          %p431 = pneg %p181
        $region34: #{tpu_custom_call.1} parent=11 // pred_check_branch
          %433 = sbr.rel (%p431) target = $region36
        $region35: #{tpu_custom_call.1} parent=11 // pred_region
          _
        $region36: #{tpu_custom_call.1} parent=11 // pred_fallthru
          _
        // Predicated region
        $region37: #{tpu_custom_call.1} parent=11 // pred_check
          %p434 = pneg %p202
        $region38: #{tpu_custom_call.1} parent=11 // pred_check_branch
          %436 = sbr.rel (%p434) target = $region40
        $region39: #{tpu_custom_call.1} parent=11 // pred_region
          _
        $region40: #{tpu_custom_call.1} parent=11 // pred_fallthru
          _
        // Predicated region
        $region41: #{tpu_custom_call.1} parent=11 // pred_check
          %p437 = pneg %p223
        $region42: #{tpu_custom_call.1} parent=11 // pred_check_branch
          %439 = sbr.rel (%p437) target = $region44
        $region43: #{tpu_custom_call.1} parent=11 // pred_region
          _
        $region44: #{tpu_custom_call.1} parent=11 // pred_fallthru
          _
        // Predicated region
        $region45: #{tpu_custom_call.1} parent=11 // pred_check
          %p440 = pneg %p244
        $region46: #{tpu_custom_call.1} parent=11 // pred_check_branch
          %442 = sbr.rel (%p440) target = $region48
        $region47: #{tpu_custom_call.1} parent=11 // pred_region
          _
        $region48: #{tpu_custom_call.1} parent=11 // pred_fallthru
          _
        // Predicated region
        $region49: #{tpu_custom_call.1} parent=11 // pred_check
          %p443 = pneg %p265
        $region50: #{tpu_custom_call.1} parent=11 // pred_check_branch
          %445 = sbr.rel (%p443) target = $region52
        $region51: #{tpu_custom_call.1} parent=11 // pred_region
          _
        $region52: #{tpu_custom_call.1} parent=11 // pred_fallthru
          _
        // Predicated region
        $region53: #{tpu_custom_call.1} parent=11 // pred_check
          %p446 = pneg %p286
        $region54: #{tpu_custom_call.1} parent=11 // pred_check_branch
          %448 = sbr.rel (%p446) target = $region56
        $region55: #{tpu_custom_call.1} parent=11 // pred_region
          _
        $region56: #{tpu_custom_call.1} parent=11 // pred_fallthru
          _
        // Predicated region
        $region57: #{tpu_custom_call.1} parent=11 // pred_check
          %p449 = pneg %p307
        $region58: #{tpu_custom_call.1} parent=11 // pred_check_branch
          %451 = sbr.rel (%p449) target = $region60
        $region59: #{tpu_custom_call.1} parent=11 // pred_region
          _
        $region60: #{tpu_custom_call.1} parent=11 // pred_fallthru
          _
        // Predicated region
        $region61: #{tpu_custom_call.1} parent=11 // pred_check
          %p452 = pneg %p328
        $region62: #{tpu_custom_call.1} parent=11 // pred_check_branch
          %454 = sbr.rel (%p452) target = $region64
        $region63: #{tpu_custom_call.1} parent=11 // pred_region
          _
        $region64: #{tpu_custom_call.1} parent=11 // pred_fallthru
          _
        // Predicated region
        $region65: #{tpu_custom_call.1} parent=11 // pred_check
          %p455 = pneg %p349
        $region66: #{tpu_custom_call.1} parent=11 // pred_check_branch
          %457 = sbr.rel (%p455) target = $region68
        $region67: #{tpu_custom_call.1} parent=11 // pred_region
          _
        $region68: #{tpu_custom_call.1} parent=11 // pred_fallthru
          _
      $region12: #{tpu_custom_call.1} parent=5 // pred_fallthru
        _
      %p458 = scmp.lt.s32.totalorder %s29, 4
      // Predicated region
      $region69: #{tpu_custom_call.1} parent=5 // pred_check
        %p459 = pneg %p458
      $region70: #{tpu_custom_call.1} parent=5 // pred_check_branch
        %461 = sbr.rel (%p459) target = $region72
      $region71: #{tpu_custom_call.1} parent=5 // pred_region
        // Predicated region
        $region73: #{tpu_custom_call.1} parent=71 // pred_check
          %p462 = pneg %p49
        $region74: #{tpu_custom_call.1} parent=71 // pred_check_branch
          %464 = sbr.rel (%p462) target = $region76
        $region75: #{tpu_custom_call.1} parent=71 // pred_region
          %p465 = scmp.lt.s32.totalorder %s29, 3
          %s466 = scalar_select %p465, %s29, 3
          %s467 = smul.addr %s466, 8
          %s468 = scalar_lea.vmem %s0, %s467
        $region76: #{tpu_custom_call.1} parent=71 // pred_fallthru
          _
      $region72: #{tpu_custom_call.1} parent=5 // pred_fallthru
        _
      %p469 = scmp.le.s32.totalorder 1, %s29
      %p470 = scmp.lt.s32.totalorder %s29, 5
      %p471 = pnand %p469, %p470
      %p472 = pneg %p471
      // Predicated region
      $region77: #{tpu_custom_call.1} parent=5 // pred_check
        _
      $region78: #{tpu_custom_call.1} parent=5 // pred_check_branch
        %474 = sbr.rel (%p471) target = $region80
      $region79: #{tpu_custom_call.1} parent=5 // pred_region
        %s475 = ssub.s32 %s29, 1
        %p476 = scmp.lt.s32.totalorder %s34, 3
        %s477 = scalar_select %p476, %s34, 3
        %s478 = smul.addr %s477, 8
        %s479 = scalar_lea.vmem %s0, %s478
        %p480 = pneg %p55
        %p481 = pneg %p52
        %p482 = pneg %p76
        %p483 = pneg %p73
        %p484 = pneg %p97
        %p485 = pneg %p94
        %p486 = pneg %p118
        %p487 = pneg %p115
        %p488 = pneg %p139
        %p489 = pneg %p136
        %p490 = pneg %p160
        %p491 = pneg %p157
        %p492 = pneg %p181
        %p493 = pneg %p178
        %p494 = pneg %p202
        %p495 = pneg %p199
        %p496 = pneg %p223
        %p497 = pneg %p220
        %p498 = pneg %p244
        %p499 = pneg %p241
        %p500 = pneg %p265
        %p501 = pneg %p262
        %p502 = pneg %p286
        %p503 = pneg %p283
        %p504 = pneg %p307
        %p505 = pneg %p304
        %p506 = pneg %p328
        %p507 = pneg %p325
        %p508 = pneg %p349
        %p509 = pneg %p346
        %p510 = pneg %p375
        %p511 = pneg %p372
        %s512 = sand.u32 %s362, 1
        %s513 = scalar_lea.sflag [#allocation3], %s512
        %s514 = sand.u32 %s362, 1
        %s515 = smul.addr %s514, 8
        %s516 = scalar_lea.vmem [#allocation2], %s515
        %p517 = pneg %p401
        %p518 = pneg %p398
        %s519 = sand.u32 %s388, 1
        %s520 = scalar_lea.sflag [#allocation5], %s519
        %s521 = sand.u32 %s388, 1
        %s522 = smul.addr %s521, 8
        %s523 = scalar_lea.vmem [#allocation4], %s522
        %p524 = scmp.lt.s32.totalorder %s34, 3
        %s525 = scalar_select %p524, %s34, 3
        %s526 = smul.addr %s525, 8
        %s527 = scalar_lea.vmem %s0, %s526
        %v528 = vld [vmem:[%s527] sm:$0xff]
        %v529 = vld [vmem:[%s1] sm:$0xff]
        %v530 = vld [vmem:[%s1 + $0x8] sm:$0xff]
        %v531 = vld [vmem:[%s2] sm:$0x1]
        %v533 = vlaneseq
        %v534 = vshrl.u32 %v533, 7
        %v535 = vsub.s32 0, %v534
        %v536 = vrot.slane %v531, %v535
        %vm538 = vcmask 130048
        %v540 = vsel %vm538, %v528, 0
        %542 = vmatprep.subr.mxu0 0.0
        %543 = vmatpush1.msra.mxu0 %v529
        %544 = vmatprep.subr.mxu0 0.0
        %545 = vmatpush1.msra.mxu0 %v530
        %546 = vmatprep.subr.mxu0 0.0
        %547 = vmatpush1.msra.mxu0 0.0
        %548 = vmatprep.subr.mxu0 0.0
        %549 = vmatpush1.msra.mxu0 0.0
        %550 = vmatprep.subr.mxu0 0.0
        %551 = vmatpush1.msra.mxu0 0.0
        %552 = vmatprep.subr.mxu0 0.0
        %553 = vmatpush1.msra.mxu0 0.0
        %554 = vmatprep.subr.mxu0 0.0
        %555 = vmatpush1.msra.mxu0 0.0
        %556 = vmatprep.subr.mxu0 0.0
        %557 = vmatpush1.msra.mxu0 0.0
        %558 = vmatprep.subr.mxu0 0.0
        %559 = vmatpush1.msra.mxu0 0.0
        %560 = vmatprep.subr.mxu0 0.0
        %561 = vmatpush1.msra.mxu0 0.0
        %562 = vmatprep.subr.mxu0 0.0
        %563 = vmatpush1.msra.mxu0 0.0
        %564 = vmatprep.subr.mxu0 0.0
        %565 = vmatpush1.msra.mxu0 0.0
        %566 = vmatprep.subr.mxu0 0.0
        %567 = vmatpush1.msra.mxu0 0.0
        %568 = vmatprep.subr.mxu0 0.0
        %569 = vmatpush1.msra.mxu0 0.0
        %570 = vmatprep.subr.mxu0 0.0
        %571 = vmatpush1.msra.mxu0 0.0
        %572 = vmatprep.subr.mxu0 0.0
        %573 = vmatpush1.msra.mxu0 0.0
        %574 = vmatprep.subr.mxu0 0.0
        %575 = vmatpush1.msra.mxu0 0.0
        %576 = vmatprep.subr.mxu0 0.0
        %577 = vmatpush1.msra.mxu0 0.0
        %578 = vmatprep.subr.mxu0 0.0
        %579 = vmatpush1.msra.mxu0 0.0
        %580 = vmatprep.subr.mxu0 0.0
        %581 = vmatpush1.msra.mxu0 0.0
        %582 = vmatprep.subr.mxu0 0.0
        %583 = vmatpush1.msra.mxu0 0.0
        %584 = vmatprep.subr.mxu0 0.0
        %585 = vmatpush1.msra.mxu0 0.0
        %586 = vmatprep.subr.mxu0 0.0
        %587 = vmatpush1.msra.mxu0 0.0
        %588 = vmatprep.subr.mxu0 0.0
        %589 = vmatpush1.msra.mxu0 0.0
        %590 = vmatprep.subr.mxu0 0.0
        %591 = vmatpush1.msra.mxu0 0.0
        %592 = vmatprep.subr.mxu0 0.0
        %593 = vmatpush1.msra.mxu0 0.0
        %594 = vmatprep.subr.mxu0 0.0
        %595 = vmatpush1.msra.mxu0 0.0
        %596 = vmatprep.subr.mxu0 0.0
        %597 = vmatpush1.msra.mxu0 0.0
        %598 = vmatprep.subr.mxu0 0.0
        %599 = vmatpush1.msra.mxu0 0.0
        %600 = vmatprep.subr.mxu0 0.0
        %601 = vmatpush1.msra.mxu0 0.0
        %602 = vmatprep.subr.mxu0 0.0
        %603 = vmatpush1.msra.mxu0 0.0
        %604 = vmatprep.subr.mxu0 0.0
        %605 = vmatpush1.msra.mxu0 0.0
        %606 = vmatprep.mubr.f32.mxu0 0.0
        %607 = vmatmul.mubr.f32.gmra.mrb[0].mxu0 %v540
        %v608 = vpop.f32.mrb[0].mxu0
        %v609 = vadd.f32 %v536, %v608
        %v610 = vpop.f32.mrb[0].mxu0
        %611 = vdwg.mxu0
        %v612 = vld [vmem:[%s3] sm:$0xff]
        %v613 = vld [vmem:[%s3 + $0x8] sm:$0xff]
        %v614 = vld [vmem:[%s3 + $0x10] sm:$0xff]
        %v615 = vld [vmem:[%s3 + $0x18] sm:$0xff]
        %v616 = vld [vmem:[%s3 + $0x20] sm:$0xff]
        %v617 = vld [vmem:[%s3 + $0x28] sm:$0xff]
        %v618 = vld [vmem:[%s3 + $0x30] sm:$0xff]
        %v619 = vld [vmem:[%s3 + $0x38] sm:$0xff]
        %v620 = vld [vmem:[%s3 + $0x40] sm:$0xff]
        %v621 = vld [vmem:[%s3 + $0x48] sm:$0xff]
        %v622 = vld [vmem:[%s3 + $0x50] sm:$0xff]
        %v623 = vld [vmem:[%s3 + $0x58] sm:$0xff]
        %v624 = vld [vmem:[%s3 + $0x60] sm:$0xff]
        %v625 = vld [vmem:[%s3 + $0x68] sm:$0xff]
        %v626 = vld [vmem:[%s3 + $0x70] sm:$0xff]
        %v627 = vld [vmem:[%s3 + $0x78] sm:$0xff]
        %v628 = vld [vmem:[%s4] sm:$0x3]
        %v630 = vlaneseq
        %v631 = vshrl.u32 %v630, 7
        %v632 = vsub.s32 0, %v631
        %v633 = vrot.slane %v628, %v632
        %v634 = vlaneseq
        %v635 = vshrl.u32 %v634, 7
        %v636 = vsub.s32 1, %v635
        %v637 = vrot.slane %v628, %v636
        %vm640 = vcmask 523264
        %v642 = vsel %vm640, %v609, 0
        %644 = vmatprep.subr.mxu0 %v613
        %645 = vmatpush1.msra.mxu0 %v612
        %646 = vmatprep.subr.mxu0 %v615
        %647 = vmatpush1.msra.mxu0 %v614
        %648 = vmatprep.subr.mxu0 %v617
        %649 = vmatpush1.msra.mxu0 %v616
        %650 = vmatprep.subr.mxu0 %v619
        %651 = vmatpush1.msra.mxu0 %v618
        %652 = vmatprep.subr.mxu0 %v621
        %653 = vmatpush1.msra.mxu0 %v620
        %654 = vmatprep.subr.mxu0 %v623
        %655 = vmatpush1.msra.mxu0 %v622
        %656 = vmatprep.subr.mxu0 %v625
        %657 = vmatpush1.msra.mxu0 %v624
        %658 = vmatprep.subr.mxu0 %v627
        %659 = vmatpush1.msra.mxu0 %v626
        %660 = vmatprep.subr.mxu0 0.0
        %661 = vmatpush1.msra.mxu0 0.0
        %662 = vmatprep.subr.mxu0 0.0
        %663 = vmatpush1.msra.mxu0 0.0
        %664 = vmatprep.subr.mxu0 0.0
        %665 = vmatpush1.msra.mxu0 0.0
        %666 = vmatprep.subr.mxu0 0.0
        %667 = vmatpush1.msra.mxu0 0.0
        %668 = vmatprep.subr.mxu0 0.0
        %669 = vmatpush1.msra.mxu0 0.0
        %670 = vmatprep.subr.mxu0 0.0
        %671 = vmatpush1.msra.mxu0 0.0
        %672 = vmatprep.subr.mxu0 0.0
        %673 = vmatpush1.msra.mxu0 0.0
        %674 = vmatprep.subr.mxu0 0.0
        %675 = vmatpush1.msra.mxu0 0.0
        %676 = vmatprep.subr.mxu0 0.0
        %677 = vmatpush1.msra.mxu0 0.0
        %678 = vmatprep.subr.mxu0 0.0
        %679 = vmatpush1.msra.mxu0 0.0
        %680 = vmatprep.subr.mxu0 0.0
        %681 = vmatpush1.msra.mxu0 0.0
        %682 = vmatprep.subr.mxu0 0.0
        %683 = vmatpush1.msra.mxu0 0.0
        %684 = vmatprep.subr.mxu0 0.0
        %685 = vmatpush1.msra.mxu0 0.0
        %686 = vmatprep.subr.mxu0 0.0
        %687 = vmatpush1.msra.mxu0 0.0
        %688 = vmatprep.subr.mxu0 0.0
        %689 = vmatpush1.msra.mxu0 0.0
        %690 = vmatprep.subr.mxu0 0.0
        %691 = vmatpush1.msra.mxu0 0.0
        %692 = vmatprep.subr.mxu0 0.0
        %693 = vmatpush1.msra.mxu0 0.0
        %694 = vmatprep.subr.mxu0 0.0
        %695 = vmatpush1.msra.mxu0 0.0
        %696 = vmatprep.subr.mxu0 0.0
        %697 = vmatpush1.msra.mxu0 0.0
        %698 = vmatprep.subr.mxu0 0.0
        %699 = vmatpush1.msra.mxu0 0.0
        %700 = vmatprep.subr.mxu0 0.0
        %701 = vmatpush1.msra.mxu0 0.0
        %702 = vmatprep.subr.mxu0 0.0
        %703 = vmatpush1.msra.mxu0 0.0
        %704 = vmatprep.subr.mxu0 0.0
        %705 = vmatpush1.msra.mxu0 0.0
        %706 = vmatprep.subr.mxu0 0.0
        %707 = vmatpush1.msra.mxu0 0.0
        %708 = vmatprep.mubr.f32.mxu0 0.0
        %709 = vmatmul.mubr.f32.gmra.mrb[0].mxu0 %v642
        %v710 = vpop.f32.mrb[0].mxu0
        %v711 = vadd.f32 %v633, %v710
        %v712 = vpop.f32.mrb[0].mxu0
        %v713 = vadd.f32 %v637, %v712
        %714 = vdwg.mxu0
        %716 = vrot.lane.b32.xlu0 %v711, 120
        %v717 = vpop.permute.xlu0 %716
        %719 = vrot.lane.b32.xlu0 %v711, 112
        %v720 = vpop.permute.xlu0 %719
        %722 = vrot.lane.b32.xlu0 %v711, 104
        %v723 = vpop.permute.xlu0 %722
        %725 = vrot.lane.b32.xlu0 %v711, 96
        %v726 = vpop.permute.xlu0 %725
        %728 = vrot.lane.b32.xlu0 %v711, 88
        %v729 = vpop.permute.xlu0 %728
        %731 = vrot.lane.b32.xlu0 %v711, 80
        %v732 = vpop.permute.xlu0 %731
        %734 = vrot.lane.b32.xlu0 %v711, 72
        %v735 = vpop.permute.xlu0 %734
        %737 = vrot.lane.b32.xlu0 %v711, 64
        %v738 = vpop.permute.xlu0 %737
        %740 = vrot.lane.b32.xlu0 %v711, 56
        %v741 = vpop.permute.xlu0 %740
        %743 = vrot.lane.b32.xlu0 %v711, 48
        %v744 = vpop.permute.xlu0 %743
        %746 = vrot.lane.b32.xlu0 %v711, 40
        %v747 = vpop.permute.xlu0 %746
        %749 = vrot.lane.b32.xlu0 %v711, 32
        %v750 = vpop.permute.xlu0 %749
        %752 = vrot.lane.b32.xlu0 %v711, 24
        %v753 = vpop.permute.xlu0 %752
        %755 = vrot.lane.b32.xlu0 %v711, 16
        %v756 = vpop.permute.xlu0 %755
        %758 = vrot.lane.b32.xlu0 %v711, 8
        %v759 = vpop.permute.xlu0 %758
        %762 = vrot.lane.b32.xlu0 %v713, 120
        %v763 = vpop.permute.xlu0 %762
        %765 = vrot.lane.b32.xlu0 %v713, 112
        %v766 = vpop.permute.xlu0 %765
        %768 = vrot.lane.b32.xlu0 %v713, 104
        %v769 = vpop.permute.xlu0 %768
        %771 = vrot.lane.b32.xlu0 %v713, 96
        %v772 = vpop.permute.xlu0 %771
        %774 = vrot.lane.b32.xlu0 %v713, 88
        %v775 = vpop.permute.xlu0 %774
        %777 = vrot.lane.b32.xlu0 %v713, 80
        %v778 = vpop.permute.xlu0 %777
        %780 = vrot.lane.b32.xlu0 %v713, 72
        %v781 = vpop.permute.xlu0 %780
        %v783 = vcombine.low %v711, %v720
        %v784 = vcombine.high %v711, %v720
        %v786 = vunpack.c.l.s4 1983009808
        %v787 = vunpack.c.0.s8 %v786
        %v788 = vlaneseq
        %v789 = vshrl.u32 %v788, 7
        %v790 = vsub.s32 %v787, %v789
        %v791 = vrot.slane %v783, %v790
        %v793 = vunpack.c.l.s4 1983009808
        %v794 = vunpack.c.0.s8 %v793
        %v795 = vlaneseq
        %v796 = vshrl.u32 %v795, 7
        %v797 = vsub.s32 %v794, %v796
        %v798 = vrot.slane %v784, %v797
        %v799 = vcombine.low %v717, %v723
        %v800 = vcombine.high %v717, %v723
        %v802 = vunpack.c.l.s4 1983009808
        %v803 = vunpack.c.0.s8 %v802
        %v804 = vlaneseq
        %v805 = vshrl.u32 %v804, 7
        %v806 = vsub.s32 %v803, %v805
        %v807 = vrot.slane %v799, %v806
        %v809 = vunpack.c.l.s4 1983009808
        %v810 = vunpack.c.0.s8 %v809
        %v811 = vlaneseq
        %v812 = vshrl.u32 %v811, 7
        %v813 = vsub.s32 %v810, %v812
        %v814 = vrot.slane %v800, %v813
        %v815 = vcombine.low %v726, %v732
        %v816 = vcombine.high %v726, %v732
        %v818 = vunpack.c.l.s4 1983009808
        %v819 = vunpack.c.0.s8 %v818
        %v820 = vlaneseq
        %v821 = vshrl.u32 %v820, 7
        %v822 = vsub.s32 %v819, %v821
        %v823 = vrot.slane %v815, %v822
        %v825 = vunpack.c.l.s4 1983009808
        %v826 = vunpack.c.0.s8 %v825
        %v827 = vlaneseq
        %v828 = vshrl.u32 %v827, 7
        %v829 = vsub.s32 %v826, %v828
        %v830 = vrot.slane %v816, %v829
        %v831 = vcombine.low %v729, %v735
        %v832 = vcombine.high %v729, %v735
        %v834 = vunpack.c.l.s4 1983009808
        %v835 = vunpack.c.0.s8 %v834
        %v836 = vlaneseq
        %v837 = vshrl.u32 %v836, 7
        %v838 = vsub.s32 %v835, %v837
        %v839 = vrot.slane %v831, %v838
        %v841 = vunpack.c.l.s4 1983009808
        %v842 = vunpack.c.0.s8 %v841
        %v843 = vlaneseq
        %v844 = vshrl.u32 %v843, 7
        %v845 = vsub.s32 %v842, %v844
        %v846 = vrot.slane %v832, %v845
        %v847 = vcombine.low %v791, %v807
        %v848 = vcombine.high %v791, %v807
        %v850 = vunpack.c.l.s4 1934713408
        %v851 = vunpack.c.0.s8 %v850
        %v852 = vlaneseq
        %v853 = vshrl.u32 %v852, 7
        %v854 = vsub.s32 %v851, %v853
        %v855 = vrot.slane %v847, %v854
        %v857 = vunpack.c.l.s4 1934713408
        %v858 = vunpack.c.0.s8 %v857
        %v859 = vlaneseq
        %v860 = vshrl.u32 %v859, 7
        %v861 = vsub.s32 %v858, %v860
        %v862 = vrot.slane %v848, %v861
        %v863 = vcombine.low %v798, %v814
        %v864 = vcombine.high %v798, %v814
        %v866 = vunpack.c.l.s4 1934713408
        %v867 = vunpack.c.0.s8 %v866
        %v868 = vlaneseq
        %v869 = vshrl.u32 %v868, 7
        %v870 = vsub.s32 %v867, %v869
        %v871 = vrot.slane %v863, %v870
        %v873 = vunpack.c.l.s4 1934713408
        %v874 = vunpack.c.0.s8 %v873
        %v875 = vlaneseq
        %v876 = vshrl.u32 %v875, 7
        %v877 = vsub.s32 %v874, %v876
        %v878 = vrot.slane %v864, %v877
        %v879 = vcombine.low %v823, %v839
        %v880 = vcombine.high %v823, %v839
        %v882 = vunpack.c.l.s4 1934713408
        %v883 = vunpack.c.0.s8 %v882
        %v884 = vlaneseq
        %v885 = vshrl.u32 %v884, 7
        %v886 = vsub.s32 %v883, %v885
        %v887 = vrot.slane %v879, %v886
        %v889 = vunpack.c.l.s4 1934713408
        %v890 = vunpack.c.0.s8 %v889
        %v891 = vlaneseq
        %v892 = vshrl.u32 %v891, 7
        %v893 = vsub.s32 %v890, %v892
        %v894 = vrot.slane %v880, %v893
        %v895 = vcombine.low %v830, %v846
        %v896 = vcombine.high %v830, %v846
        %v898 = vunpack.c.l.s4 1934713408
        %v899 = vunpack.c.0.s8 %v898
        %v900 = vlaneseq
        %v901 = vshrl.u32 %v900, 7
        %v902 = vsub.s32 %v899, %v901
        %v903 = vrot.slane %v895, %v902
        %v905 = vunpack.c.l.s4 1934713408
        %v906 = vunpack.c.0.s8 %v905
        %v907 = vlaneseq
        %v908 = vshrl.u32 %v907, 7
        %v909 = vsub.s32 %v906, %v908
        %v910 = vrot.slane %v896, %v909
        %v911 = vcombine.low %v855, %v887
        %v912 = vcombine.high %v855, %v887
        %v913 = vcombine.low %v862, %v894
        %v914 = vcombine.high %v862, %v894
        %v915 = vcombine.low %v871, %v903
        %v916 = vcombine.high %v871, %v903
        %v917 = vcombine.low %v878, %v910
        %v918 = vcombine.high %v878, %v910
        %v919 = vcombine.low %v738, %v744
        %v920 = vcombine.high %v738, %v744
        %v922 = vunpack.c.l.s4 1983009808
        %v923 = vunpack.c.0.s8 %v922
        %v924 = vlaneseq
        %v925 = vshrl.u32 %v924, 7
        %v926 = vsub.s32 %v923, %v925
        %v927 = vrot.slane %v919, %v926
        %v929 = vunpack.c.l.s4 1983009808
        %v930 = vunpack.c.0.s8 %v929
        %v931 = vlaneseq
        %v932 = vshrl.u32 %v931, 7
        %v933 = vsub.s32 %v930, %v932
        %v934 = vrot.slane %v920, %v933
        %v935 = vcombine.low %v741, %v747
        %v936 = vcombine.high %v741, %v747
        %v938 = vunpack.c.l.s4 1983009808
        %v939 = vunpack.c.0.s8 %v938
        %v940 = vlaneseq
        %v941 = vshrl.u32 %v940, 7
        %v942 = vsub.s32 %v939, %v941
        %v943 = vrot.slane %v935, %v942
        %v945 = vunpack.c.l.s4 1983009808
        %v946 = vunpack.c.0.s8 %v945
        %v947 = vlaneseq
        %v948 = vshrl.u32 %v947, 7
        %v949 = vsub.s32 %v946, %v948
        %v950 = vrot.slane %v936, %v949
        %v951 = vcombine.low %v750, %v756
        %v952 = vcombine.high %v750, %v756
        %v954 = vunpack.c.l.s4 1983009808
        %v955 = vunpack.c.0.s8 %v954
        %v956 = vlaneseq
        %v957 = vshrl.u32 %v956, 7
        %v958 = vsub.s32 %v955, %v957
        %v959 = vrot.slane %v951, %v958
        %v961 = vunpack.c.l.s4 1983009808
        %v962 = vunpack.c.0.s8 %v961
        %v963 = vlaneseq
        %v964 = vshrl.u32 %v963, 7
        %v965 = vsub.s32 %v962, %v964
        %v966 = vrot.slane %v952, %v965
        %v967 = vcombine.low %v753, %v759
        %v968 = vcombine.high %v753, %v759
        %v970 = vunpack.c.l.s4 1983009808
        %v971 = vunpack.c.0.s8 %v970
        %v972 = vlaneseq
        %v973 = vshrl.u32 %v972, 7
        %v974 = vsub.s32 %v971, %v973
        %v975 = vrot.slane %v967, %v974
        %v977 = vunpack.c.l.s4 1983009808
        %v978 = vunpack.c.0.s8 %v977
        %v979 = vlaneseq
        %v980 = vshrl.u32 %v979, 7
        %v981 = vsub.s32 %v978, %v980
        %v982 = vrot.slane %v968, %v981
        %v983 = vcombine.low %v927, %v943
        %v984 = vcombine.high %v927, %v943
        %v986 = vunpack.c.l.s4 1934713408
        %v987 = vunpack.c.0.s8 %v986
        %v988 = vlaneseq
        %v989 = vshrl.u32 %v988, 7
        %v990 = vsub.s32 %v987, %v989
        %v991 = vrot.slane %v983, %v990
        %v993 = vunpack.c.l.s4 1934713408
        %v994 = vunpack.c.0.s8 %v993
        %v995 = vlaneseq
        %v996 = vshrl.u32 %v995, 7
        %v997 = vsub.s32 %v994, %v996
        %v998 = vrot.slane %v984, %v997
        %v999 = vcombine.low %v934, %v950
        %v1000 = vcombine.high %v934, %v950
        %v1002 = vunpack.c.l.s4 1934713408
        %v1003 = vunpack.c.0.s8 %v1002
        %v1004 = vlaneseq
        %v1005 = vshrl.u32 %v1004, 7
        %v1006 = vsub.s32 %v1003, %v1005
        %v1007 = vrot.slane %v999, %v1006
        %v1009 = vunpack.c.l.s4 1934713408
        %v1010 = vunpack.c.0.s8 %v1009
        %v1011 = vlaneseq
        %v1012 = vshrl.u32 %v1011, 7
        %v1013 = vsub.s32 %v1010, %v1012
        %v1014 = vrot.slane %v1000, %v1013
        %v1015 = vcombine.low %v959, %v975
        %v1016 = vcombine.high %v959, %v975
        %v1018 = vunpack.c.l.s4 1934713408
        %v1019 = vunpack.c.0.s8 %v1018
        %v1020 = vlaneseq
        %v1021 = vshrl.u32 %v1020, 7
        %v1022 = vsub.s32 %v1019, %v1021
        %v1023 = vrot.slane %v1015, %v1022
        %v1025 = vunpack.c.l.s4 1934713408
        %v1026 = vunpack.c.0.s8 %v1025
        %v1027 = vlaneseq
        %v1028 = vshrl.u32 %v1027, 7
        %v1029 = vsub.s32 %v1026, %v1028
        %v1030 = vrot.slane %v1016, %v1029
        %v1031 = vcombine.low %v966, %v982
        %v1032 = vcombine.high %v966, %v982
        %v1034 = vunpack.c.l.s4 1934713408
        %v1035 = vunpack.c.0.s8 %v1034
        %v1036 = vlaneseq
        %v1037 = vshrl.u32 %v1036, 7
        %v1038 = vsub.s32 %v1035, %v1037
        %v1039 = vrot.slane %v1031, %v1038
        %v1041 = vunpack.c.l.s4 1934713408
        %v1042 = vunpack.c.0.s8 %v1041
        %v1043 = vlaneseq
        %v1044 = vshrl.u32 %v1043, 7
        %v1045 = vsub.s32 %v1042, %v1044
        %v1046 = vrot.slane %v1032, %v1045
        %v1047 = vcombine.low %v991, %v1023
        %v1048 = vcombine.high %v991, %v1023
        %v1049 = vcombine.low %v998, %v1030
        %v1050 = vcombine.high %v998, %v1030
        %v1051 = vcombine.low %v1007, %v1039
        %v1052 = vcombine.high %v1007, %v1039
        %v1053 = vcombine.low %v1014, %v1046
        %v1054 = vcombine.high %v1014, %v1046
        %v1055 = vcombine.low %v713, %v766
        %v1056 = vcombine.high %v713, %v766
        %v1058 = vunpack.c.l.s4 1983009808
        %v1059 = vunpack.c.0.s8 %v1058
        %v1060 = vlaneseq
        %v1061 = vshrl.u32 %v1060, 7
        %v1062 = vsub.s32 %v1059, %v1061
        %v1063 = vrot.slane %v1055, %v1062
        %v1065 = vunpack.c.l.s4 1983009808
        %v1066 = vunpack.c.0.s8 %v1065
        %v1067 = vlaneseq
        %v1068 = vshrl.u32 %v1067, 7
        %v1069 = vsub.s32 %v1066, %v1068
        %v1070 = vrot.slane %v1056, %v1069
        %v1071 = vcombine.low %v763, %v769
        %v1072 = vcombine.high %v763, %v769
        %v1074 = vunpack.c.l.s4 1983009808
        %v1075 = vunpack.c.0.s8 %v1074
        %v1076 = vlaneseq
        %v1077 = vshrl.u32 %v1076, 7
        %v1078 = vsub.s32 %v1075, %v1077
        %v1079 = vrot.slane %v1071, %v1078
        %v1081 = vunpack.c.l.s4 1983009808
        %v1082 = vunpack.c.0.s8 %v1081
        %v1083 = vlaneseq
        %v1084 = vshrl.u32 %v1083, 7
        %v1085 = vsub.s32 %v1082, %v1084
        %v1086 = vrot.slane %v1072, %v1085
        %v1087 = vcombine.low %v772, %v778
        %v1088 = vcombine.high %v772, %v778
        %v1090 = vunpack.c.l.s4 1983009808
        %v1091 = vunpack.c.0.s8 %v1090
        %v1092 = vlaneseq
        %v1093 = vshrl.u32 %v1092, 7
        %v1094 = vsub.s32 %v1091, %v1093
        %v1095 = vrot.slane %v1087, %v1094
        %v1097 = vunpack.c.l.s4 1983009808
        %v1098 = vunpack.c.0.s8 %v1097
        %v1099 = vlaneseq
        %v1100 = vshrl.u32 %v1099, 7
        %v1101 = vsub.s32 %v1098, %v1100
        %v1102 = vrot.slane %v1088, %v1101
        %v1103 = vcombine.low %v775, %v781
        %v1104 = vcombine.high %v775, %v781
        %v1106 = vunpack.c.l.s4 1983009808
        %v1107 = vunpack.c.0.s8 %v1106
        %v1108 = vlaneseq
        %v1109 = vshrl.u32 %v1108, 7
        %v1110 = vsub.s32 %v1107, %v1109
        %v1111 = vrot.slane %v1103, %v1110
        %v1113 = vunpack.c.l.s4 1983009808
        %v1114 = vunpack.c.0.s8 %v1113
        %v1115 = vlaneseq
        %v1116 = vshrl.u32 %v1115, 7
        %v1117 = vsub.s32 %v1114, %v1116
        %v1118 = vrot.slane %v1104, %v1117
        %v1119 = vcombine.low %v1063, %v1079
        %v1120 = vcombine.high %v1063, %v1079
        %v1122 = vunpack.c.l.s4 1934713408
        %v1123 = vunpack.c.0.s8 %v1122
        %v1124 = vlaneseq
        %v1125 = vshrl.u32 %v1124, 7
        %v1126 = vsub.s32 %v1123, %v1125
        %v1127 = vrot.slane %v1119, %v1126
        %v1129 = vunpack.c.l.s4 1934713408
        %v1130 = vunpack.c.0.s8 %v1129
        %v1131 = vlaneseq
        %v1132 = vshrl.u32 %v1131, 7
        %v1133 = vsub.s32 %v1130, %v1132
        %v1134 = vrot.slane %v1120, %v1133
        %v1135 = vcombine.low %v1070, %v1086
        %v1136 = vcombine.high %v1070, %v1086
        %v1138 = vunpack.c.l.s4 1934713408
        %v1139 = vunpack.c.0.s8 %v1138
        %v1140 = vlaneseq
        %v1141 = vshrl.u32 %v1140, 7
        %v1142 = vsub.s32 %v1139, %v1141
        %v1143 = vrot.slane %v1135, %v1142
        %v1145 = vunpack.c.l.s4 1934713408
        %v1146 = vunpack.c.0.s8 %v1145
        %v1147 = vlaneseq
        %v1148 = vshrl.u32 %v1147, 7
        %v1149 = vsub.s32 %v1146, %v1148
        %v1150 = vrot.slane %v1136, %v1149
        %v1151 = vcombine.low %v1095, %v1111
        %v1152 = vcombine.high %v1095, %v1111
        %v1154 = vunpack.c.l.s4 1934713408
        %v1155 = vunpack.c.0.s8 %v1154
        %v1156 = vlaneseq
        %v1157 = vshrl.u32 %v1156, 7
        %v1158 = vsub.s32 %v1155, %v1157
        %v1159 = vrot.slane %v1151, %v1158
        %v1161 = vunpack.c.l.s4 1934713408
        %v1162 = vunpack.c.0.s8 %v1161
        %v1163 = vlaneseq
        %v1164 = vshrl.u32 %v1163, 7
        %v1165 = vsub.s32 %v1162, %v1164
        %v1166 = vrot.slane %v1152, %v1165
        %v1167 = vcombine.low %v1102, %v1118
        %v1168 = vcombine.high %v1102, %v1118
        %v1170 = vunpack.c.l.s4 1934713408
        %v1171 = vunpack.c.0.s8 %v1170
        %v1172 = vlaneseq
        %v1173 = vshrl.u32 %v1172, 7
        %v1174 = vsub.s32 %v1171, %v1173
        %v1175 = vrot.slane %v1167, %v1174
        %v1177 = vunpack.c.l.s4 1934713408
        %v1178 = vunpack.c.0.s8 %v1177
        %v1179 = vlaneseq
        %v1180 = vshrl.u32 %v1179, 7
        %v1181 = vsub.s32 %v1178, %v1180
        %v1182 = vrot.slane %v1168, %v1181
        %v1183 = vcombine.low %v1127, %v1159
        %v1184 = vcombine.high %v1127, %v1159
        %v1185 = vcombine.low %v1134, %v1166
        %v1186 = vcombine.high %v1134, %v1166
        %v1187 = vcombine.low %v1143, %v1175
        %v1188 = vcombine.high %v1143, %v1175
        %v1189 = vcombine.low %v1150, %v1182
        %v1190 = vcombine.high %v1150, %v1182
        %vm1191 = vcmask 64512
        %v1193 = vsel %vm1191, %v1183, 0
        %v1196 = vsel %vm1191, %v911, 0
        %1198 = vmatprep.subr.mxu0 0.0
        %1199 = vmatpush1.xpose.msra.mxu0 %v1196
        %1200 = vmatprep.subr.mxu0 0.0
        %1201 = vmatpush1.xpose.msra.mxu0 0.0
        %1202 = vmatprep.subr.mxu0 0.0
        %1203 = vmatpush1.xpose.msra.mxu0 0.0
        %1204 = vmatprep.subr.mxu0 0.0
        %1205 = vmatpush1.xpose.msra.mxu0 0.0
        %1206 = vmatprep.subr.mxu0 0.0
        %1207 = vmatpush1.xpose.msra.mxu0 0.0
        %1208 = vmatprep.subr.mxu0 0.0
        %1209 = vmatpush1.xpose.msra.mxu0 0.0
        %1210 = vmatprep.subr.mxu0 0.0
        %1211 = vmatpush1.xpose.msra.mxu0 0.0
        %1212 = vmatprep.subr.mxu0 0.0
        %1213 = vmatpush1.xpose.msra.mxu0 0.0
        %1214 = vmatprep.subr.mxu0 0.0
        %1215 = vmatpush1.xpose.msra.mxu0 0.0
        %1216 = vmatprep.subr.mxu0 0.0
        %1217 = vmatpush1.xpose.msra.mxu0 0.0
        %1218 = vmatprep.subr.mxu0 0.0
        %1219 = vmatpush1.xpose.msra.mxu0 0.0
        %1220 = vmatprep.subr.mxu0 0.0
        %1221 = vmatpush1.xpose.msra.mxu0 0.0
        %1222 = vmatprep.subr.mxu0 0.0
        %1223 = vmatpush1.xpose.msra.mxu0 0.0
        %1224 = vmatprep.subr.mxu0 0.0
        %1225 = vmatpush1.xpose.msra.mxu0 0.0
        %1226 = vmatprep.subr.mxu0 0.0
        %1227 = vmatpush1.xpose.msra.mxu0 0.0
        %1228 = vmatprep.subr.mxu0 0.0
        %1229 = vmatpush1.xpose.msra.mxu0 0.0
        %1230 = vmatprep.subr.mxu0 0.0
        %1231 = vmatpush1.xpose.msra.mxu0 0.0
        %1232 = vmatprep.subr.mxu0 0.0
        %1233 = vmatpush1.xpose.msra.mxu0 0.0
        %1234 = vmatprep.subr.mxu0 0.0
        %1235 = vmatpush1.xpose.msra.mxu0 0.0
        %1236 = vmatprep.subr.mxu0 0.0
        %1237 = vmatpush1.xpose.msra.mxu0 0.0
        %1238 = vmatprep.subr.mxu0 0.0
        %1239 = vmatpush1.xpose.msra.mxu0 0.0
        %1240 = vmatprep.subr.mxu0 0.0
        %1241 = vmatpush1.xpose.msra.mxu0 0.0
        %1242 = vmatprep.subr.mxu0 0.0
        %1243 = vmatpush1.xpose.msra.mxu0 0.0
        %1244 = vmatprep.subr.mxu0 0.0
        %1245 = vmatpush1.xpose.msra.mxu0 0.0
        %1246 = vmatprep.subr.mxu0 0.0
        %1247 = vmatpush1.xpose.msra.mxu0 0.0
        %1248 = vmatprep.subr.mxu0 0.0
        %1249 = vmatpush1.xpose.msra.mxu0 0.0
        %1250 = vmatprep.subr.mxu0 0.0
        %1251 = vmatpush1.xpose.msra.mxu0 0.0
        %1252 = vmatprep.subr.mxu0 0.0
        %1253 = vmatpush1.xpose.msra.mxu0 0.0
        %1254 = vmatprep.subr.mxu0 0.0
        %1255 = vmatpush1.xpose.msra.mxu0 0.0
        %1256 = vmatprep.subr.mxu0 0.0
        %1257 = vmatpush1.xpose.msra.mxu0 0.0
        %1258 = vmatprep.subr.mxu0 0.0
        %1259 = vmatpush1.xpose.msra.mxu0 0.0
        %1260 = vmatprep.subr.mxu0 0.0
        %1261 = vmatpush1.xpose.msra.mxu0 0.0
        %1262 = vmatprep.mubr.f32.mxu0 0.0
        %1263 = vmatmul.mubr.f32.gmra.mrb[0].mxu0 %v1193
        %v1264 = vpop.f32.mrb[0].mxu0
        %v1265 = vadd.f32 0.0, %v1264
        %v1266 = vpop.f32.mrb[0].mxu0
        %1267 = vdwg.mxu0
        %v1269 = vsel %vm1191, %v1184, 0
        %v1272 = vsel %vm1191, %v912, 0
        %1274 = vmatprep.subr.mxu0 0.0
        %1275 = vmatpush1.xpose.msra.mxu0 %v1272
        %1276 = vmatprep.subr.mxu0 0.0
        %1277 = vmatpush1.xpose.msra.mxu0 0.0
        %1278 = vmatprep.subr.mxu0 0.0
        %1279 = vmatpush1.xpose.msra.mxu0 0.0
        %1280 = vmatprep.subr.mxu0 0.0
        %1281 = vmatpush1.xpose.msra.mxu0 0.0
        %1282 = vmatprep.subr.mxu0 0.0
        %1283 = vmatpush1.xpose.msra.mxu0 0.0
        %1284 = vmatprep.subr.mxu0 0.0
        %1285 = vmatpush1.xpose.msra.mxu0 0.0
        %1286 = vmatprep.subr.mxu0 0.0
        %1287 = vmatpush1.xpose.msra.mxu0 0.0
        %1288 = vmatprep.subr.mxu0 0.0
        %1289 = vmatpush1.xpose.msra.mxu0 0.0
        %1290 = vmatprep.subr.mxu0 0.0
        %1291 = vmatpush1.xpose.msra.mxu0 0.0
        %1292 = vmatprep.subr.mxu0 0.0
        %1293 = vmatpush1.xpose.msra.mxu0 0.0
        %1294 = vmatprep.subr.mxu0 0.0
        %1295 = vmatpush1.xpose.msra.mxu0 0.0
        %1296 = vmatprep.subr.mxu0 0.0
        %1297 = vmatpush1.xpose.msra.mxu0 0.0
        %1298 = vmatprep.subr.mxu0 0.0
        %1299 = vmatpush1.xpose.msra.mxu0 0.0
        %1300 = vmatprep.subr.mxu0 0.0
        %1301 = vmatpush1.xpose.msra.mxu0 0.0
        %1302 = vmatprep.subr.mxu0 0.0
        %1303 = vmatpush1.xpose.msra.mxu0 0.0
        %1304 = vmatprep.subr.mxu0 0.0
        %1305 = vmatpush1.xpose.msra.mxu0 0.0
        %1306 = vmatprep.subr.mxu0 0.0
        %1307 = vmatpush1.xpose.msra.mxu0 0.0
        %1308 = vmatprep.subr.mxu0 0.0
        %1309 = vmatpush1.xpose.msra.mxu0 0.0
        %1310 = vmatprep.subr.mxu0 0.0
        %1311 = vmatpush1.xpose.msra.mxu0 0.0
        %1312 = vmatprep.subr.mxu0 0.0
        %1313 = vmatpush1.xpose.msra.mxu0 0.0
        %1314 = vmatprep.subr.mxu0 0.0
        %1315 = vmatpush1.xpose.msra.mxu0 0.0
        %1316 = vmatprep.subr.mxu0 0.0
        %1317 = vmatpush1.xpose.msra.mxu0 0.0
        %1318 = vmatprep.subr.mxu0 0.0
        %1319 = vmatpush1.xpose.msra.mxu0 0.0
        %1320 = vmatprep.subr.mxu0 0.0
        %1321 = vmatpush1.xpose.msra.mxu0 0.0
        %1322 = vmatprep.subr.mxu0 0.0
        %1323 = vmatpush1.xpose.msra.mxu0 0.0
        %1324 = vmatprep.subr.mxu0 0.0
        %1325 = vmatpush1.xpose.msra.mxu0 0.0
        %1326 = vmatprep.subr.mxu0 0.0
        %1327 = vmatpush1.xpose.msra.mxu0 0.0
        %1328 = vmatprep.subr.mxu0 0.0
        %1329 = vmatpush1.xpose.msra.mxu0 0.0
        %1330 = vmatprep.subr.mxu0 0.0
        %1331 = vmatpush1.xpose.msra.mxu0 0.0
        %1332 = vmatprep.subr.mxu0 0.0
        %1333 = vmatpush1.xpose.msra.mxu0 0.0
        %1334 = vmatprep.subr.mxu0 0.0
        %1335 = vmatpush1.xpose.msra.mxu0 0.0
        %1336 = vmatprep.subr.mxu0 0.0
        %1337 = vmatpush1.xpose.msra.mxu0 0.0
        %1338 = vmatprep.mubr.f32.mxu0 0.0
        %1339 = vmatmul.mubr.f32.gmra.mrb[0].mxu0 %v1269
        %v1340 = vpop.f32.mrb[0].mxu0
        %v1341 = vadd.f32 0.0, %v1340
        %v1342 = vpop.f32.mrb[0].mxu0
        %1343 = vdwg.mxu0
        %v1345 = vsel %vm1191, %v1185, 0
        %v1348 = vsel %vm1191, %v913, 0
        %1350 = vmatprep.subr.mxu0 0.0
        %1351 = vmatpush1.xpose.msra.mxu0 %v1348
        %1352 = vmatprep.subr.mxu0 0.0
        %1353 = vmatpush1.xpose.msra.mxu0 0.0
        %1354 = vmatprep.subr.mxu0 0.0
        %1355 = vmatpush1.xpose.msra.mxu0 0.0
        %1356 = vmatprep.subr.mxu0 0.0
        %1357 = vmatpush1.xpose.msra.mxu0 0.0
        %1358 = vmatprep.subr.mxu0 0.0
        %1359 = vmatpush1.xpose.msra.mxu0 0.0
        %1360 = vmatprep.subr.mxu0 0.0
        %1361 = vmatpush1.xpose.msra.mxu0 0.0
        %1362 = vmatprep.subr.mxu0 0.0
        %1363 = vmatpush1.xpose.msra.mxu0 0.0
        %1364 = vmatprep.subr.mxu0 0.0
        %1365 = vmatpush1.xpose.msra.mxu0 0.0
        %1366 = vmatprep.subr.mxu0 0.0
        %1367 = vmatpush1.xpose.msra.mxu0 0.0
        %1368 = vmatprep.subr.mxu0 0.0
        %1369 = vmatpush1.xpose.msra.mxu0 0.0
        %1370 = vmatprep.subr.mxu0 0.0
        %1371 = vmatpush1.xpose.msra.mxu0 0.0
        %1372 = vmatprep.subr.mxu0 0.0
        %1373 = vmatpush1.xpose.msra.mxu0 0.0
        %1374 = vmatprep.subr.mxu0 0.0
        %1375 = vmatpush1.xpose.msra.mxu0 0.0
        %1376 = vmatprep.subr.mxu0 0.0
        %1377 = vmatpush1.xpose.msra.mxu0 0.0
        %1378 = vmatprep.subr.mxu0 0.0
        %1379 = vmatpush1.xpose.msra.mxu0 0.0
        %1380 = vmatprep.subr.mxu0 0.0
        %1381 = vmatpush1.xpose.msra.mxu0 0.0
        %1382 = vmatprep.subr.mxu0 0.0
        %1383 = vmatpush1.xpose.msra.mxu0 0.0
        %1384 = vmatprep.subr.mxu0 0.0
        %1385 = vmatpush1.xpose.msra.mxu0 0.0
        %1386 = vmatprep.subr.mxu0 0.0
        %1387 = vmatpush1.xpose.msra.mxu0 0.0
        %1388 = vmatprep.subr.mxu0 0.0
        %1389 = vmatpush1.xpose.msra.mxu0 0.0
        %1390 = vmatprep.subr.mxu0 0.0
        %1391 = vmatpush1.xpose.msra.mxu0 0.0
        %1392 = vmatprep.subr.mxu0 0.0
        %1393 = vmatpush1.xpose.msra.mxu0 0.0
        %1394 = vmatprep.subr.mxu0 0.0
        %1395 = vmatpush1.xpose.msra.mxu0 0.0
        %1396 = vmatprep.subr.mxu0 0.0
        %1397 = vmatpush1.xpose.msra.mxu0 0.0
        %1398 = vmatprep.subr.mxu0 0.0
        %1399 = vmatpush1.xpose.msra.mxu0 0.0
        %1400 = vmatprep.subr.mxu0 0.0
        %1401 = vmatpush1.xpose.msra.mxu0 0.0
        %1402 = vmatprep.subr.mxu0 0.0
        %1403 = vmatpush1.xpose.msra.mxu0 0.0
        %1404 = vmatprep.subr.mxu0 0.0
        %1405 = vmatpush1.xpose.msra.mxu0 0.0
        %1406 = vmatprep.subr.mxu0 0.0
        %1407 = vmatpush1.xpose.msra.mxu0 0.0
        %1408 = vmatprep.subr.mxu0 0.0
        %1409 = vmatpush1.xpose.msra.mxu0 0.0
        %1410 = vmatprep.subr.mxu0 0.0
        %1411 = vmatpush1.xpose.msra.mxu0 0.0
        %1412 = vmatprep.subr.mxu0 0.0
        %1413 = vmatpush1.xpose.msra.mxu0 0.0
        %1414 = vmatprep.mubr.f32.mxu0 0.0
        %1415 = vmatmul.mubr.f32.gmra.mrb[0].mxu0 %v1345
        %v1416 = vpop.f32.mrb[0].mxu0
        %v1417 = vadd.f32 0.0, %v1416
        %v1418 = vpop.f32.mrb[0].mxu0
        %1419 = vdwg.mxu0
        %v1421 = vsel %vm1191, %v1186, 0
        %v1424 = vsel %vm1191, %v914, 0
        %1426 = vmatprep.subr.mxu0 0.0
        %1427 = vmatpush1.xpose.msra.mxu0 %v1424
        %1428 = vmatprep.subr.mxu0 0.0
        %1429 = vmatpush1.xpose.msra.mxu0 0.0
        %1430 = vmatprep.subr.mxu0 0.0
        %1431 = vmatpush1.xpose.msra.mxu0 0.0
        %1432 = vmatprep.subr.mxu0 0.0
        %1433 = vmatpush1.xpose.msra.mxu0 0.0
        %1434 = vmatprep.subr.mxu0 0.0
        %1435 = vmatpush1.xpose.msra.mxu0 0.0
        %1436 = vmatprep.subr.mxu0 0.0
        %1437 = vmatpush1.xpose.msra.mxu0 0.0
        %1438 = vmatprep.subr.mxu0 0.0
        %1439 = vmatpush1.xpose.msra.mxu0 0.0
        %1440 = vmatprep.subr.mxu0 0.0
        %1441 = vmatpush1.xpose.msra.mxu0 0.0
        %1442 = vmatprep.subr.mxu0 0.0
        %1443 = vmatpush1.xpose.msra.mxu0 0.0
        %1444 = vmatprep.subr.mxu0 0.0
        %1445 = vmatpush1.xpose.msra.mxu0 0.0
        %1446 = vmatprep.subr.mxu0 0.0
        %1447 = vmatpush1.xpose.msra.mxu0 0.0
        %1448 = vmatprep.subr.mxu0 0.0
        %1449 = vmatpush1.xpose.msra.mxu0 0.0
        %1450 = vmatprep.subr.mxu0 0.0
        %1451 = vmatpush1.xpose.msra.mxu0 0.0
        %1452 = vmatprep.subr.mxu0 0.0
        %1453 = vmatpush1.xpose.msra.mxu0 0.0
        %1454 = vmatprep.subr.mxu0 0.0
        %1455 = vmatpush1.xpose.msra.mxu0 0.0
        %1456 = vmatprep.subr.mxu0 0.0
        %1457 = vmatpush1.xpose.msra.mxu0 0.0
        %1458 = vmatprep.subr.mxu0 0.0
        %1459 = vmatpush1.xpose.msra.mxu0 0.0
        %1460 = vmatprep.subr.mxu0 0.0
        %1461 = vmatpush1.xpose.msra.mxu0 0.0
        %1462 = vmatprep.subr.mxu0 0.0
        %1463 = vmatpush1.xpose.msra.mxu0 0.0
        %1464 = vmatprep.subr.mxu0 0.0
        %1465 = vmatpush1.xpose.msra.mxu0 0.0
        %1466 = vmatprep.subr.mxu0 0.0
        %1467 = vmatpush1.xpose.msra.mxu0 0.0
        %1468 = vmatprep.subr.mxu0 0.0
        %1469 = vmatpush1.xpose.msra.mxu0 0.0
        %1470 = vmatprep.subr.mxu0 0.0
        %1471 = vmatpush1.xpose.msra.mxu0 0.0
        %1472 = vmatprep.subr.mxu0 0.0
        %1473 = vmatpush1.xpose.msra.mxu0 0.0
        %1474 = vmatprep.subr.mxu0 0.0
        %1475 = vmatpush1.xpose.msra.mxu0 0.0
        %1476 = vmatprep.subr.mxu0 0.0
        %1477 = vmatpush1.xpose.msra.mxu0 0.0
        %1478 = vmatprep.subr.mxu0 0.0
        %1479 = vmatpush1.xpose.msra.mxu0 0.0
        %1480 = vmatprep.subr.mxu0 0.0
        %1481 = vmatpush1.xpose.msra.mxu0 0.0
        %1482 = vmatprep.subr.mxu0 0.0
        %1483 = vmatpush1.xpose.msra.mxu0 0.0
        %1484 = vmatprep.subr.mxu0 0.0
        %1485 = vmatpush1.xpose.msra.mxu0 0.0
        %1486 = vmatprep.subr.mxu0 0.0
        %1487 = vmatpush1.xpose.msra.mxu0 0.0
        %1488 = vmatprep.subr.mxu0 0.0
        %1489 = vmatpush1.xpose.msra.mxu0 0.0
        %1490 = vmatprep.mubr.f32.mxu0 0.0
        %1491 = vmatmul.mubr.f32.gmra.mrb[0].mxu0 %v1421
        %v1492 = vpop.f32.mrb[0].mxu0
        %v1493 = vadd.f32 0.0, %v1492
        %v1494 = vpop.f32.mrb[0].mxu0
        %1495 = vdwg.mxu0
        %v1497 = vsel %vm1191, %v1187, 0
        %v1500 = vsel %vm1191, %v915, 0
        %1502 = vmatprep.subr.mxu0 0.0
        %1503 = vmatpush1.xpose.msra.mxu0 %v1500
        %1504 = vmatprep.subr.mxu0 0.0
        %1505 = vmatpush1.xpose.msra.mxu0 0.0
        %1506 = vmatprep.subr.mxu0 0.0
        %1507 = vmatpush1.xpose.msra.mxu0 0.0
        %1508 = vmatprep.subr.mxu0 0.0
        %1509 = vmatpush1.xpose.msra.mxu0 0.0
        %1510 = vmatprep.subr.mxu0 0.0
        %1511 = vmatpush1.xpose.msra.mxu0 0.0
        %1512 = vmatprep.subr.mxu0 0.0
        %1513 = vmatpush1.xpose.msra.mxu0 0.0
        %1514 = vmatprep.subr.mxu0 0.0
        %1515 = vmatpush1.xpose.msra.mxu0 0.0
        %1516 = vmatprep.subr.mxu0 0.0
        %1517 = vmatpush1.xpose.msra.mxu0 0.0
        %1518 = vmatprep.subr.mxu0 0.0
        %1519 = vmatpush1.xpose.msra.mxu0 0.0
        %1520 = vmatprep.subr.mxu0 0.0
        %1521 = vmatpush1.xpose.msra.mxu0 0.0
        %1522 = vmatprep.subr.mxu0 0.0
        %1523 = vmatpush1.xpose.msra.mxu0 0.0
        %1524 = vmatprep.subr.mxu0 0.0
        %1525 = vmatpush1.xpose.msra.mxu0 0.0
        %1526 = vmatprep.subr.mxu0 0.0
        %1527 = vmatpush1.xpose.msra.mxu0 0.0
        %1528 = vmatprep.subr.mxu0 0.0
        %1529 = vmatpush1.xpose.msra.mxu0 0.0
        %1530 = vmatprep.subr.mxu0 0.0
        %1531 = vmatpush1.xpose.msra.mxu0 0.0
        %1532 = vmatprep.subr.mxu0 0.0
        %1533 = vmatpush1.xpose.msra.mxu0 0.0
        %1534 = vmatprep.subr.mxu0 0.0
        %1535 = vmatpush1.xpose.msra.mxu0 0.0
        %1536 = vmatprep.subr.mxu0 0.0
        %1537 = vmatpush1.xpose.msra.mxu0 0.0
        %1538 = vmatprep.subr.mxu0 0.0
        %1539 = vmatpush1.xpose.msra.mxu0 0.0
        %1540 = vmatprep.subr.mxu0 0.0
        %1541 = vmatpush1.xpose.msra.mxu0 0.0
        %1542 = vmatprep.subr.mxu0 0.0
        %1543 = vmatpush1.xpose.msra.mxu0 0.0
        %1544 = vmatprep.subr.mxu0 0.0
        %1545 = vmatpush1.xpose.msra.mxu0 0.0
        %1546 = vmatprep.subr.mxu0 0.0
        %1547 = vmatpush1.xpose.msra.mxu0 0.0
        %1548 = vmatprep.subr.mxu0 0.0
        %1549 = vmatpush1.xpose.msra.mxu0 0.0
        %1550 = vmatprep.subr.mxu0 0.0
        %1551 = vmatpush1.xpose.msra.mxu0 0.0
        %1552 = vmatprep.subr.mxu0 0.0
        %1553 = vmatpush1.xpose.msra.mxu0 0.0
        %1554 = vmatprep.subr.mxu0 0.0
        %1555 = vmatpush1.xpose.msra.mxu0 0.0
        %1556 = vmatprep.subr.mxu0 0.0
        %1557 = vmatpush1.xpose.msra.mxu0 0.0
        %1558 = vmatprep.subr.mxu0 0.0
        %1559 = vmatpush1.xpose.msra.mxu0 0.0
        %1560 = vmatprep.subr.mxu0 0.0
        %1561 = vmatpush1.xpose.msra.mxu0 0.0
        %1562 = vmatprep.subr.mxu0 0.0
        %1563 = vmatpush1.xpose.msra.mxu0 0.0
        %1564 = vmatprep.subr.mxu0 0.0
        %1565 = vmatpush1.xpose.msra.mxu0 0.0
        %1566 = vmatprep.mubr.f32.mxu0 0.0
        %1567 = vmatmul.mubr.f32.gmra.mrb[0].mxu0 %v1497
        %v1568 = vpop.f32.mrb[0].mxu0
        %v1569 = vadd.f32 0.0, %v1568
        %v1570 = vpop.f32.mrb[0].mxu0
        %1571 = vdwg.mxu0
        %v1573 = vsel %vm1191, %v1188, 0
        %v1576 = vsel %vm1191, %v916, 0
        %1578 = vmatprep.subr.mxu0 0.0
        %1579 = vmatpush1.xpose.msra.mxu0 %v1576
        %1580 = vmatprep.subr.mxu0 0.0
        %1581 = vmatpush1.xpose.msra.mxu0 0.0
        %1582 = vmatprep.subr.mxu0 0.0
        %1583 = vmatpush1.xpose.msra.mxu0 0.0
        %1584 = vmatprep.subr.mxu0 0.0
        %1585 = vmatpush1.xpose.msra.mxu0 0.0
        %1586 = vmatprep.subr.mxu0 0.0
        %1587 = vmatpush1.xpose.msra.mxu0 0.0
        %1588 = vmatprep.subr.mxu0 0.0
        %1589 = vmatpush1.xpose.msra.mxu0 0.0
        %1590 = vmatprep.subr.mxu0 0.0
        %1591 = vmatpush1.xpose.msra.mxu0 0.0
        %1592 = vmatprep.subr.mxu0 0.0
        %1593 = vmatpush1.xpose.msra.mxu0 0.0
        %1594 = vmatprep.subr.mxu0 0.0
        %1595 = vmatpush1.xpose.msra.mxu0 0.0
        %1596 = vmatprep.subr.mxu0 0.0
        %1597 = vmatpush1.xpose.msra.mxu0 0.0
        %1598 = vmatprep.subr.mxu0 0.0
        %1599 = vmatpush1.xpose.msra.mxu0 0.0
        %1600 = vmatprep.subr.mxu0 0.0
        %1601 = vmatpush1.xpose.msra.mxu0 0.0
        %1602 = vmatprep.subr.mxu0 0.0
        %1603 = vmatpush1.xpose.msra.mxu0 0.0
        %1604 = vmatprep.subr.mxu0 0.0
        %1605 = vmatpush1.xpose.msra.mxu0 0.0
        %1606 = vmatprep.subr.mxu0 0.0
        %1607 = vmatpush1.xpose.msra.mxu0 0.0
        %1608 = vmatprep.subr.mxu0 0.0
        %1609 = vmatpush1.xpose.msra.mxu0 0.0
        %1610 = vmatprep.subr.mxu0 0.0
        %1611 = vmatpush1.xpose.msra.mxu0 0.0
        %1612 = vmatprep.subr.mxu0 0.0
        %1613 = vmatpush1.xpose.msra.mxu0 0.0
        %1614 = vmatprep.subr.mxu0 0.0
        %1615 = vmatpush1.xpose.msra.mxu0 0.0
        %1616 = vmatprep.subr.mxu0 0.0
        %1617 = vmatpush1.xpose.msra.mxu0 0.0
        %1618 = vmatprep.subr.mxu0 0.0
        %1619 = vmatpush1.xpose.msra.mxu0 0.0
        %1620 = vmatprep.subr.mxu0 0.0
        %1621 = vmatpush1.xpose.msra.mxu0 0.0
        %1622 = vmatprep.subr.mxu0 0.0
        %1623 = vmatpush1.xpose.msra.mxu0 0.0
        %1624 = vmatprep.subr.mxu0 0.0
        %1625 = vmatpush1.xpose.msra.mxu0 0.0
        %1626 = vmatprep.subr.mxu0 0.0
        %1627 = vmatpush1.xpose.msra.mxu0 0.0
        %1628 = vmatprep.subr.mxu0 0.0
        %1629 = vmatpush1.xpose.msra.mxu0 0.0
        %1630 = vmatprep.subr.mxu0 0.0
        %1631 = vmatpush1.xpose.msra.mxu0 0.0
        %1632 = vmatprep.subr.mxu0 0.0
        %1633 = vmatpush1.xpose.msra.mxu0 0.0
        %1634 = vmatprep.subr.mxu0 0.0
        %1635 = vmatpush1.xpose.msra.mxu0 0.0
        %1636 = vmatprep.subr.mxu0 0.0
        %1637 = vmatpush1.xpose.msra.mxu0 0.0
        %1638 = vmatprep.subr.mxu0 0.0
        %1639 = vmatpush1.xpose.msra.mxu0 0.0
        %1640 = vmatprep.subr.mxu0 0.0
        %1641 = vmatpush1.xpose.msra.mxu0 0.0
        %1642 = vmatprep.mubr.f32.mxu0 0.0
        %1643 = vmatmul.mubr.f32.gmra.mrb[0].mxu0 %v1573
        %v1644 = vpop.f32.mrb[0].mxu0
        %v1645 = vadd.f32 0.0, %v1644
        %v1646 = vpop.f32.mrb[0].mxu0
        %1647 = vdwg.mxu0
        %v1649 = vsel %vm1191, %v1189, 0
        %v1652 = vsel %vm1191, %v917, 0
        %1654 = vmatprep.subr.mxu0 0.0
        %1655 = vmatpush1.xpose.msra.mxu0 %v1652
        %1656 = vmatprep.subr.mxu0 0.0
        %1657 = vmatpush1.xpose.msra.mxu0 0.0
        %1658 = vmatprep.subr.mxu0 0.0
        %1659 = vmatpush1.xpose.msra.mxu0 0.0
        %1660 = vmatprep.subr.mxu0 0.0
        %1661 = vmatpush1.xpose.msra.mxu0 0.0
        %1662 = vmatprep.subr.mxu0 0.0
        %1663 = vmatpush1.xpose.msra.mxu0 0.0
        %1664 = vmatprep.subr.mxu0 0.0
        %1665 = vmatpush1.xpose.msra.mxu0 0.0
        %1666 = vmatprep.subr.mxu0 0.0
        %1667 = vmatpush1.xpose.msra.mxu0 0.0
        %1668 = vmatprep.subr.mxu0 0.0
        %1669 = vmatpush1.xpose.msra.mxu0 0.0
        %1670 = vmatprep.subr.mxu0 0.0
        %1671 = vmatpush1.xpose.msra.mxu0 0.0
        %1672 = vmatprep.subr.mxu0 0.0
        %1673 = vmatpush1.xpose.msra.mxu0 0.0
        %1674 = vmatprep.subr.mxu0 0.0
        %1675 = vmatpush1.xpose.msra.mxu0 0.0
        %1676 = vmatprep.subr.mxu0 0.0
        %1677 = vmatpush1.xpose.msra.mxu0 0.0
        %1678 = vmatprep.subr.mxu0 0.0
        %1679 = vmatpush1.xpose.msra.mxu0 0.0
        %1680 = vmatprep.subr.mxu0 0.0
        %1681 = vmatpush1.xpose.msra.mxu0 0.0
        %1682 = vmatprep.subr.mxu0 0.0
        %1683 = vmatpush1.xpose.msra.mxu0 0.0
        %1684 = vmatprep.subr.mxu0 0.0
        %1685 = vmatpush1.xpose.msra.mxu0 0.0
        %1686 = vmatprep.subr.mxu0 0.0
        %1687 = vmatpush1.xpose.msra.mxu0 0.0
        %1688 = vmatprep.subr.mxu0 0.0
        %1689 = vmatpush1.xpose.msra.mxu0 0.0
        %1690 = vmatprep.subr.mxu0 0.0
        %1691 = vmatpush1.xpose.msra.mxu0 0.0
        %1692 = vmatprep.subr.mxu0 0.0
        %1693 = vmatpush1.xpose.msra.mxu0 0.0
        %1694 = vmatprep.subr.mxu0 0.0
        %1695 = vmatpush1.xpose.msra.mxu0 0.0
        %1696 = vmatprep.subr.mxu0 0.0
        %1697 = vmatpush1.xpose.msra.mxu0 0.0
        %1698 = vmatprep.subr.mxu0 0.0
        %1699 = vmatpush1.xpose.msra.mxu0 0.0
        %1700 = vmatprep.subr.mxu0 0.0
        %1701 = vmatpush1.xpose.msra.mxu0 0.0
        %1702 = vmatprep.subr.mxu0 0.0
        %1703 = vmatpush1.xpose.msra.mxu0 0.0
        %1704 = vmatprep.subr.mxu0 0.0
        %1705 = vmatpush1.xpose.msra.mxu0 0.0
        %1706 = vmatprep.subr.mxu0 0.0
        %1707 = vmatpush1.xpose.msra.mxu0 0.0
        %1708 = vmatprep.subr.mxu0 0.0
        %1709 = vmatpush1.xpose.msra.mxu0 0.0
        %1710 = vmatprep.subr.mxu0 0.0
        %1711 = vmatpush1.xpose.msra.mxu0 0.0
        %1712 = vmatprep.subr.mxu0 0.0
        %1713 = vmatpush1.xpose.msra.mxu0 0.0
        %1714 = vmatprep.subr.mxu0 0.0
        %1715 = vmatpush1.xpose.msra.mxu0 0.0
        %1716 = vmatprep.subr.mxu0 0.0
        %1717 = vmatpush1.xpose.msra.mxu0 0.0
        %1718 = vmatprep.mubr.f32.mxu0 0.0
        %1719 = vmatmul.mubr.f32.gmra.mrb[0].mxu0 %v1649
        %v1720 = vpop.f32.mrb[0].mxu0
        %v1721 = vadd.f32 0.0, %v1720
        %v1722 = vpop.f32.mrb[0].mxu0
        %1723 = vdwg.mxu0
        %v1725 = vsel %vm1191, %v1190, 0
        %v1728 = vsel %vm1191, %v918, 0
        %1730 = vmatprep.subr.mxu0 0.0
        %1731 = vmatpush1.xpose.msra.mxu0 %v1728
        %1732 = vmatprep.subr.mxu0 0.0
        %1733 = vmatpush1.xpose.msra.mxu0 0.0
        %1734 = vmatprep.subr.mxu0 0.0
        %1735 = vmatpush1.xpose.msra.mxu0 0.0
        %1736 = vmatprep.subr.mxu0 0.0
        %1737 = vmatpush1.xpose.msra.mxu0 0.0
        %1738 = vmatprep.subr.mxu0 0.0
        %1739 = vmatpush1.xpose.msra.mxu0 0.0
        %1740 = vmatprep.subr.mxu0 0.0
        %1741 = vmatpush1.xpose.msra.mxu0 0.0
        %1742 = vmatprep.subr.mxu0 0.0
        %1743 = vmatpush1.xpose.msra.mxu0 0.0
        %1744 = vmatprep.subr.mxu0 0.0
        %1745 = vmatpush1.xpose.msra.mxu0 0.0
        %1746 = vmatprep.subr.mxu0 0.0
        %1747 = vmatpush1.xpose.msra.mxu0 0.0
        %1748 = vmatprep.subr.mxu0 0.0
        %1749 = vmatpush1.xpose.msra.mxu0 0.0
        %1750 = vmatprep.subr.mxu0 0.0
        %1751 = vmatpush1.xpose.msra.mxu0 0.0
        %1752 = vmatprep.subr.mxu0 0.0
        %1753 = vmatpush1.xpose.msra.mxu0 0.0
        %1754 = vmatprep.subr.mxu0 0.0
        %1755 = vmatpush1.xpose.msra.mxu0 0.0
        %1756 = vmatprep.subr.mxu0 0.0
        %1757 = vmatpush1.xpose.msra.mxu0 0.0
        %1758 = vmatprep.subr.mxu0 0.0
        %1759 = vmatpush1.xpose.msra.mxu0 0.0
        %1760 = vmatprep.subr.mxu0 0.0
        %1761 = vmatpush1.xpose.msra.mxu0 0.0
        %1762 = vmatprep.subr.mxu0 0.0
        %1763 = vmatpush1.xpose.msra.mxu0 0.0
        %1764 = vmatprep.subr.mxu0 0.0
        %1765 = vmatpush1.xpose.msra.mxu0 0.0
        %1766 = vmatprep.subr.mxu0 0.0
        %1767 = vmatpush1.xpose.msra.mxu0 0.0
        %1768 = vmatprep.subr.mxu0 0.0
        %1769 = vmatpush1.xpose.msra.mxu0 0.0
        %1770 = vmatprep.subr.mxu0 0.0
        %1771 = vmatpush1.xpose.msra.mxu0 0.0
        %1772 = vmatprep.subr.mxu0 0.0
        %1773 = vmatpush1.xpose.msra.mxu0 0.0
        %1774 = vmatprep.subr.mxu0 0.0
        %1775 = vmatpush1.xpose.msra.mxu0 0.0
        %1776 = vmatprep.subr.mxu0 0.0
        %1777 = vmatpush1.xpose.msra.mxu0 0.0
        %1778 = vmatprep.subr.mxu0 0.0
        %1779 = vmatpush1.xpose.msra.mxu0 0.0
        %1780 = vmatprep.subr.mxu0 0.0
        %1781 = vmatpush1.xpose.msra.mxu0 0.0
        %1782 = vmatprep.subr.mxu0 0.0
        %1783 = vmatpush1.xpose.msra.mxu0 0.0
        %1784 = vmatprep.subr.mxu0 0.0
        %1785 = vmatpush1.xpose.msra.mxu0 0.0
        %1786 = vmatprep.subr.mxu0 0.0
        %1787 = vmatpush1.xpose.msra.mxu0 0.0
        %1788 = vmatprep.subr.mxu0 0.0
        %1789 = vmatpush1.xpose.msra.mxu0 0.0
        %1790 = vmatprep.subr.mxu0 0.0
        %1791 = vmatpush1.xpose.msra.mxu0 0.0
        %1792 = vmatprep.subr.mxu0 0.0
        %1793 = vmatpush1.xpose.msra.mxu0 0.0
        %1794 = vmatprep.mubr.f32.mxu0 0.0
        %1795 = vmatmul.mubr.f32.gmra.mrb[0].mxu0 %v1725
        %v1796 = vpop.f32.mrb[0].mxu0
        %v1797 = vadd.f32 0.0, %v1796
        %v1798 = vpop.f32.mrb[0].mxu0
        %1799 = vdwg.mxu0
        %v1800 = vsel %vm1191, %v1265, -inf
        %1801 = vmax.xlane.f32.xlu0 %v1800
        %v1802 = vpop.xlane.xlu0 %1801
        %v1803 = vsel %vm1191, %v1341, -inf
        %1804 = vmax.xlane.f32.xlu0 %v1803
        %v1805 = vpop.xlane.xlu0 %1804
        %v1806 = vsel %vm1191, %v1417, -inf
        %1807 = vmax.xlane.f32.xlu0 %v1806
        %v1808 = vpop.xlane.xlu0 %1807
        %v1809 = vsel %vm1191, %v1493, -inf
        %1810 = vmax.xlane.f32.xlu0 %v1809
        %v1811 = vpop.xlane.xlu0 %1810
        %v1812 = vsel %vm1191, %v1569, -inf
        %1813 = vmax.xlane.f32.xlu0 %v1812
        %v1814 = vpop.xlane.xlu0 %1813
        %v1815 = vsel %vm1191, %v1645, -inf
        %1816 = vmax.xlane.f32.xlu0 %v1815
        %v1817 = vpop.xlane.xlu0 %1816
        %v1818 = vsel %vm1191, %v1721, -inf
        %1819 = vmax.xlane.f32.xlu0 %v1818
        %v1820 = vpop.xlane.xlu0 %1819
        %v1821 = vsel %vm1191, %v1797, -inf
        %1822 = vmax.xlane.f32.xlu0 %v1821
        %v1823 = vpop.xlane.xlu0 %1822
        %v1824 = vsub.f32 %v1265, %v1802
        %v1825 = vsub.f32 %v1341, %v1805
        %v1826 = vsub.f32 %v1417, %v1808
        %v1827 = vsub.f32 %v1493, %v1811
        %v1828 = vsub.f32 %v1569, %v1814
        %v1829 = vsub.f32 %v1645, %v1817
        %v1830 = vsub.f32 %v1721, %v1820
        %v1831 = vsub.f32 %v1797, %v1823
        %v1832 = vmul.f32 %v1824, 1.442695
        %v1833 = vpow.pop %v1832
        %v1834 = vmul.f32 %v1825, 1.442695
        %v1835 = vpow.pop %v1834
        %v1836 = vmul.f32 %v1826, 1.442695
        %v1837 = vpow.pop %v1836
        %v1838 = vmul.f32 %v1827, 1.442695
        %v1839 = vpow.pop %v1838
        %v1840 = vmul.f32 %v1828, 1.442695
        %v1841 = vpow.pop %v1840
        %v1842 = vmul.f32 %v1829, 1.442695
        %v1843 = vpow.pop %v1842
        %v1844 = vmul.f32 %v1830, 1.442695
        %v1845 = vpow.pop %v1844
        %v1846 = vmul.f32 %v1831, 1.442695
        %v1847 = vpow.pop %v1846
        %v1848 = vsel %vm1191, %v1833, 0.0
        %1849 = vadd.xlane.f32.xlu0 %v1848
        %v1850 = vpop.xlane.xlu0 %1849
        %v1851 = vsel %vm1191, %v1835, 0.0
        %1852 = vadd.xlane.f32.xlu0 %v1851
        %v1853 = vpop.xlane.xlu0 %1852
        %v1854 = vsel %vm1191, %v1837, 0.0
        %1855 = vadd.xlane.f32.xlu0 %v1854
        %v1856 = vpop.xlane.xlu0 %1855
        %v1857 = vsel %vm1191, %v1839, 0.0
        %1858 = vadd.xlane.f32.xlu0 %v1857
        %v1859 = vpop.xlane.xlu0 %1858
        %v1860 = vsel %vm1191, %v1841, 0.0
        %1861 = vadd.xlane.f32.xlu0 %v1860
        %v1862 = vpop.xlane.xlu0 %1861
        %v1863 = vsel %vm1191, %v1843, 0.0
        %1864 = vadd.xlane.f32.xlu0 %v1863
        %v1865 = vpop.xlane.xlu0 %1864
        %v1866 = vsel %vm1191, %v1845, 0.0
        %1867 = vadd.xlane.f32.xlu0 %v1866
        %v1868 = vpop.xlane.xlu0 %1867
        %v1869 = vsel %vm1191, %v1847, 0.0
        %1870 = vadd.xlane.f32.xlu0 %v1869
        %v1871 = vpop.xlane.xlu0 %1870
        %v1872 = vrcp.pop %v1850
        %v1873 = vmul.f32 %v1833, %v1872
        %v1874 = vrcp.pop %v1853
        %v1875 = vmul.f32 %v1835, %v1874
        %v1876 = vrcp.pop %v1856
        %v1877 = vmul.f32 %v1837, %v1876
        %v1878 = vrcp.pop %v1859
        %v1879 = vmul.f32 %v1839, %v1878
        %v1880 = vrcp.pop %v1862
        %v1881 = vmul.f32 %v1841, %v1880
        %v1882 = vrcp.pop %v1865
        %v1883 = vmul.f32 %v1843, %v1882
        %v1884 = vrcp.pop %v1868
        %v1885 = vmul.f32 %v1845, %v1884
        %v1886 = vrcp.pop %v1871
        %v1887 = vmul.f32 %v1847, %v1886
        %v1888 = vcombine.low %v1873, %v1877
        %v1889 = vcombine.high %v1873, %v1877
        %v1891 = vunpack.c.l.s4 1983009808
        %v1892 = vunpack.c.0.s8 %v1891
        %v1893 = vlaneseq
        %v1894 = vshrl.u32 %v1893, 7
        %v1895 = vsub.s32 %v1892, %v1894
        %v1896 = vrot.slane %v1888, %v1895
        %v1898 = vunpack.c.l.s4 1983009808
        %v1899 = vunpack.c.0.s8 %v1898
        %v1900 = vlaneseq
        %v1901 = vshrl.u32 %v1900, 7
        %v1902 = vsub.s32 %v1899, %v1901
        %v1903 = vrot.slane %v1889, %v1902
        %v1904 = vcombine.low %v1875, %v1879
        %v1905 = vcombine.high %v1875, %v1879
        %v1907 = vunpack.c.l.s4 1983009808
        %v1908 = vunpack.c.0.s8 %v1907
        %v1909 = vlaneseq
        %v1910 = vshrl.u32 %v1909, 7
        %v1911 = vsub.s32 %v1908, %v1910
        %v1912 = vrot.slane %v1904, %v1911
        %v1914 = vunpack.c.l.s4 1983009808
        %v1915 = vunpack.c.0.s8 %v1914
        %v1916 = vlaneseq
        %v1917 = vshrl.u32 %v1916, 7
        %v1918 = vsub.s32 %v1915, %v1917
        %v1919 = vrot.slane %v1905, %v1918
        %v1920 = vcombine.low %v1881, %v1885
        %v1921 = vcombine.high %v1881, %v1885
        %v1923 = vunpack.c.l.s4 1983009808
        %v1924 = vunpack.c.0.s8 %v1923
        %v1925 = vlaneseq
        %v1926 = vshrl.u32 %v1925, 7
        %v1927 = vsub.s32 %v1924, %v1926
        %v1928 = vrot.slane %v1920, %v1927
        %v1930 = vunpack.c.l.s4 1983009808
        %v1931 = vunpack.c.0.s8 %v1930
        %v1932 = vlaneseq
        %v1933 = vshrl.u32 %v1932, 7
        %v1934 = vsub.s32 %v1931, %v1933
        %v1935 = vrot.slane %v1921, %v1934
        %v1936 = vcombine.low %v1883, %v1887
        %v1937 = vcombine.high %v1883, %v1887
        %v1939 = vunpack.c.l.s4 1983009808
        %v1940 = vunpack.c.0.s8 %v1939
        %v1941 = vlaneseq
        %v1942 = vshrl.u32 %v1941, 7
        %v1943 = vsub.s32 %v1940, %v1942
        %v1944 = vrot.slane %v1936, %v1943
        %v1946 = vunpack.c.l.s4 1983009808
        %v1947 = vunpack.c.0.s8 %v1946
        %v1948 = vlaneseq
        %v1949 = vshrl.u32 %v1948, 7
        %v1950 = vsub.s32 %v1947, %v1949
        %v1951 = vrot.slane %v1937, %v1950
        %v1952 = vcombine.low %v1896, %v1912
        %v1953 = vcombine.high %v1896, %v1912
        %v1955 = vunpack.c.l.s4 1934713408
        %v1956 = vunpack.c.0.s8 %v1955
        %v1957 = vlaneseq
        %v1958 = vshrl.u32 %v1957, 7
        %v1959 = vsub.s32 %v1956, %v1958
        %v1960 = vrot.slane %v1952, %v1959
        %v1962 = vunpack.c.l.s4 1934713408
        %v1963 = vunpack.c.0.s8 %v1962
        %v1964 = vlaneseq
        %v1965 = vshrl.u32 %v1964, 7
        %v1966 = vsub.s32 %v1963, %v1965
        %v1967 = vrot.slane %v1953, %v1966
        %v1968 = vcombine.low %v1903, %v1919
        %v1969 = vcombine.high %v1903, %v1919
        %v1971 = vunpack.c.l.s4 1934713408
        %v1972 = vunpack.c.0.s8 %v1971
        %v1973 = vlaneseq
        %v1974 = vshrl.u32 %v1973, 7
        %v1975 = vsub.s32 %v1972, %v1974
        %v1976 = vrot.slane %v1968, %v1975
        %v1978 = vunpack.c.l.s4 1934713408
        %v1979 = vunpack.c.0.s8 %v1978
        %v1980 = vlaneseq
        %v1981 = vshrl.u32 %v1980, 7
        %v1982 = vsub.s32 %v1979, %v1981
        %v1983 = vrot.slane %v1969, %v1982
        %v1984 = vcombine.low %v1928, %v1944
        %v1985 = vcombine.high %v1928, %v1944
        %v1987 = vunpack.c.l.s4 1934713408
        %v1988 = vunpack.c.0.s8 %v1987
        %v1989 = vlaneseq
        %v1990 = vshrl.u32 %v1989, 7
        %v1991 = vsub.s32 %v1988, %v1990
        %v1992 = vrot.slane %v1984, %v1991
        %v1994 = vunpack.c.l.s4 1934713408
        %v1995 = vunpack.c.0.s8 %v1994
        %v1996 = vlaneseq
        %v1997 = vshrl.u32 %v1996, 7
        %v1998 = vsub.s32 %v1995, %v1997
        %v1999 = vrot.slane %v1985, %v1998
        %v2000 = vcombine.low %v1935, %v1951
        %v2001 = vcombine.high %v1935, %v1951
        %v2003 = vunpack.c.l.s4 1934713408
        %v2004 = vunpack.c.0.s8 %v2003
        %v2005 = vlaneseq
        %v2006 = vshrl.u32 %v2005, 7
        %v2007 = vsub.s32 %v2004, %v2006
        %v2008 = vrot.slane %v2000, %v2007
        %v2010 = vunpack.c.l.s4 1934713408
        %v2011 = vunpack.c.0.s8 %v2010
        %v2012 = vlaneseq
        %v2013 = vshrl.u32 %v2012, 7
        %v2014 = vsub.s32 %v2011, %v2013
        %v2015 = vrot.slane %v2001, %v2014
        %v2016 = vcombine.low %v1960, %v1992
        %v2017 = vcombine.high %v1960, %v1992
        %v2018 = vcombine.low %v1967, %v1999
        %v2019 = vcombine.high %v1967, %v1999
        %v2020 = vcombine.low %v1976, %v2008
        %v2021 = vcombine.high %v1976, %v2008
        %v2022 = vcombine.low %v1983, %v2015
        %v2023 = vcombine.high %v1983, %v2015
        %2025 = vrot.lane.b32.xlu0 %v2017, 8
        %v2026 = vpop.permute.xlu0 %2025
        %2029 = vrot.lane.b32.xlu0 %v2018, 16
        %v2030 = vpop.permute.xlu0 %2029
        %2033 = vrot.lane.b32.xlu0 %v2019, 24
        %v2034 = vpop.permute.xlu0 %2033
        %2037 = vrot.lane.b32.xlu0 %v2020, 32
        %v2038 = vpop.permute.xlu0 %2037
        %2041 = vrot.lane.b32.xlu0 %v2021, 40
        %v2042 = vpop.permute.xlu0 %2041
        %2045 = vrot.lane.b32.xlu0 %v2022, 48
        %v2046 = vpop.permute.xlu0 %2045
        %2049 = vrot.lane.b32.xlu0 %v2023, 56
        %v2050 = vpop.permute.xlu0 %2049
        %v2052 = vsel %vm1191, %v2016, %v2026
        %v2053 = vsel %vm538, %v2052, %v2030
        %vm2054 = vcmask 195584
        %v2055 = vsel %vm2054, %v2053, %v2034
        %vm2056 = vcmask 261120
        %v2057 = vsel %vm2056, %v2055, %v2038
        %vm2058 = vcmask 326656
        %v2059 = vsel %vm2058, %v2057, %v2042
        %vm2060 = vcmask 392192
        %v2061 = vsel %vm2060, %v2059, %v2046
        %vm2062 = vcmask 457728
        %v2063 = vsel %vm2062, %v2061, %v2050
        %2064 = vst.msk [vmem:[%s523] sm:$0xff] %vm640, %v2063
        %v2066 = vsel %vm1191, %v1873, 0
        %2068 = vmatprep.subr.mxu0 0.0
        %2069 = vmatpush1.msra.mxu0 %v1047
        %2070 = vmatprep.subr.mxu0 0.0
        %2071 = vmatpush1.msra.mxu0 0.0
        %2072 = vmatprep.subr.mxu0 0.0
        %2073 = vmatpush1.msra.mxu0 0.0
        %2074 = vmatprep.subr.mxu0 0.0
        %2075 = vmatpush1.msra.mxu0 0.0
        %2076 = vmatprep.subr.mxu0 0.0
        %2077 = vmatpush1.msra.mxu0 0.0
        %2078 = vmatprep.subr.mxu0 0.0
        %2079 = vmatpush1.msra.mxu0 0.0
        %2080 = vmatprep.subr.mxu0 0.0
        %2081 = vmatpush1.msra.mxu0 0.0
        %2082 = vmatprep.subr.mxu0 0.0
        %2083 = vmatpush1.msra.mxu0 0.0
        %2084 = vmatprep.subr.mxu0 0.0
        %2085 = vmatpush1.msra.mxu0 0.0
        %2086 = vmatprep.subr.mxu0 0.0
        %2087 = vmatpush1.msra.mxu0 0.0
        %2088 = vmatprep.subr.mxu0 0.0
        %2089 = vmatpush1.msra.mxu0 0.0
        %2090 = vmatprep.subr.mxu0 0.0
        %2091 = vmatpush1.msra.mxu0 0.0
        %2092 = vmatprep.subr.mxu0 0.0
        %2093 = vmatpush1.msra.mxu0 0.0
        %2094 = vmatprep.subr.mxu0 0.0
        %2095 = vmatpush1.msra.mxu0 0.0
        %2096 = vmatprep.subr.mxu0 0.0
        %2097 = vmatpush1.msra.mxu0 0.0
        %2098 = vmatprep.subr.mxu0 0.0
        %2099 = vmatpush1.msra.mxu0 0.0
        %2100 = vmatprep.subr.mxu0 0.0
        %2101 = vmatpush1.msra.mxu0 0.0
        %2102 = vmatprep.subr.mxu0 0.0
        %2103 = vmatpush1.msra.mxu0 0.0
        %2104 = vmatprep.subr.mxu0 0.0
        %2105 = vmatpush1.msra.mxu0 0.0
        %2106 = vmatprep.subr.mxu0 0.0
        %2107 = vmatpush1.msra.mxu0 0.0
        %2108 = vmatprep.subr.mxu0 0.0
        %2109 = vmatpush1.msra.mxu0 0.0
        %2110 = vmatprep.subr.mxu0 0.0
        %2111 = vmatpush1.msra.mxu0 0.0
        %2112 = vmatprep.subr.mxu0 0.0
        %2113 = vmatpush1.msra.mxu0 0.0
        %2114 = vmatprep.subr.mxu0 0.0
        %2115 = vmatpush1.msra.mxu0 0.0
        %2116 = vmatprep.subr.mxu0 0.0
        %2117 = vmatpush1.msra.mxu0 0.0
        %2118 = vmatprep.subr.mxu0 0.0
        %2119 = vmatpush1.msra.mxu0 0.0
        %2120 = vmatprep.subr.mxu0 0.0
        %2121 = vmatpush1.msra.mxu0 0.0
        %2122 = vmatprep.subr.mxu0 0.0
        %2123 = vmatpush1.msra.mxu0 0.0
        %2124 = vmatprep.subr.mxu0 0.0
        %2125 = vmatpush1.msra.mxu0 0.0
        %2126 = vmatprep.subr.mxu0 0.0
        %2127 = vmatpush1.msra.mxu0 0.0
        %2128 = vmatprep.subr.mxu0 0.0
        %2129 = vmatpush1.msra.mxu0 0.0
        %2130 = vmatprep.subr.mxu0 0.0
        %2131 = vmatpush1.msra.mxu0 0.0
        %2132 = vmatprep.mubr.f32.mxu0 0.0
        %2133 = vmatmul.mubr.f32.gmra.mrb[0].mxu0 %v2066
        %v2134 = vpop.f32.mrb[0].mxu0
        %v2135 = vadd.f32 0.0, %v2134
        %v2136 = vpop.f32.mrb[0].mxu0
        %2137 = vdwg.mxu0
        %v2139 = vsel %vm1191, %v1875, 0
        %2141 = vmatprep.subr.mxu0 0.0
        %2142 = vmatpush1.msra.mxu0 %v1048
        %2143 = vmatprep.subr.mxu0 0.0
        %2144 = vmatpush1.msra.mxu0 0.0
        %2145 = vmatprep.subr.mxu0 0.0
        %2146 = vmatpush1.msra.mxu0 0.0
        %2147 = vmatprep.subr.mxu0 0.0
        %2148 = vmatpush1.msra.mxu0 0.0
        %2149 = vmatprep.subr.mxu0 0.0
        %2150 = vmatpush1.msra.mxu0 0.0
        %2151 = vmatprep.subr.mxu0 0.0
        %2152 = vmatpush1.msra.mxu0 0.0
        %2153 = vmatprep.subr.mxu0 0.0
        %2154 = vmatpush1.msra.mxu0 0.0
        %2155 = vmatprep.subr.mxu0 0.0
        %2156 = vmatpush1.msra.mxu0 0.0
        %2157 = vmatprep.subr.mxu0 0.0
        %2158 = vmatpush1.msra.mxu0 0.0
        %2159 = vmatprep.subr.mxu0 0.0
        %2160 = vmatpush1.msra.mxu0 0.0
        %2161 = vmatprep.subr.mxu0 0.0
        %2162 = vmatpush1.msra.mxu0 0.0
        %2163 = vmatprep.subr.mxu0 0.0
        %2164 = vmatpush1.msra.mxu0 0.0
        %2165 = vmatprep.subr.mxu0 0.0
        %2166 = vmatpush1.msra.mxu0 0.0
        %2167 = vmatprep.subr.mxu0 0.0
        %2168 = vmatpush1.msra.mxu0 0.0
        %2169 = vmatprep.subr.mxu0 0.0
        %2170 = vmatpush1.msra.mxu0 0.0
        %2171 = vmatprep.subr.mxu0 0.0
        %2172 = vmatpush1.msra.mxu0 0.0
        %2173 = vmatprep.subr.mxu0 0.0
        %2174 = vmatpush1.msra.mxu0 0.0
        %2175 = vmatprep.subr.mxu0 0.0
        %2176 = vmatpush1.msra.mxu0 0.0
        %2177 = vmatprep.subr.mxu0 0.0
        %2178 = vmatpush1.msra.mxu0 0.0
        %2179 = vmatprep.subr.mxu0 0.0
        %2180 = vmatpush1.msra.mxu0 0.0
        %2181 = vmatprep.subr.mxu0 0.0
        %2182 = vmatpush1.msra.mxu0 0.0
        %2183 = vmatprep.subr.mxu0 0.0
        %2184 = vmatpush1.msra.mxu0 0.0
        %2185 = vmatprep.subr.mxu0 0.0
        %2186 = vmatpush1.msra.mxu0 0.0
        %2187 = vmatprep.subr.mxu0 0.0
        %2188 = vmatpush1.msra.mxu0 0.0
        %2189 = vmatprep.subr.mxu0 0.0
        %2190 = vmatpush1.msra.mxu0 0.0
        %2191 = vmatprep.subr.mxu0 0.0
        %2192 = vmatpush1.msra.mxu0 0.0
        %2193 = vmatprep.subr.mxu0 0.0
        %2194 = vmatpush1.msra.mxu0 0.0
        %2195 = vmatprep.subr.mxu0 0.0
        %2196 = vmatpush1.msra.mxu0 0.0
        %2197 = vmatprep.subr.mxu0 0.0
        %2198 = vmatpush1.msra.mxu0 0.0
        %2199 = vmatprep.subr.mxu0 0.0
        %2200 = vmatpush1.msra.mxu0 0.0
        %2201 = vmatprep.subr.mxu0 0.0
        %2202 = vmatpush1.msra.mxu0 0.0
        %2203 = vmatprep.subr.mxu0 0.0
        %2204 = vmatpush1.msra.mxu0 0.0
        %2205 = vmatprep.mubr.f32.mxu0 0.0
        %2206 = vmatmul.mubr.f32.gmra.mrb[0].mxu0 %v2139
        %v2207 = vpop.f32.mrb[0].mxu0
        %v2208 = vadd.f32 0.0, %v2207
        %v2209 = vpop.f32.mrb[0].mxu0
        %2210 = vdwg.mxu0
        %v2212 = vsel %vm1191, %v1877, 0
        %2214 = vmatprep.subr.mxu0 0.0
        %2215 = vmatpush1.msra.mxu0 %v1049
        %2216 = vmatprep.subr.mxu0 0.0
        %2217 = vmatpush1.msra.mxu0 0.0
        %2218 = vmatprep.subr.mxu0 0.0
        %2219 = vmatpush1.msra.mxu0 0.0
        %2220 = vmatprep.subr.mxu0 0.0
        %2221 = vmatpush1.msra.mxu0 0.0
        %2222 = vmatprep.subr.mxu0 0.0
        %2223 = vmatpush1.msra.mxu0 0.0
        %2224 = vmatprep.subr.mxu0 0.0
        %2225 = vmatpush1.msra.mxu0 0.0
        %2226 = vmatprep.subr.mxu0 0.0
        %2227 = vmatpush1.msra.mxu0 0.0
        %2228 = vmatprep.subr.mxu0 0.0
        %2229 = vmatpush1.msra.mxu0 0.0
        %2230 = vmatprep.subr.mxu0 0.0
        %2231 = vmatpush1.msra.mxu0 0.0
        %2232 = vmatprep.subr.mxu0 0.0
        %2233 = vmatpush1.msra.mxu0 0.0
        %2234 = vmatprep.subr.mxu0 0.0
        %2235 = vmatpush1.msra.mxu0 0.0
        %2236 = vmatprep.subr.mxu0 0.0
        %2237 = vmatpush1.msra.mxu0 0.0
        %2238 = vmatprep.subr.mxu0 0.0
        %2239 = vmatpush1.msra.mxu0 0.0
        %2240 = vmatprep.subr.mxu0 0.0
        %2241 = vmatpush1.msra.mxu0 0.0
        %2242 = vmatprep.subr.mxu0 0.0
        %2243 = vmatpush1.msra.mxu0 0.0
        %2244 = vmatprep.subr.mxu0 0.0
        %2245 = vmatpush1.msra.mxu0 0.0
        %2246 = vmatprep.subr.mxu0 0.0
        %2247 = vmatpush1.msra.mxu0 0.0
        %2248 = vmatprep.subr.mxu0 0.0
        %2249 = vmatpush1.msra.mxu0 0.0
        %2250 = vmatprep.subr.mxu0 0.0
        %2251 = vmatpush1.msra.mxu0 0.0
        %2252 = vmatprep.subr.mxu0 0.0
        %2253 = vmatpush1.msra.mxu0 0.0
        %2254 = vmatprep.subr.mxu0 0.0
        %2255 = vmatpush1.msra.mxu0 0.0
        %2256 = vmatprep.subr.mxu0 0.0
        %2257 = vmatpush1.msra.mxu0 0.0
        %2258 = vmatprep.subr.mxu0 0.0
        %2259 = vmatpush1.msra.mxu0 0.0
        %2260 = vmatprep.subr.mxu0 0.0
        %2261 = vmatpush1.msra.mxu0 0.0
        %2262 = vmatprep.subr.mxu0 0.0
        %2263 = vmatpush1.msra.mxu0 0.0
        %2264 = vmatprep.subr.mxu0 0.0
        %2265 = vmatpush1.msra.mxu0 0.0
        %2266 = vmatprep.subr.mxu0 0.0
        %2267 = vmatpush1.msra.mxu0 0.0
        %2268 = vmatprep.subr.mxu0 0.0
        %2269 = vmatpush1.msra.mxu0 0.0
        %2270 = vmatprep.subr.mxu0 0.0
        %2271 = vmatpush1.msra.mxu0 0.0
        %2272 = vmatprep.subr.mxu0 0.0
        %2273 = vmatpush1.msra.mxu0 0.0
        %2274 = vmatprep.subr.mxu0 0.0
        %2275 = vmatpush1.msra.mxu0 0.0
        %2276 = vmatprep.subr.mxu0 0.0
        %2277 = vmatpush1.msra.mxu0 0.0
        %2278 = vmatprep.mubr.f32.mxu0 0.0
        %2279 = vmatmul.mubr.f32.gmra.mrb[0].mxu0 %v2212
        %v2280 = vpop.f32.mrb[0].mxu0
        %v2281 = vadd.f32 0.0, %v2280
        %v2282 = vpop.f32.mrb[0].mxu0
        %2283 = vdwg.mxu0
        %v2285 = vsel %vm1191, %v1879, 0
        %2287 = vmatprep.subr.mxu0 0.0
        %2288 = vmatpush1.msra.mxu0 %v1050
        %2289 = vmatprep.subr.mxu0 0.0
        %2290 = vmatpush1.msra.mxu0 0.0
        %2291 = vmatprep.subr.mxu0 0.0
        %2292 = vmatpush1.msra.mxu0 0.0
        %2293 = vmatprep.subr.mxu0 0.0
        %2294 = vmatpush1.msra.mxu0 0.0
        %2295 = vmatprep.subr.mxu0 0.0
        %2296 = vmatpush1.msra.mxu0 0.0
        %2297 = vmatprep.subr.mxu0 0.0
        %2298 = vmatpush1.msra.mxu0 0.0
        %2299 = vmatprep.subr.mxu0 0.0
        %2300 = vmatpush1.msra.mxu0 0.0
        %2301 = vmatprep.subr.mxu0 0.0
        %2302 = vmatpush1.msra.mxu0 0.0
        %2303 = vmatprep.subr.mxu0 0.0
        %2304 = vmatpush1.msra.mxu0 0.0
        %2305 = vmatprep.subr.mxu0 0.0
        %2306 = vmatpush1.msra.mxu0 0.0
        %2307 = vmatprep.subr.mxu0 0.0
        %2308 = vmatpush1.msra.mxu0 0.0
        %2309 = vmatprep.subr.mxu0 0.0
        %2310 = vmatpush1.msra.mxu0 0.0
        %2311 = vmatprep.subr.mxu0 0.0
        %2312 = vmatpush1.msra.mxu0 0.0
        %2313 = vmatprep.subr.mxu0 0.0
        %2314 = vmatpush1.msra.mxu0 0.0
        %2315 = vmatprep.subr.mxu0 0.0
        %2316 = vmatpush1.msra.mxu0 0.0
        %2317 = vmatprep.subr.mxu0 0.0
        %2318 = vmatpush1.msra.mxu0 0.0
        %2319 = vmatprep.subr.mxu0 0.0
        %2320 = vmatpush1.msra.mxu0 0.0
        %2321 = vmatprep.subr.mxu0 0.0
        %2322 = vmatpush1.msra.mxu0 0.0
        %2323 = vmatprep.subr.mxu0 0.0
        %2324 = vmatpush1.msra.mxu0 0.0
        %2325 = vmatprep.subr.mxu0 0.0
        %2326 = vmatpush1.msra.mxu0 0.0
        %2327 = vmatprep.subr.mxu0 0.0
        %2328 = vmatpush1.msra.mxu0 0.0
        %2329 = vmatprep.subr.mxu0 0.0
        %2330 = vmatpush1.msra.mxu0 0.0
        %2331 = vmatprep.subr.mxu0 0.0
        %2332 = vmatpush1.msra.mxu0 0.0
        %2333 = vmatprep.subr.mxu0 0.0
        %2334 = vmatpush1.msra.mxu0 0.0
        %2335 = vmatprep.subr.mxu0 0.0
        %2336 = vmatpush1.msra.mxu0 0.0
        %2337 = vmatprep.subr.mxu0 0.0
        %2338 = vmatpush1.msra.mxu0 0.0
        %2339 = vmatprep.subr.mxu0 0.0
        %2340 = vmatpush1.msra.mxu0 0.0
        %2341 = vmatprep.subr.mxu0 0.0
        %2342 = vmatpush1.msra.mxu0 0.0
        %2343 = vmatprep.subr.mxu0 0.0
        %2344 = vmatpush1.msra.mxu0 0.0
        %2345 = vmatprep.subr.mxu0 0.0
        %2346 = vmatpush1.msra.mxu0 0.0
        %2347 = vmatprep.subr.mxu0 0.0
        %2348 = vmatpush1.msra.mxu0 0.0
        %2349 = vmatprep.subr.mxu0 0.0
        %2350 = vmatpush1.msra.mxu0 0.0
        %2351 = vmatprep.mubr.f32.mxu0 0.0
        %2352 = vmatmul.mubr.f32.gmra.mrb[0].mxu0 %v2285
        %v2353 = vpop.f32.mrb[0].mxu0
        %v2354 = vadd.f32 0.0, %v2353
        %v2355 = vpop.f32.mrb[0].mxu0
        %2356 = vdwg.mxu0
        %v2358 = vsel %vm1191, %v1881, 0
        %2360 = vmatprep.subr.mxu0 0.0
        %2361 = vmatpush1.msra.mxu0 %v1051
        %2362 = vmatprep.subr.mxu0 0.0
        %2363 = vmatpush1.msra.mxu0 0.0
        %2364 = vmatprep.subr.mxu0 0.0
        %2365 = vmatpush1.msra.mxu0 0.0
        %2366 = vmatprep.subr.mxu0 0.0
        %2367 = vmatpush1.msra.mxu0 0.0
        %2368 = vmatprep.subr.mxu0 0.0
        %2369 = vmatpush1.msra.mxu0 0.0
        %2370 = vmatprep.subr.mxu0 0.0
        %2371 = vmatpush1.msra.mxu0 0.0
        %2372 = vmatprep.subr.mxu0 0.0
        %2373 = vmatpush1.msra.mxu0 0.0
        %2374 = vmatprep.subr.mxu0 0.0
        %2375 = vmatpush1.msra.mxu0 0.0
        %2376 = vmatprep.subr.mxu0 0.0
        %2377 = vmatpush1.msra.mxu0 0.0
        %2378 = vmatprep.subr.mxu0 0.0
        %2379 = vmatpush1.msra.mxu0 0.0
        %2380 = vmatprep.subr.mxu0 0.0
        %2381 = vmatpush1.msra.mxu0 0.0
        %2382 = vmatprep.subr.mxu0 0.0
        %2383 = vmatpush1.msra.mxu0 0.0
        %2384 = vmatprep.subr.mxu0 0.0
        %2385 = vmatpush1.msra.mxu0 0.0
        %2386 = vmatprep.subr.mxu0 0.0
        %2387 = vmatpush1.msra.mxu0 0.0
        %2388 = vmatprep.subr.mxu0 0.0
        %2389 = vmatpush1.msra.mxu0 0.0
        %2390 = vmatprep.subr.mxu0 0.0
        %2391 = vmatpush1.msra.mxu0 0.0
        %2392 = vmatprep.subr.mxu0 0.0
        %2393 = vmatpush1.msra.mxu0 0.0
        %2394 = vmatprep.subr.mxu0 0.0
        %2395 = vmatpush1.msra.mxu0 0.0
        %2396 = vmatprep.subr.mxu0 0.0
        %2397 = vmatpush1.msra.mxu0 0.0
        %2398 = vmatprep.subr.mxu0 0.0
        %2399 = vmatpush1.msra.mxu0 0.0
        %2400 = vmatprep.subr.mxu0 0.0
        %2401 = vmatpush1.msra.mxu0 0.0
        %2402 = vmatprep.subr.mxu0 0.0
        %2403 = vmatpush1.msra.mxu0 0.0
        %2404 = vmatprep.subr.mxu0 0.0
        %2405 = vmatpush1.msra.mxu0 0.0
        %2406 = vmatprep.subr.mxu0 0.0
        %2407 = vmatpush1.msra.mxu0 0.0
        %2408 = vmatprep.subr.mxu0 0.0
        %2409 = vmatpush1.msra.mxu0 0.0
        %2410 = vmatprep.subr.mxu0 0.0
        %2411 = vmatpush1.msra.mxu0 0.0
        %2412 = vmatprep.subr.mxu0 0.0
        %2413 = vmatpush1.msra.mxu0 0.0
        %2414 = vmatprep.subr.mxu0 0.0
        %2415 = vmatpush1.msra.mxu0 0.0
        %2416 = vmatprep.subr.mxu0 0.0
        %2417 = vmatpush1.msra.mxu0 0.0
        %2418 = vmatprep.subr.mxu0 0.0
        %2419 = vmatpush1.msra.mxu0 0.0
        %2420 = vmatprep.subr.mxu0 0.0
        %2421 = vmatpush1.msra.mxu0 0.0
        %2422 = vmatprep.subr.mxu0 0.0
        %2423 = vmatpush1.msra.mxu0 0.0
        %2424 = vmatprep.mubr.f32.mxu0 0.0
        %2425 = vmatmul.mubr.f32.gmra.mrb[0].mxu0 %v2358
        %v2426 = vpop.f32.mrb[0].mxu0
        %v2427 = vadd.f32 0.0, %v2426
        %v2428 = vpop.f32.mrb[0].mxu0
        %2429 = vdwg.mxu0
        %v2431 = vsel %vm1191, %v1883, 0
        %2433 = vmatprep.subr.mxu0 0.0
        %2434 = vmatpush1.msra.mxu0 %v1052
        %2435 = vmatprep.subr.mxu0 0.0
        %2436 = vmatpush1.msra.mxu0 0.0
        %2437 = vmatprep.subr.mxu0 0.0
        %2438 = vmatpush1.msra.mxu0 0.0
        %2439 = vmatprep.subr.mxu0 0.0
        %2440 = vmatpush1.msra.mxu0 0.0
        %2441 = vmatprep.subr.mxu0 0.0
        %2442 = vmatpush1.msra.mxu0 0.0
        %2443 = vmatprep.subr.mxu0 0.0
        %2444 = vmatpush1.msra.mxu0 0.0
        %2445 = vmatprep.subr.mxu0 0.0
        %2446 = vmatpush1.msra.mxu0 0.0
        %2447 = vmatprep.subr.mxu0 0.0
        %2448 = vmatpush1.msra.mxu0 0.0
        %2449 = vmatprep.subr.mxu0 0.0
        %2450 = vmatpush1.msra.mxu0 0.0
        %2451 = vmatprep.subr.mxu0 0.0
        %2452 = vmatpush1.msra.mxu0 0.0
        %2453 = vmatprep.subr.mxu0 0.0
        %2454 = vmatpush1.msra.mxu0 0.0
        %2455 = vmatprep.subr.mxu0 0.0
        %2456 = vmatpush1.msra.mxu0 0.0
        %2457 = vmatprep.subr.mxu0 0.0
        %2458 = vmatpush1.msra.mxu0 0.0
        %2459 = vmatprep.subr.mxu0 0.0
        %2460 = vmatpush1.msra.mxu0 0.0
        %2461 = vmatprep.subr.mxu0 0.0
        %2462 = vmatpush1.msra.mxu0 0.0
        %2463 = vmatprep.subr.mxu0 0.0
        %2464 = vmatpush1.msra.mxu0 0.0
        %2465 = vmatprep.subr.mxu0 0.0
        %2466 = vmatpush1.msra.mxu0 0.0
        %2467 = vmatprep.subr.mxu0 0.0
        %2468 = vmatpush1.msra.mxu0 0.0
        %2469 = vmatprep.subr.mxu0 0.0
        %2470 = vmatpush1.msra.mxu0 0.0
        %2471 = vmatprep.subr.mxu0 0.0
        %2472 = vmatpush1.msra.mxu0 0.0
        %2473 = vmatprep.subr.mxu0 0.0
        %2474 = vmatpush1.msra.mxu0 0.0
        %2475 = vmatprep.subr.mxu0 0.0
        %2476 = vmatpush1.msra.mxu0 0.0
        %2477 = vmatprep.subr.mxu0 0.0
        %2478 = vmatpush1.msra.mxu0 0.0
        %2479 = vmatprep.subr.mxu0 0.0
        %2480 = vmatpush1.msra.mxu0 0.0
        %2481 = vmatprep.subr.mxu0 0.0
        %2482 = vmatpush1.msra.mxu0 0.0
        %2483 = vmatprep.subr.mxu0 0.0
        %2484 = vmatpush1.msra.mxu0 0.0
        %2485 = vmatprep.subr.mxu0 0.0
        %2486 = vmatpush1.msra.mxu0 0.0
        %2487 = vmatprep.subr.mxu0 0.0
        %2488 = vmatpush1.msra.mxu0 0.0
        %2489 = vmatprep.subr.mxu0 0.0
        %2490 = vmatpush1.msra.mxu0 0.0
        %2491 = vmatprep.subr.mxu0 0.0
        %2492 = vmatpush1.msra.mxu0 0.0
        %2493 = vmatprep.subr.mxu0 0.0
        %2494 = vmatpush1.msra.mxu0 0.0
        %2495 = vmatprep.subr.mxu0 0.0
        %2496 = vmatpush1.msra.mxu0 0.0
        %2497 = vmatprep.mubr.f32.mxu0 0.0
        %2498 = vmatmul.mubr.f32.gmra.mrb[0].mxu0 %v2431
        %v2499 = vpop.f32.mrb[0].mxu0
        %v2500 = vadd.f32 0.0, %v2499
        %v2501 = vpop.f32.mrb[0].mxu0
        %2502 = vdwg.mxu0
        %v2504 = vsel %vm1191, %v1885, 0
        %2506 = vmatprep.subr.mxu0 0.0
        %2507 = vmatpush1.msra.mxu0 %v1053
        %2508 = vmatprep.subr.mxu0 0.0
        %2509 = vmatpush1.msra.mxu0 0.0
        %2510 = vmatprep.subr.mxu0 0.0
        %2511 = vmatpush1.msra.mxu0 0.0
        %2512 = vmatprep.subr.mxu0 0.0
        %2513 = vmatpush1.msra.mxu0 0.0
        %2514 = vmatprep.subr.mxu0 0.0
        %2515 = vmatpush1.msra.mxu0 0.0
        %2516 = vmatprep.subr.mxu0 0.0
        %2517 = vmatpush1.msra.mxu0 0.0
        %2518 = vmatprep.subr.mxu0 0.0
        %2519 = vmatpush1.msra.mxu0 0.0
        %2520 = vmatprep.subr.mxu0 0.0
        %2521 = vmatpush1.msra.mxu0 0.0
        %2522 = vmatprep.subr.mxu0 0.0
        %2523 = vmatpush1.msra.mxu0 0.0
        %2524 = vmatprep.subr.mxu0 0.0
        %2525 = vmatpush1.msra.mxu0 0.0
        %2526 = vmatprep.subr.mxu0 0.0
        %2527 = vmatpush1.msra.mxu0 0.0
        %2528 = vmatprep.subr.mxu0 0.0
        %2529 = vmatpush1.msra.mxu0 0.0
        %2530 = vmatprep.subr.mxu0 0.0
        %2531 = vmatpush1.msra.mxu0 0.0
        %2532 = vmatprep.subr.mxu0 0.0
        %2533 = vmatpush1.msra.mxu0 0.0
        %2534 = vmatprep.subr.mxu0 0.0
        %2535 = vmatpush1.msra.mxu0 0.0
        %2536 = vmatprep.subr.mxu0 0.0
        %2537 = vmatpush1.msra.mxu0 0.0
        %2538 = vmatprep.subr.mxu0 0.0
        %2539 = vmatpush1.msra.mxu0 0.0
        %2540 = vmatprep.subr.mxu0 0.0
        %2541 = vmatpush1.msra.mxu0 0.0
        %2542 = vmatprep.subr.mxu0 0.0
        %2543 = vmatpush1.msra.mxu0 0.0
        %2544 = vmatprep.subr.mxu0 0.0
        %2545 = vmatpush1.msra.mxu0 0.0
        %2546 = vmatprep.subr.mxu0 0.0
        %2547 = vmatpush1.msra.mxu0 0.0
        %2548 = vmatprep.subr.mxu0 0.0
        %2549 = vmatpush1.msra.mxu0 0.0
        %2550 = vmatprep.subr.mxu0 0.0
        %2551 = vmatpush1.msra.mxu0 0.0
        %2552 = vmatprep.subr.mxu0 0.0
        %2553 = vmatpush1.msra.mxu0 0.0
        %2554 = vmatprep.subr.mxu0 0.0
        %2555 = vmatpush1.msra.mxu0 0.0
        %2556 = vmatprep.subr.mxu0 0.0
        %2557 = vmatpush1.msra.mxu0 0.0
        %2558 = vmatprep.subr.mxu0 0.0
        %2559 = vmatpush1.msra.mxu0 0.0
        %2560 = vmatprep.subr.mxu0 0.0
        %2561 = vmatpush1.msra.mxu0 0.0
        %2562 = vmatprep.subr.mxu0 0.0
        %2563 = vmatpush1.msra.mxu0 0.0
        %2564 = vmatprep.subr.mxu0 0.0
        %2565 = vmatpush1.msra.mxu0 0.0
        %2566 = vmatprep.subr.mxu0 0.0
        %2567 = vmatpush1.msra.mxu0 0.0
        %2568 = vmatprep.subr.mxu0 0.0
        %2569 = vmatpush1.msra.mxu0 0.0
        %2570 = vmatprep.mubr.f32.mxu0 0.0
        %2571 = vmatmul.mubr.f32.gmra.mrb[0].mxu0 %v2504
        %v2572 = vpop.f32.mrb[0].mxu0
        %v2573 = vadd.f32 0.0, %v2572
        %v2574 = vpop.f32.mrb[0].mxu0
        %2575 = vdwg.mxu0
        %v2577 = vsel %vm1191, %v1887, 0
        %2579 = vmatprep.subr.mxu0 0.0
        %2580 = vmatpush1.msra.mxu0 %v1054
        %2581 = vmatprep.subr.mxu0 0.0
        %2582 = vmatpush1.msra.mxu0 0.0
        %2583 = vmatprep.subr.mxu0 0.0
        %2584 = vmatpush1.msra.mxu0 0.0
        %2585 = vmatprep.subr.mxu0 0.0
        %2586 = vmatpush1.msra.mxu0 0.0
        %2587 = vmatprep.subr.mxu0 0.0
        %2588 = vmatpush1.msra.mxu0 0.0
        %2589 = vmatprep.subr.mxu0 0.0
        %2590 = vmatpush1.msra.mxu0 0.0
        %2591 = vmatprep.subr.mxu0 0.0
        %2592 = vmatpush1.msra.mxu0 0.0
        %2593 = vmatprep.subr.mxu0 0.0
        %2594 = vmatpush1.msra.mxu0 0.0
        %2595 = vmatprep.subr.mxu0 0.0
        %2596 = vmatpush1.msra.mxu0 0.0
        %2597 = vmatprep.subr.mxu0 0.0
        %2598 = vmatpush1.msra.mxu0 0.0
        %2599 = vmatprep.subr.mxu0 0.0
        %2600 = vmatpush1.msra.mxu0 0.0
        %2601 = vmatprep.subr.mxu0 0.0
        %2602 = vmatpush1.msra.mxu0 0.0
        %2603 = vmatprep.subr.mxu0 0.0
        %2604 = vmatpush1.msra.mxu0 0.0
        %2605 = vmatprep.subr.mxu0 0.0
        %2606 = vmatpush1.msra.mxu0 0.0
        %2607 = vmatprep.subr.mxu0 0.0
        %2608 = vmatpush1.msra.mxu0 0.0
        %2609 = vmatprep.subr.mxu0 0.0
        %2610 = vmatpush1.msra.mxu0 0.0
        %2611 = vmatprep.subr.mxu0 0.0
        %2612 = vmatpush1.msra.mxu0 0.0
        %2613 = vmatprep.subr.mxu0 0.0
        %2614 = vmatpush1.msra.mxu0 0.0
        %2615 = vmatprep.subr.mxu0 0.0
        %2616 = vmatpush1.msra.mxu0 0.0
        %2617 = vmatprep.subr.mxu0 0.0
        %2618 = vmatpush1.msra.mxu0 0.0
        %2619 = vmatprep.subr.mxu0 0.0
        %2620 = vmatpush1.msra.mxu0 0.0
        %2621 = vmatprep.subr.mxu0 0.0
        %2622 = vmatpush1.msra.mxu0 0.0
        %2623 = vmatprep.subr.mxu0 0.0
        %2624 = vmatpush1.msra.mxu0 0.0
        %2625 = vmatprep.subr.mxu0 0.0
        %2626 = vmatpush1.msra.mxu0 0.0
        %2627 = vmatprep.subr.mxu0 0.0
        %2628 = vmatpush1.msra.mxu0 0.0
        %2629 = vmatprep.subr.mxu0 0.0
        %2630 = vmatpush1.msra.mxu0 0.0
        %2631 = vmatprep.subr.mxu0 0.0
        %2632 = vmatpush1.msra.mxu0 0.0
        %2633 = vmatprep.subr.mxu0 0.0
        %2634 = vmatpush1.msra.mxu0 0.0
        %2635 = vmatprep.subr.mxu0 0.0
        %2636 = vmatpush1.msra.mxu0 0.0
        %2637 = vmatprep.subr.mxu0 0.0
        %2638 = vmatpush1.msra.mxu0 0.0
        %2639 = vmatprep.subr.mxu0 0.0
        %2640 = vmatpush1.msra.mxu0 0.0
        %2641 = vmatprep.subr.mxu0 0.0
        %2642 = vmatpush1.msra.mxu0 0.0
        %2643 = vmatprep.mubr.f32.mxu0 0.0
        %2644 = vmatmul.mubr.f32.gmra.mrb[0].mxu0 %v2577
        %v2645 = vpop.f32.mrb[0].mxu0
        %v2646 = vadd.f32 0.0, %v2645
        %v2647 = vpop.f32.mrb[0].mxu0
        %2648 = vdwg.mxu0
        %v2649 = vcombine.low %v2135, %v2281
        %v2650 = vcombine.high %v2135, %v2281
        %v2652 = vunpack.c.l.s4 1983009808
        %v2653 = vunpack.c.0.s8 %v2652
        %v2654 = vlaneseq
        %v2655 = vshrl.u32 %v2654, 7
        %v2656 = vsub.s32 %v2653, %v2655
        %v2657 = vrot.slane %v2649, %v2656
        %v2659 = vunpack.c.l.s4 1983009808
        %v2660 = vunpack.c.0.s8 %v2659
        %v2661 = vlaneseq
        %v2662 = vshrl.u32 %v2661, 7
        %v2663 = vsub.s32 %v2660, %v2662
        %v2664 = vrot.slane %v2650, %v2663
        %v2665 = vcombine.low %v2208, %v2354
        %v2666 = vcombine.high %v2208, %v2354
        %v2668 = vunpack.c.l.s4 1983009808
        %v2669 = vunpack.c.0.s8 %v2668
        %v2670 = vlaneseq
        %v2671 = vshrl.u32 %v2670, 7
        %v2672 = vsub.s32 %v2669, %v2671
        %v2673 = vrot.slane %v2665, %v2672
        %v2675 = vunpack.c.l.s4 1983009808
        %v2676 = vunpack.c.0.s8 %v2675
        %v2677 = vlaneseq
        %v2678 = vshrl.u32 %v2677, 7
        %v2679 = vsub.s32 %v2676, %v2678
        %v2680 = vrot.slane %v2666, %v2679
        %v2681 = vcombine.low %v2427, %v2573
        %v2682 = vcombine.high %v2427, %v2573
        %v2684 = vunpack.c.l.s4 1983009808
        %v2685 = vunpack.c.0.s8 %v2684
        %v2686 = vlaneseq
        %v2687 = vshrl.u32 %v2686, 7
        %v2688 = vsub.s32 %v2685, %v2687
        %v2689 = vrot.slane %v2681, %v2688
        %v2691 = vunpack.c.l.s4 1983009808
        %v2692 = vunpack.c.0.s8 %v2691
        %v2693 = vlaneseq
        %v2694 = vshrl.u32 %v2693, 7
        %v2695 = vsub.s32 %v2692, %v2694
        %v2696 = vrot.slane %v2682, %v2695
        %v2697 = vcombine.low %v2500, %v2646
        %v2698 = vcombine.high %v2500, %v2646
        %v2700 = vunpack.c.l.s4 1983009808
        %v2701 = vunpack.c.0.s8 %v2700
        %v2702 = vlaneseq
        %v2703 = vshrl.u32 %v2702, 7
        %v2704 = vsub.s32 %v2701, %v2703
        %v2705 = vrot.slane %v2697, %v2704
        %v2707 = vunpack.c.l.s4 1983009808
        %v2708 = vunpack.c.0.s8 %v2707
        %v2709 = vlaneseq
        %v2710 = vshrl.u32 %v2709, 7
        %v2711 = vsub.s32 %v2708, %v2710
        %v2712 = vrot.slane %v2698, %v2711
        %v2713 = vcombine.low %v2657, %v2673
        %v2714 = vcombine.high %v2657, %v2673
        %v2716 = vunpack.c.l.s4 1934713408
        %v2717 = vunpack.c.0.s8 %v2716
        %v2718 = vlaneseq
        %v2719 = vshrl.u32 %v2718, 7
        %v2720 = vsub.s32 %v2717, %v2719
        %v2721 = vrot.slane %v2713, %v2720
        %v2723 = vunpack.c.l.s4 1934713408
        %v2724 = vunpack.c.0.s8 %v2723
        %v2725 = vlaneseq
        %v2726 = vshrl.u32 %v2725, 7
        %v2727 = vsub.s32 %v2724, %v2726
        %v2728 = vrot.slane %v2714, %v2727
        %v2729 = vcombine.low %v2664, %v2680
        %v2730 = vcombine.high %v2664, %v2680
        %v2732 = vunpack.c.l.s4 1934713408
        %v2733 = vunpack.c.0.s8 %v2732
        %v2734 = vlaneseq
        %v2735 = vshrl.u32 %v2734, 7
        %v2736 = vsub.s32 %v2733, %v2735
        %v2737 = vrot.slane %v2729, %v2736
        %v2739 = vunpack.c.l.s4 1934713408
        %v2740 = vunpack.c.0.s8 %v2739
        %v2741 = vlaneseq
        %v2742 = vshrl.u32 %v2741, 7
        %v2743 = vsub.s32 %v2740, %v2742
        %v2744 = vrot.slane %v2730, %v2743
        %v2745 = vcombine.low %v2689, %v2705
        %v2746 = vcombine.high %v2689, %v2705
        %v2748 = vunpack.c.l.s4 1934713408
        %v2749 = vunpack.c.0.s8 %v2748
        %v2750 = vlaneseq
        %v2751 = vshrl.u32 %v2750, 7
        %v2752 = vsub.s32 %v2749, %v2751
        %v2753 = vrot.slane %v2745, %v2752
        %v2755 = vunpack.c.l.s4 1934713408
        %v2756 = vunpack.c.0.s8 %v2755
        %v2757 = vlaneseq
        %v2758 = vshrl.u32 %v2757, 7
        %v2759 = vsub.s32 %v2756, %v2758
        %v2760 = vrot.slane %v2746, %v2759
        %v2761 = vcombine.low %v2696, %v2712
        %v2762 = vcombine.high %v2696, %v2712
        %v2764 = vunpack.c.l.s4 1934713408
        %v2765 = vunpack.c.0.s8 %v2764
        %v2766 = vlaneseq
        %v2767 = vshrl.u32 %v2766, 7
        %v2768 = vsub.s32 %v2765, %v2767
        %v2769 = vrot.slane %v2761, %v2768
        %v2771 = vunpack.c.l.s4 1934713408
        %v2772 = vunpack.c.0.s8 %v2771
        %v2773 = vlaneseq
        %v2774 = vshrl.u32 %v2773, 7
        %v2775 = vsub.s32 %v2772, %v2774
        %v2776 = vrot.slane %v2762, %v2775
        %v2777 = vcombine.low %v2721, %v2753
        %v2778 = vcombine.high %v2721, %v2753
        %v2779 = vcombine.low %v2728, %v2760
        %v2780 = vcombine.high %v2728, %v2760
        %v2781 = vcombine.low %v2737, %v2769
        %v2782 = vcombine.high %v2737, %v2769
        %v2783 = vcombine.low %v2744, %v2776
        %v2784 = vcombine.high %v2744, %v2776
        %2786 = vrot.lane.b32.xlu0 %v2778, 8
        %v2787 = vpop.permute.xlu0 %2786
        %2790 = vrot.lane.b32.xlu0 %v2779, 16
        %v2791 = vpop.permute.xlu0 %2790
        %2794 = vrot.lane.b32.xlu0 %v2780, 24
        %v2795 = vpop.permute.xlu0 %2794
        %2798 = vrot.lane.b32.xlu0 %v2781, 32
        %v2799 = vpop.permute.xlu0 %2798
        %2802 = vrot.lane.b32.xlu0 %v2782, 40
        %v2803 = vpop.permute.xlu0 %2802
        %2806 = vrot.lane.b32.xlu0 %v2783, 48
        %v2807 = vpop.permute.xlu0 %2806
        %2810 = vrot.lane.b32.xlu0 %v2784, 56
        %v2811 = vpop.permute.xlu0 %2810
        %v2813 = vsel %vm1191, %v2777, %v2787
        %v2814 = vsel %vm538, %v2813, %v2791
        %v2815 = vsel %vm2054, %v2814, %v2795
        %v2816 = vsel %vm2056, %v2815, %v2799
        %v2817 = vsel %vm2058, %v2816, %v2803
        %v2818 = vsel %vm2060, %v2817, %v2807
        %v2819 = vsel %vm2062, %v2818, %v2811
        %v2820 = vld [vmem:[%s5] sm:$0xff]
        %v2821 = vld [vmem:[%s5 + $0x8] sm:$0xff]
        %v2822 = vld [vmem:[%s5 + $0x10] sm:$0xff]
        %v2823 = vld [vmem:[%s5 + $0x18] sm:$0xff]
        %v2824 = vld [vmem:[%s5 + $0x20] sm:$0xff]
        %v2825 = vld [vmem:[%s5 + $0x28] sm:$0xff]
        %v2826 = vld [vmem:[%s5 + $0x30] sm:$0xff]
        %v2827 = vld [vmem:[%s5 + $0x38] sm:$0xff]
        %v2828 = vld [vmem:[%s6] sm:$0x1]
        %v2830 = vlaneseq
        %v2831 = vshrl.u32 %v2830, 7
        %v2832 = vsub.s32 0, %v2831
        %v2833 = vrot.slane %v2828, %v2832
        %v2836 = vsel %vm640, %v2819, 0
        %2838 = vmatprep.subr.mxu0 0.0
        %2839 = vmatpush1.msra.mxu0 %v2820
        %2840 = vmatprep.subr.mxu0 0.0
        %2841 = vmatpush1.msra.mxu0 %v2821
        %2842 = vmatprep.subr.mxu0 0.0
        %2843 = vmatpush1.msra.mxu0 %v2822
        %2844 = vmatprep.subr.mxu0 0.0
        %2845 = vmatpush1.msra.mxu0 %v2823
        %2846 = vmatprep.subr.mxu0 0.0
        %2847 = vmatpush1.msra.mxu0 %v2824
        %2848 = vmatprep.subr.mxu0 0.0
        %2849 = vmatpush1.msra.mxu0 %v2825
        %2850 = vmatprep.subr.mxu0 0.0
        %2851 = vmatpush1.msra.mxu0 %v2826
        %2852 = vmatprep.subr.mxu0 0.0
        %2853 = vmatpush1.msra.mxu0 %v2827
        %2854 = vmatprep.subr.mxu0 0.0
        %2855 = vmatpush1.msra.mxu0 0.0
        %2856 = vmatprep.subr.mxu0 0.0
        %2857 = vmatpush1.msra.mxu0 0.0
        %2858 = vmatprep.subr.mxu0 0.0
        %2859 = vmatpush1.msra.mxu0 0.0
        %2860 = vmatprep.subr.mxu0 0.0
        %2861 = vmatpush1.msra.mxu0 0.0
        %2862 = vmatprep.subr.mxu0 0.0
        %2863 = vmatpush1.msra.mxu0 0.0
        %2864 = vmatprep.subr.mxu0 0.0
        %2865 = vmatpush1.msra.mxu0 0.0
        %2866 = vmatprep.subr.mxu0 0.0
        %2867 = vmatpush1.msra.mxu0 0.0
        %2868 = vmatprep.subr.mxu0 0.0
        %2869 = vmatpush1.msra.mxu0 0.0
        %2870 = vmatprep.subr.mxu0 0.0
        %2871 = vmatpush1.msra.mxu0 0.0
        %2872 = vmatprep.subr.mxu0 0.0
        %2873 = vmatpush1.msra.mxu0 0.0
        %2874 = vmatprep.subr.mxu0 0.0
        %2875 = vmatpush1.msra.mxu0 0.0
        %2876 = vmatprep.subr.mxu0 0.0
        %2877 = vmatpush1.msra.mxu0 0.0
        %2878 = vmatprep.subr.mxu0 0.0
        %2879 = vmatpush1.msra.mxu0 0.0
        %2880 = vmatprep.subr.mxu0 0.0
        %2881 = vmatpush1.msra.mxu0 0.0
        %2882 = vmatprep.subr.mxu0 0.0
        %2883 = vmatpush1.msra.mxu0 0.0
        %2884 = vmatprep.subr.mxu0 0.0
        %2885 = vmatpush1.msra.mxu0 0.0
        %2886 = vmatprep.subr.mxu0 0.0
        %2887 = vmatpush1.msra.mxu0 0.0
        %2888 = vmatprep.subr.mxu0 0.0
        %2889 = vmatpush1.msra.mxu0 0.0
        %2890 = vmatprep.subr.mxu0 0.0
        %2891 = vmatpush1.msra.mxu0 0.0
        %2892 = vmatprep.subr.mxu0 0.0
        %2893 = vmatpush1.msra.mxu0 0.0
        %2894 = vmatprep.subr.mxu0 0.0
        %2895 = vmatpush1.msra.mxu0 0.0
        %2896 = vmatprep.subr.mxu0 0.0
        %2897 = vmatpush1.msra.mxu0 0.0
        %2898 = vmatprep.subr.mxu0 0.0
        %2899 = vmatpush1.msra.mxu0 0.0
        %2900 = vmatprep.subr.mxu0 0.0
        %2901 = vmatpush1.msra.mxu0 0.0
        %2902 = vmatprep.mubr.f32.mxu0 0.0
        %2903 = vmatmul.mubr.f32.gmra.mrb[0].mxu0 %v2836
        %v2904 = vpop.f32.mrb[0].mxu0
        %v2905 = vadd.f32 %v2833, %v2904
        %v2906 = vpop.f32.mrb[0].mxu0
        %2907 = vdwg.mxu0
        %v2908 = vadd.f32 %v609, %v2905
        %v2909 = vld [vmem:[%s7] sm:$0x1]
        %v2910 = vld [vmem:[%s8] sm:$0x1]
        %v2911 = vsel %vm640, %v2908, 0.0
        %2912 = vadd.xlane.f32.xlu0 %v2911
        %v2913 = vpop.xlane.xlu0 %2912
        %v2914 = vrcp.pop 64.0
        %v2915 = vmul.f32 %v2913, %v2914
        %v2916 = vsub.f32 %v2908, %v2915
        %v2917 = vmul.f32 %v2916, %v2916
        %v2918 = vsel %vm640, %v2917, 0.0
        %2919 = vadd.xlane.f32.xlu0 %v2918
        %v2920 = vpop.xlane.xlu0 %2919
        %v2921 = vmul.f32 %v2920, %v2914
        %v2922 = vadd.f32 %v2921, 1e-05
        %v2923 = vrsqrt.pop %v2922
        %v2924 = vmul.f32 %v2916, %v2923
        %v2926 = vlaneseq
        %v2927 = vshrl.u32 %v2926, 7
        %v2928 = vsub.s32 0, %v2927
        %v2929 = vrot.slane %v2909, %v2928
        %v2931 = vmul.f32 %v2924, %v2929
        %v2933 = vlaneseq
        %v2934 = vshrl.u32 %v2933, 7
        %v2935 = vsub.s32 0, %v2934
        %v2936 = vrot.slane %v2910, %v2935
        %v2938 = vadd.f32 %v2931, %v2936
        %v2939 = vld [vmem:[%s9] sm:$0xff]
        %v2940 = vld [vmem:[%s9 + $0x8] sm:$0xff]
        %v2941 = vld [vmem:[%s9 + $0x10] sm:$0xff]
        %v2942 = vld [vmem:[%s9 + $0x18] sm:$0xff]
        %v2943 = vld [vmem:[%s9 + $0x20] sm:$0xff]
        %v2944 = vld [vmem:[%s9 + $0x28] sm:$0xff]
        %v2945 = vld [vmem:[%s9 + $0x30] sm:$0xff]
        %v2946 = vld [vmem:[%s9 + $0x38] sm:$0xff]
        %v2947 = vld [vmem:[%s9 + $0x40] sm:$0xff]
        %v2948 = vld [vmem:[%s9 + $0x48] sm:$0xff]
        %v2949 = vld [vmem:[%s9 + $0x50] sm:$0xff]
        %v2950 = vld [vmem:[%s9 + $0x58] sm:$0xff]
        %v2951 = vld [vmem:[%s9 + $0x60] sm:$0xff]
        %v2952 = vld [vmem:[%s9 + $0x68] sm:$0xff]
        %v2953 = vld [vmem:[%s9 + $0x70] sm:$0xff]
        %v2954 = vld [vmem:[%s9 + $0x78] sm:$0xff]
        %v2955 = vld [vmem:[%s9 + $0x80] sm:$0xff]
        %v2956 = vld [vmem:[%s9 + $0x88] sm:$0xff]
        %v2957 = vld [vmem:[%s9 + $0x90] sm:$0xff]
        %v2958 = vld [vmem:[%s9 + $0x98] sm:$0xff]
        %v2959 = vld [vmem:[%s9 + $0xa0] sm:$0xff]
        %v2960 = vld [vmem:[%s9 + $0xa8] sm:$0xff]
        %v2961 = vld [vmem:[%s9 + $0xb0] sm:$0xff]
        %v2962 = vld [vmem:[%s9 + $0xb8] sm:$0xff]
        %v2963 = vld [vmem:[%s9 + $0xc0] sm:$0xff]
        %v2964 = vld [vmem:[%s9 + $0xc8] sm:$0xff]
        %v2965 = vld [vmem:[%s9 + $0xd0] sm:$0xff]
        %v2966 = vld [vmem:[%s9 + $0xd8] sm:$0xff]
        %v2967 = vld [vmem:[%s9 + $0xe0] sm:$0xff]
        %v2968 = vld [vmem:[%s9 + $0xe8] sm:$0xff]
        %v2969 = vld [vmem:[%s9 + $0xf0] sm:$0xff]
        %v2970 = vld [vmem:[%s9 + $0xf8] sm:$0xff]
        %v2971 = vld [vmem:[%s10] sm:$0xf]
        %v2973 = vlaneseq
        %v2974 = vshrl.u32 %v2973, 7
        %v2975 = vsub.s32 0, %v2974
        %v2976 = vrot.slane %v2971, %v2975
        %v2977 = vlaneseq
        %v2978 = vshrl.u32 %v2977, 7
        %v2979 = vsub.s32 1, %v2978
        %v2980 = vrot.slane %v2971, %v2979
        %v2981 = vlaneseq
        %v2982 = vshrl.u32 %v2981, 7
        %v2983 = vsub.s32 2, %v2982
        %v2984 = vrot.slane %v2971, %v2983
        %v2985 = vlaneseq
        %v2986 = vshrl.u32 %v2985, 7
        %v2987 = vsub.s32 3, %v2986
        %v2988 = vrot.slane %v2971, %v2987
        %v2994 = vsel %vm640, %v2938, 0
        %2996 = vmatprep.subr.mxu0 %v2940
        %2997 = vmatpush1.msra.mxu0 %v2939
        %2998 = vmatprep.subr.mxu0 %v2944
        %2999 = vmatpush1.msra.mxu0 %v2943
        %3000 = vmatprep.subr.mxu0 %v2948
        %3001 = vmatpush1.msra.mxu0 %v2947
        %3002 = vmatprep.subr.mxu0 %v2952
        %3003 = vmatpush1.msra.mxu0 %v2951
        %3004 = vmatprep.subr.mxu0 %v2956
        %3005 = vmatpush1.msra.mxu0 %v2955
        %3006 = vmatprep.subr.mxu0 %v2960
        %3007 = vmatpush1.msra.mxu0 %v2959
        %3008 = vmatprep.subr.mxu0 %v2964
        %3009 = vmatpush1.msra.mxu0 %v2963
        %3010 = vmatprep.subr.mxu0 %v2968
        %3011 = vmatpush1.msra.mxu0 %v2967
        %3012 = vmatprep.subr.mxu0 0.0
        %3013 = vmatpush1.msra.mxu0 0.0
        %3014 = vmatprep.subr.mxu0 0.0
        %3015 = vmatpush1.msra.mxu0 0.0
        %3016 = vmatprep.subr.mxu0 0.0
        %3017 = vmatpush1.msra.mxu0 0.0
        %3018 = vmatprep.subr.mxu0 0.0
        %3019 = vmatpush1.msra.mxu0 0.0
        %3020 = vmatprep.subr.mxu0 0.0
        %3021 = vmatpush1.msra.mxu0 0.0
        %3022 = vmatprep.subr.mxu0 0.0
        %3023 = vmatpush1.msra.mxu0 0.0
        %3024 = vmatprep.subr.mxu0 0.0
        %3025 = vmatpush1.msra.mxu0 0.0
        %3026 = vmatprep.subr.mxu0 0.0
        %3027 = vmatpush1.msra.mxu0 0.0
        %3028 = vmatprep.subr.mxu0 0.0
        %3029 = vmatpush1.msra.mxu0 0.0
        %3030 = vmatprep.subr.mxu0 0.0
        %3031 = vmatpush1.msra.mxu0 0.0
        %3032 = vmatprep.subr.mxu0 0.0
        %3033 = vmatpush1.msra.mxu0 0.0
        %3034 = vmatprep.subr.mxu0 0.0
        %3035 = vmatpush1.msra.mxu0 0.0
        %3036 = vmatprep.subr.mxu0 0.0
        %3037 = vmatpush1.msra.mxu0 0.0
        %3038 = vmatprep.subr.mxu0 0.0
        %3039 = vmatpush1.msra.mxu0 0.0
        %3040 = vmatprep.subr.mxu0 0.0
        %3041 = vmatpush1.msra.mxu0 0.0
        %3042 = vmatprep.subr.mxu0 0.0
        %3043 = vmatpush1.msra.mxu0 0.0
        %3044 = vmatprep.subr.mxu0 0.0
        %3045 = vmatpush1.msra.mxu0 0.0
        %3046 = vmatprep.subr.mxu0 0.0
        %3047 = vmatpush1.msra.mxu0 0.0
        %3048 = vmatprep.subr.mxu0 0.0
        %3049 = vmatpush1.msra.mxu0 0.0
        %3050 = vmatprep.subr.mxu0 0.0
        %3051 = vmatpush1.msra.mxu0 0.0
        %3052 = vmatprep.subr.mxu0 0.0
        %3053 = vmatpush1.msra.mxu0 0.0
        %3054 = vmatprep.subr.mxu0 0.0
        %3055 = vmatpush1.msra.mxu0 0.0
        %3056 = vmatprep.subr.mxu0 0.0
        %3057 = vmatpush1.msra.mxu0 0.0
        %3058 = vmatprep.subr.mxu0 0.0
        %3059 = vmatpush1.msra.mxu0 0.0
        %3060 = vmatprep.mubr.f32.mxu0 0.0
        %3061 = vmatmul.mubr.f32.gmra.mrb[0].mxu0 %v2994
        %v3062 = vpop.f32.mrb[0].mxu0
        %v3063 = vadd.f32 %v2976, %v3062
        %v3064 = vpop.f32.mrb[0].mxu0
        %v3065 = vadd.f32 %v2980, %v3064
        %3066 = vdwg.mxu0
        %3067 = vmatprep.subr.mxu0 %v2942
        %3068 = vmatpush1.msra.mxu0 %v2941
        %3069 = vmatprep.subr.mxu0 %v2946
        %3070 = vmatpush1.msra.mxu0 %v2945
        %3071 = vmatprep.subr.mxu0 %v2950
        %3072 = vmatpush1.msra.mxu0 %v2949
        %3073 = vmatprep.subr.mxu0 %v2954
        %3074 = vmatpush1.msra.mxu0 %v2953
        %3075 = vmatprep.subr.mxu0 %v2958
        %3076 = vmatpush1.msra.mxu0 %v2957
        %3077 = vmatprep.subr.mxu0 %v2962
        %3078 = vmatpush1.msra.mxu0 %v2961
        %3079 = vmatprep.subr.mxu0 %v2966
        %3080 = vmatpush1.msra.mxu0 %v2965
        %3081 = vmatprep.subr.mxu0 %v2970
        %3082 = vmatpush1.msra.mxu0 %v2969
        %3083 = vmatprep.subr.mxu0 0.0
        %3084 = vmatpush1.msra.mxu0 0.0
        %3085 = vmatprep.subr.mxu0 0.0
        %3086 = vmatpush1.msra.mxu0 0.0
        %3087 = vmatprep.subr.mxu0 0.0
        %3088 = vmatpush1.msra.mxu0 0.0
        %3089 = vmatprep.subr.mxu0 0.0
        %3090 = vmatpush1.msra.mxu0 0.0
        %3091 = vmatprep.subr.mxu0 0.0
        %3092 = vmatpush1.msra.mxu0 0.0
        %3093 = vmatprep.subr.mxu0 0.0
        %3094 = vmatpush1.msra.mxu0 0.0
        %3095 = vmatprep.subr.mxu0 0.0
        %3096 = vmatpush1.msra.mxu0 0.0
        %3097 = vmatprep.subr.mxu0 0.0
        %3098 = vmatpush1.msra.mxu0 0.0
        %3099 = vmatprep.subr.mxu0 0.0
        %3100 = vmatpush1.msra.mxu0 0.0
        %3101 = vmatprep.subr.mxu0 0.0
        %3102 = vmatpush1.msra.mxu0 0.0
        %3103 = vmatprep.subr.mxu0 0.0
        %3104 = vmatpush1.msra.mxu0 0.0
        %3105 = vmatprep.subr.mxu0 0.0
        %3106 = vmatpush1.msra.mxu0 0.0
        %3107 = vmatprep.subr.mxu0 0.0
        %3108 = vmatpush1.msra.mxu0 0.0
        %3109 = vmatprep.subr.mxu0 0.0
        %3110 = vmatpush1.msra.mxu0 0.0
        %3111 = vmatprep.subr.mxu0 0.0
        %3112 = vmatpush1.msra.mxu0 0.0
        %3113 = vmatprep.subr.mxu0 0.0
        %3114 = vmatpush1.msra.mxu0 0.0
        %3115 = vmatprep.subr.mxu0 0.0
        %3116 = vmatpush1.msra.mxu0 0.0
        %3117 = vmatprep.subr.mxu0 0.0
        %3118 = vmatpush1.msra.mxu0 0.0
        %3119 = vmatprep.subr.mxu0 0.0
        %3120 = vmatpush1.msra.mxu0 0.0
        %3121 = vmatprep.subr.mxu0 0.0
        %3122 = vmatpush1.msra.mxu0 0.0
        %3123 = vmatprep.subr.mxu0 0.0
        %3124 = vmatpush1.msra.mxu0 0.0
        %3125 = vmatprep.subr.mxu0 0.0
        %3126 = vmatpush1.msra.mxu0 0.0
        %3127 = vmatprep.subr.mxu0 0.0
        %3128 = vmatpush1.msra.mxu0 0.0
        %3129 = vmatprep.subr.mxu0 0.0
        %3130 = vmatpush1.msra.mxu0 0.0
        %3131 = vmatprep.mubr.f32.mxu0 0.0
        %3132 = vmatmul.mubr.f32.gmra.mrb[0].mxu0 %v2994
        %v3133 = vpop.f32.mrb[0].mxu0
        %v3134 = vadd.f32 %v2984, %v3133
        %v3135 = vpop.f32.mrb[0].mxu0
        %v3136 = vadd.f32 %v2988, %v3135
        %3137 = vdwg.mxu0
        %v3138 = vmax.f32 %v3063, 0.0
        %v3139 = vmax.f32 %v3065, 0.0
        %v3140 = vmax.f32 %v3134, 0.0
        %v3141 = vmax.f32 %v3136, 0.0
        %v3142 = vld [vmem:[%s11] sm:$0xff]
        %v3143 = vld [vmem:[%s11 + $0x8] sm:$0xff]
        %v3144 = vld [vmem:[%s11 + $0x10] sm:$0xff]
        %v3145 = vld [vmem:[%s11 + $0x18] sm:$0xff]
        %v3146 = vld [vmem:[%s11 + $0x20] sm:$0xff]
        %v3147 = vld [vmem:[%s11 + $0x28] sm:$0xff]
        %v3148 = vld [vmem:[%s11 + $0x30] sm:$0xff]
        %v3149 = vld [vmem:[%s11 + $0x38] sm:$0xff]
        %v3150 = vld [vmem:[%s11 + $0x40] sm:$0xff]
        %v3151 = vld [vmem:[%s11 + $0x48] sm:$0xff]
        %v3152 = vld [vmem:[%s11 + $0x50] sm:$0xff]
        %v3153 = vld [vmem:[%s11 + $0x58] sm:$0xff]
        %v3154 = vld [vmem:[%s11 + $0x60] sm:$0xff]
        %v3155 = vld [vmem:[%s11 + $0x68] sm:$0xff]
        %v3156 = vld [vmem:[%s11 + $0x70] sm:$0xff]
        %v3157 = vld [vmem:[%s11 + $0x78] sm:$0xff]
        %v3158 = vld [vmem:[%s11 + $0x80] sm:$0xff]
        %v3159 = vld [vmem:[%s11 + $0x88] sm:$0xff]
        %v3160 = vld [vmem:[%s11 + $0x90] sm:$0xff]
        %v3161 = vld [vmem:[%s11 + $0x98] sm:$0xff]
        %v3162 = vld [vmem:[%s11 + $0xa0] sm:$0xff]
        %v3163 = vld [vmem:[%s11 + $0xa8] sm:$0xff]
        %v3164 = vld [vmem:[%s11 + $0xb0] sm:$0xff]
        %v3165 = vld [vmem:[%s11 + $0xb8] sm:$0xff]
        %v3166 = vld [vmem:[%s11 + $0xc0] sm:$0xff]
        %v3167 = vld [vmem:[%s11 + $0xc8] sm:$0xff]
        %v3168 = vld [vmem:[%s11 + $0xd0] sm:$0xff]
        %v3169 = vld [vmem:[%s11 + $0xd8] sm:$0xff]
        %v3170 = vld [vmem:[%s11 + $0xe0] sm:$0xff]
        %v3171 = vld [vmem:[%s11 + $0xe8] sm:$0xff]
        %v3172 = vld [vmem:[%s11 + $0xf0] sm:$0xff]
        %v3173 = vld [vmem:[%s11 + $0xf8] sm:$0xff]
        %v3174 = vld [vmem:[%s11 + $0x100] sm:$0xff]
        %v3175 = vld [vmem:[%s11 + $0x108] sm:$0xff]
        %v3176 = vld [vmem:[%s11 + $0x110] sm:$0xff]
        %v3177 = vld [vmem:[%s11 + $0x118] sm:$0xff]
        %v3178 = vld [vmem:[%s11 + $0x120] sm:$0xff]
        %v3179 = vld [vmem:[%s11 + $0x128] sm:$0xff]
        %v3180 = vld [vmem:[%s11 + $0x130] sm:$0xff]
        %v3181 = vld [vmem:[%s11 + $0x138] sm:$0xff]
        %v3182 = vld [vmem:[%s11 + $0x140] sm:$0xff]
        %v3183 = vld [vmem:[%s11 + $0x148] sm:$0xff]
        %v3184 = vld [vmem:[%s11 + $0x150] sm:$0xff]
        %v3185 = vld [vmem:[%s11 + $0x158] sm:$0xff]
        %v3186 = vld [vmem:[%s11 + $0x160] sm:$0xff]
        %v3187 = vld [vmem:[%s11 + $0x168] sm:$0xff]
        %v3188 = vld [vmem:[%s11 + $0x170] sm:$0xff]
        %v3189 = vld [vmem:[%s11 + $0x178] sm:$0xff]
        %v3190 = vld [vmem:[%s11 + $0x180] sm:$0xff]
        %v3191 = vld [vmem:[%s11 + $0x188] sm:$0xff]
        %v3192 = vld [vmem:[%s11 + $0x190] sm:$0xff]
        %v3193 = vld [vmem:[%s11 + $0x198] sm:$0xff]
        %v3194 = vld [vmem:[%s11 + $0x1a0] sm:$0xff]
        %v3195 = vld [vmem:[%s11 + $0x1a8] sm:$0xff]
        %v3196 = vld [vmem:[%s11 + $0x1b0] sm:$0xff]
        %v3197 = vld [vmem:[%s11 + $0x1b8] sm:$0xff]
        %v3198 = vld [vmem:[%s11 + $0x1c0] sm:$0xff]
        %v3199 = vld [vmem:[%s11 + $0x1c8] sm:$0xff]
        %v3200 = vld [vmem:[%s11 + $0x1d0] sm:$0xff]
        %v3201 = vld [vmem:[%s11 + $0x1d8] sm:$0xff]
        %v3202 = vld [vmem:[%s11 + $0x1e0] sm:$0xff]
        %v3203 = vld [vmem:[%s11 + $0x1e8] sm:$0xff]
        %v3204 = vld [vmem:[%s11 + $0x1f0] sm:$0xff]
        %v3205 = vld [vmem:[%s11 + $0x1f8] sm:$0xff]
        %v3206 = vld [vmem:[%s12] sm:$0x1]
        %v3208 = vlaneseq
        %v3209 = vshrl.u32 %v3208, 7
        %v3210 = vsub.s32 0, %v3209
        %v3211 = vrot.slane %v3206, %v3210
        %3213 = vmatprep.subr.mxu0 0.0
        %3214 = vmatpush1.msra.mxu0 %v3142
        %3215 = vmatprep.subr.mxu0 0.0
        %3216 = vmatpush1.msra.mxu0 %v3143
        %3217 = vmatprep.subr.mxu0 0.0
        %3218 = vmatpush1.msra.mxu0 %v3144
        %3219 = vmatprep.subr.mxu0 0.0
        %3220 = vmatpush1.msra.mxu0 %v3145
        %3221 = vmatprep.subr.mxu0 0.0
        %3222 = vmatpush1.msra.mxu0 %v3146
        %3223 = vmatprep.subr.mxu0 0.0
        %3224 = vmatpush1.msra.mxu0 %v3147
        %3225 = vmatprep.subr.mxu0 0.0
        %3226 = vmatpush1.msra.mxu0 %v3148
        %3227 = vmatprep.subr.mxu0 0.0
        %3228 = vmatpush1.msra.mxu0 %v3149
        %3229 = vmatprep.subr.mxu0 0.0
        %3230 = vmatpush1.msra.mxu0 %v3150
        %3231 = vmatprep.subr.mxu0 0.0
        %3232 = vmatpush1.msra.mxu0 %v3151
        %3233 = vmatprep.subr.mxu0 0.0
        %3234 = vmatpush1.msra.mxu0 %v3152
        %3235 = vmatprep.subr.mxu0 0.0
        %3236 = vmatpush1.msra.mxu0 %v3153
        %3237 = vmatprep.subr.mxu0 0.0
        %3238 = vmatpush1.msra.mxu0 %v3154
        %3239 = vmatprep.subr.mxu0 0.0
        %3240 = vmatpush1.msra.mxu0 %v3155
        %3241 = vmatprep.subr.mxu0 0.0
        %3242 = vmatpush1.msra.mxu0 %v3156
        %3243 = vmatprep.subr.mxu0 0.0
        %3244 = vmatpush1.msra.mxu0 %v3157
        %3245 = vmatprep.subr.mxu0 0.0
        %3246 = vmatpush1.msra.mxu0 %v3158
        %3247 = vmatprep.subr.mxu0 0.0
        %3248 = vmatpush1.msra.mxu0 %v3159
        %3249 = vmatprep.subr.mxu0 0.0
        %3250 = vmatpush1.msra.mxu0 %v3160
        %3251 = vmatprep.subr.mxu0 0.0
        %3252 = vmatpush1.msra.mxu0 %v3161
        %3253 = vmatprep.subr.mxu0 0.0
        %3254 = vmatpush1.msra.mxu0 %v3162
        %3255 = vmatprep.subr.mxu0 0.0
        %3256 = vmatpush1.msra.mxu0 %v3163
        %3257 = vmatprep.subr.mxu0 0.0
        %3258 = vmatpush1.msra.mxu0 %v3164
        %3259 = vmatprep.subr.mxu0 0.0
        %3260 = vmatpush1.msra.mxu0 %v3165
        %3261 = vmatprep.subr.mxu0 0.0
        %3262 = vmatpush1.msra.mxu0 %v3166
        %3263 = vmatprep.subr.mxu0 0.0
        %3264 = vmatpush1.msra.mxu0 %v3167
        %3265 = vmatprep.subr.mxu0 0.0
        %3266 = vmatpush1.msra.mxu0 %v3168
        %3267 = vmatprep.subr.mxu0 0.0
        %3268 = vmatpush1.msra.mxu0 %v3169
        %3269 = vmatprep.subr.mxu0 0.0
        %3270 = vmatpush1.msra.mxu0 %v3170
        %3271 = vmatprep.subr.mxu0 0.0
        %3272 = vmatpush1.msra.mxu0 %v3171
        %3273 = vmatprep.subr.mxu0 0.0
        %3274 = vmatpush1.msra.mxu0 %v3172
        %3275 = vmatprep.subr.mxu0 0.0
        %3276 = vmatpush1.msra.mxu0 %v3173
        %3277 = vmatprep.mubr.f32.mxu0 %v3139
        %3278 = vmatmul.mubr.f32.gmra.mrb[0].mxu0 %v3138
        %v3279 = vpop.f32.mrb[0].mxu0
        %v3280 = vadd.f32 %v3211, %v3279
        %v3281 = vpop.f32.mrb[0].mxu0
        %3282 = vdwg.mxu0
        %3283 = vmatprep.subr.mxu0 0.0
        %3284 = vmatpush1.msra.mxu0 %v3174
        %3285 = vmatprep.subr.mxu0 0.0
        %3286 = vmatpush1.msra.mxu0 %v3175
        %3287 = vmatprep.subr.mxu0 0.0
        %3288 = vmatpush1.msra.mxu0 %v3176
        %3289 = vmatprep.subr.mxu0 0.0
        %3290 = vmatpush1.msra.mxu0 %v3177
        %3291 = vmatprep.subr.mxu0 0.0
        %3292 = vmatpush1.msra.mxu0 %v3178
        %3293 = vmatprep.subr.mxu0 0.0
        %3294 = vmatpush1.msra.mxu0 %v3179
        %3295 = vmatprep.subr.mxu0 0.0
        %3296 = vmatpush1.msra.mxu0 %v3180
        %3297 = vmatprep.subr.mxu0 0.0
        %3298 = vmatpush1.msra.mxu0 %v3181
        %3299 = vmatprep.subr.mxu0 0.0
        %3300 = vmatpush1.msra.mxu0 %v3182
        %3301 = vmatprep.subr.mxu0 0.0
        %3302 = vmatpush1.msra.mxu0 %v3183
        %3303 = vmatprep.subr.mxu0 0.0
        %3304 = vmatpush1.msra.mxu0 %v3184
        %3305 = vmatprep.subr.mxu0 0.0
        %3306 = vmatpush1.msra.mxu0 %v3185
        %3307 = vmatprep.subr.mxu0 0.0
        %3308 = vmatpush1.msra.mxu0 %v3186
        %3309 = vmatprep.subr.mxu0 0.0
        %3310 = vmatpush1.msra.mxu0 %v3187
        %3311 = vmatprep.subr.mxu0 0.0
        %3312 = vmatpush1.msra.mxu0 %v3188
        %3313 = vmatprep.subr.mxu0 0.0
        %3314 = vmatpush1.msra.mxu0 %v3189
        %3315 = vmatprep.subr.mxu0 0.0
        %3316 = vmatpush1.msra.mxu0 %v3190
        %3317 = vmatprep.subr.mxu0 0.0
        %3318 = vmatpush1.msra.mxu0 %v3191
        %3319 = vmatprep.subr.mxu0 0.0
        %3320 = vmatpush1.msra.mxu0 %v3192
        %3321 = vmatprep.subr.mxu0 0.0
        %3322 = vmatpush1.msra.mxu0 %v3193
        %3323 = vmatprep.subr.mxu0 0.0
        %3324 = vmatpush1.msra.mxu0 %v3194
        %3325 = vmatprep.subr.mxu0 0.0
        %3326 = vmatpush1.msra.mxu0 %v3195
        %3327 = vmatprep.subr.mxu0 0.0
        %3328 = vmatpush1.msra.mxu0 %v3196
        %3329 = vmatprep.subr.mxu0 0.0
        %3330 = vmatpush1.msra.mxu0 %v3197
        %3331 = vmatprep.subr.mxu0 0.0
        %3332 = vmatpush1.msra.mxu0 %v3198
        %3333 = vmatprep.subr.mxu0 0.0
        %3334 = vmatpush1.msra.mxu0 %v3199
        %3335 = vmatprep.subr.mxu0 0.0
        %3336 = vmatpush1.msra.mxu0 %v3200
        %3337 = vmatprep.subr.mxu0 0.0
        %3338 = vmatpush1.msra.mxu0 %v3201
        %3339 = vmatprep.subr.mxu0 0.0
        %3340 = vmatpush1.msra.mxu0 %v3202
        %3341 = vmatprep.subr.mxu0 0.0
        %3342 = vmatpush1.msra.mxu0 %v3203
        %3343 = vmatprep.subr.mxu0 0.0
        %3344 = vmatpush1.msra.mxu0 %v3204
        %3345 = vmatprep.subr.mxu0 0.0
        %3346 = vmatpush1.msra.mxu0 %v3205
        %3347 = vmatprep.mubr.f32.mxu0 %v3141
        %3348 = vmatmul.mubr.f32.gmra.mrb[0].mxu0 %v3140
        %v3349 = vpop.f32.mrb[0].mxu0
        %v3350 = vadd.f32 %v3280, %v3349
        %v3351 = vpop.f32.mrb[0].mxu0
        %3352 = vdwg.mxu0
        %v3353 = vadd.f32 %v2938, %v3350
        %v3354 = vld [vmem:[%s13] sm:$0x1]
        %v3355 = vld [vmem:[%s14] sm:$0x1]
        %v3356 = vsel %vm640, %v3353, 0.0
        %3357 = vadd.xlane.f32.xlu0 %v3356
        %v3358 = vpop.xlane.xlu0 %3357
        %v3359 = vmul.f32 %v3358, %v2914
        %v3360 = vsub.f32 %v3353, %v3359
        %v3361 = vmul.f32 %v3360, %v3360
        %v3362 = vsel %vm640, %v3361, 0.0
        %3363 = vadd.xlane.f32.xlu0 %v3362
        %v3364 = vpop.xlane.xlu0 %3363
        %v3365 = vmul.f32 %v3364, %v2914
        %v3366 = vadd.f32 %v3365, 1e-05
        %v3367 = vrsqrt.pop %v3366
        %v3368 = vmul.f32 %v3360, %v3367
        %v3370 = vlaneseq
        %v3371 = vshrl.u32 %v3370, 7
        %v3372 = vsub.s32 0, %v3371
        %v3373 = vrot.slane %v3354, %v3372
        %v3375 = vmul.f32 %v3368, %v3373
        %v3377 = vlaneseq
        %v3378 = vshrl.u32 %v3377, 7
        %v3379 = vsub.s32 0, %v3378
        %v3380 = vrot.slane %v3355, %v3379
        %v3382 = vadd.f32 %v3375, %v3380
        %3383 = vst.msk [vmem:[%s516] sm:$0xff] %vm640, %v3382
        %s3384 = sand.u32 %s362, 1
        %s3385 = scalar_lea.sflag [#allocation3], %s3384
        %s3386 = sand.u32 %s362, 1
        %s3387 = smul.addr %s3386, 8
        %s3388 = scalar_lea.vmem [#allocation2], %s3387
        %s3389 = sand.u32 %s388, 1
        %s3390 = scalar_lea.sflag [#allocation5], %s3389
        %s3391 = sand.u32 %s388, 1
        %s3392 = smul.addr %s3391, 8
        %s3393 = scalar_lea.vmem [#allocation4], %s3392
        // Predicated region
        $region81: #{tpu_custom_call.1} parent=79 // pred_check
          %p3394 = pneg %p372
        $region82: #{tpu_custom_call.1} parent=79 // pred_check_branch
          %3396 = sbr.rel (%p3394) target = $region84
        $region83: #{tpu_custom_call.1} parent=79 // pred_region
          %s3398 = ssub.s32 128, 128
          %3399 = vsyncadd %s3385, %s3398
          %s3400 = smul.addr %s34, 128
          %s3401 = scalar_lea.hbm %s15, %s3400
          %s3403 = sshll.u32 %s3388, 4
          %s3404 = int_to_ptr.vmem [resolvable:$true] %s3403
          %3406 = dma.vmem_to_hbm [thread:$0]  %s3404, 128, %s3401, %s3385
        $region84: #{tpu_custom_call.1} parent=79 // pred_fallthru
          _
        // Predicated region
        $region85: #{tpu_custom_call.1} parent=79 // pred_check
          %p3407 = pneg %p398
        $region86: #{tpu_custom_call.1} parent=79 // pred_check_branch
          %3409 = sbr.rel (%p3407) target = $region88
        $region87: #{tpu_custom_call.1} parent=79 // pred_region
          %s3411 = ssub.s32 128, 128
          %3412 = vsyncadd %s3390, %s3411
          %s3413 = smul.addr %s34, 128
          %s3414 = scalar_lea.hbm %s16, %s3413
          %s3416 = sshll.u32 %s3393, 4
          %s3417 = int_to_ptr.vmem [resolvable:$true] %s3416
          %3419 = dma.vmem_to_hbm [thread:$0]  %s3417, 128, %s3414, %s3390
        $region88: #{tpu_custom_call.1} parent=79 // pred_fallthru
          _
      $region80: #{tpu_custom_call.1} parent=5 // pred_fallthru
        _
      %p3420 = scmp.le.s32.totalorder 2, %s29
      // Predicated region
      $region89: #{tpu_custom_call.1} parent=5 // pred_check
        %p3421 = pneg %p3420
      $region90: #{tpu_custom_call.1} parent=5 // pred_check_branch
        %3423 = sbr.rel (%p3421) target = $region92
      $region91: #{tpu_custom_call.1} parent=5 // pred_region
        %s3424 = ssub.s32 %s29, 2
        // Predicated region
        $region93: #{tpu_custom_call.1} parent=91 // pred_check
          %p3425 = pneg %p378
        $region94: #{tpu_custom_call.1} parent=91 // pred_check_branch
          %3427 = sbr.rel (%p3425) target = $region96
        $region95: #{tpu_custom_call.1} parent=91 // pred_region
          %s3428 = sand.u32 %s363, 1
          %s3429 = scalar_lea.sflag [#allocation3], %s3428
          %s3430 = sand.u32 %s363, 1
          %s3431 = smul.addr %s3430, 8
          %s3432 = scalar_lea.vmem [#allocation2], %s3431
          %3433 = dma.done %s3429, 128
        $region96: #{tpu_custom_call.1} parent=91 // pred_fallthru
          _
        // Predicated region
        $region97: #{tpu_custom_call.1} parent=91 // pred_check
          %p3434 = pneg %p404
        $region98: #{tpu_custom_call.1} parent=91 // pred_check_branch
          %3436 = sbr.rel (%p3434) target = $region100
        $region99: #{tpu_custom_call.1} parent=91 // pred_region
          %s3437 = sand.u32 %s389, 1
          %s3438 = scalar_lea.sflag [#allocation5], %s3437
          %s3439 = sand.u32 %s389, 1
          %s3440 = smul.addr %s3439, 8
          %s3441 = scalar_lea.vmem [#allocation4], %s3440
          %3442 = dma.done %s3438, 128
        $region100: #{tpu_custom_call.1} parent=91 // pred_fallthru
          _
      $region92: #{tpu_custom_call.1} parent=5 // pred_fallthru
        _
    $region6: #{tpu_custom_call.1} parent=1 // loop_footer
      %s33 = sadd.s32 1, %s29
    $region7: #{tpu_custom_call.1} parent=1 // loop_footer_branch
      %28 = sbr.rel target = $region3
    $region8: #{tpu_custom_call.1} parent=1 // loop_exit
      _
    %3443 = vsyncpa [#allocation3], 1
    %s3444 = scalar_lea.sflag [#allocation3], 1
    %3445 = vsyncpa %s3444, 1
    %3446 = vsyncpa [#allocation5], 1
    %s3447 = scalar_lea.sflag [#allocation5], 1
    %3448 = vsyncpa %s3447, 1

</llo_original>
